<compile_context>
chip_gen: v7x
topology: tpu7x:2x2x1
jax: 0.10.0
libtpu: 0.0.40
codegen_flags: <defaults>
</compile_context>

<pallas_src>
import jax
import jax.numpy as jnp
import numpy as np
from jax.experimental import pallas as pl
from jax.experimental.pallas import tpu as pltpu

# ----------------------------- hyper-parameters ------------------------------
NR_AGENTS = 4                       # params['nr_agents']  (also the batch dim)
NR_ACTIONS = 6 + NR_AGENTS          # 6 basic actions + one attack-Q per enemy
TOKEN_DIM = 8                       # per-token observation feature size
EMB = 32                            # transformer embedding size
HEADS = 2
DEPTH = 2
FF_MULT = 4
N_ENEMIES = NR_AGENTS               # task_enemy_num = nr_agents
N_ALLIES = NR_AGENTS // 2           # task_ally_num  = nr_agents // 2
T_IN = 1 + N_ENEMIES + N_ALLIES     # own token + enemy tokens + ally tokens
T = T_IN + 1                        # +1 hidden-state token appended
EPS = 1e-5                          # LayerNorm eps (PyTorch default)

AGENT_BLOCK = max(1, NR_AGENTS // 2)  # grid block over agents (2 TCs on v7x)
LANE = 128                            # action-head output padded to full lanes
assert NR_AGENTS % AGENT_BLOCK == 0


# ------------------------------ kernel helpers -------------------------------
def _layer_norm(v, g, b):
    mu = jnp.mean(v, axis=-1, keepdims=True)
    var = jnp.mean((v - mu) ** 2, axis=-1, keepdims=True)
    return (v - mu) * jax.lax.rsqrt(var + EPS) * g[None] + b[None]


# --------------------------------- kernel ------------------------------------
def _dqn_updet_kernel(x_ref, h_ref,
                      w_emb_ref, b_emb_ref,
                      wqkv_ref, wu_ref, bu_ref,
                      ln1g_ref, ln1b_ref,
                      wf1_ref, bf1_ref, wf2_ref, bf2_ref,
                      ln2g_ref, ln2b_ref,
                      wtp_ref, btp_ref,
                      wqb_ref, bqb_ref,
                      wab_ref, wae_ref, bact_ref,
                      q_out_ref, h_out_ref):
    B = x_ref.shape[0]
    HE = HEADS * EMB

    # ---- token embedding + hidden-state token (no scratch round-trip) ----
    tok = (jnp.dot(x_ref[...].reshape(B * T_IN, TOKEN_DIM), w_emb_ref[...],
                   preferred_element_type=jnp.float32)
           + b_emb_ref[...]).reshape(B, T_IN, EMB)
    cur = jnp.concatenate([tok, h_ref[...]], axis=1)            # (B, T, EMB)

    # reference scales q and k by EMB**-0.25 each; fold into the scores.
    scale = 1.0 / (EMB ** 0.5)

    # ---- transformer blocks (static unroll over depth) ----
    for l in range(DEPTH):
        # fused QKV: one (B*T, EMB) @ (EMB, 3*HEADS*EMB) matmul
        qkv = jnp.dot(cur.reshape(B * T, EMB), wqkv_ref[l],
                      preferred_element_type=jnp.float32)       # (B*T, 3*HE)

        def _split_heads(role):
            # (B*T, 3*HE) -> (HEADS*B, T, EMB), heads stacked on the batch dim
            return jnp.concatenate(
                [qkv[:, role * HE + hd * EMB: role * HE + (hd + 1) * EMB]
                 .reshape(B, T, EMB) for hd in range(HEADS)], axis=0)

        qh = _split_heads(0)
        kh = _split_heads(1)
        vh = _split_heads(2)

        # attention for all heads in one batched contraction each
        s = jnp.einsum('bte,bse->bts', qh, kh,
                       preferred_element_type=jnp.float32) * scale
        s = s - jnp.max(s, axis=-1, keepdims=True)
        p = jnp.exp(s)
        p = p * pl.reciprocal(jnp.sum(p, axis=-1, keepdims=True), approx=True)
        o_h = jnp.einsum('bts,bse->bte', p, vh,
                         preferred_element_type=jnp.float32)    # (H*B, T, EMB)

        # concat-heads output projection: one (B*T, HE) @ (HE, EMB) matmul
        o = jnp.concatenate([o_h[hd * B:(hd + 1) * B].reshape(B * T, EMB)
                             for hd in range(HEADS)], axis=-1)  # (B*T, HE)
        att = (jnp.dot(o, wu_ref[l], preferred_element_type=jnp.float32)
               + bu_ref[l]).reshape(B, T, EMB)

        cur = _layer_norm(att + cur, ln1g_ref[l], ln1b_ref[l])
        ff = jnp.maximum(
            jnp.dot(cur.reshape(B * T, EMB), wf1_ref[l],
                    preferred_element_type=jnp.float32) + bf1_ref[l], 0.0)
        ff = (jnp.dot(ff, wf2_ref[l], preferred_element_type=jnp.float32)
              + bf2_ref[l]).reshape(B, T, EMB)
        cur = _layer_norm(ff + cur, ln2g_ref[l], ln2b_ref[l])
        # TODO(synk): dropout in the reference TransformerBlock is identity at
        # inference (p=0.0), so it is intentionally omitted.

    # ---- toprobs ----
    outs = (jnp.dot(cur.reshape(B * T, EMB), wtp_ref[...],
                    preferred_element_type=jnp.float32)
            + btp_ref[...]).reshape(B, T, EMB)

    # ---- hidden-state output = last token ----
    h_out_ref[...] = outs[:, T - 1:T, :]

    # ---- fused Q-head tail + action head ----
    # q_basic / q_enemies from ONE matmul over the first (1+N_ENEMIES) tokens,
    # one lane reduction for the per-enemy mean, and the action head decomposed
    #   q_basic @ W_act[:6] + q_enemy_mean @ W_act[6:] + b_act
    # (W_act pre-padded to 128 output lanes in the wrapper -> lane-dense store).
    nq = 1 + N_ENEMIES
    qall = (jnp.dot(outs[:, 0:nq, :].reshape(B * nq, EMB), wqb_ref[...],
                    preferred_element_type=jnp.float32)
            + bqb_ref[...]).reshape(B, nq, 6)
    q_basic = qall[:, 0, :]                                     # (B, 6)
    q_enemy = jnp.mean(qall[:, 1:, :], axis=-1)                 # (B, N_ENEMIES)
    out_q = (jnp.dot(q_basic, wab_ref[...], preferred_element_type=jnp.float32)
             + jnp.dot(q_enemy, wae_ref[...], preferred_element_type=jnp.float32)
             + bact_ref[...])                                   # (B, LANE)
    q_out_ref[...] = out_q[:, None, :]


# --------------------------------- wrapper ------------------------------------
@jax.jit
def dqn_updet_forward(x, h, params):
    # parameter prep (outside the kernel): fuse QKV weights per layer and pad
    # the action head to a full 128-lane output.
    wqkv = jnp.concatenate([params['wq'], params['wk'], params['wv']], axis=-1)
    pad = LANE - NR_ACTIONS
    wab_p = jnp.pad(params['wab'], ((0, 0), (0, pad)))
    wae_p = jnp.pad(params['wae'], ((0, 0), (0, pad)))
    bact_p = jnp.pad(params['bact'], ((0, 0), (0, pad)))

    weights = [params['w_emb'], params['b_emb'],
               wqkv, params['wu'], params['bu'],
               params['ln1g'], params['ln1b'],
               params['wf1'], params['bf1'], params['wf2'], params['bf2'],
               params['ln2g'], params['ln2b'],
               params['wtp'], params['btp'],
               params['wqb'], params['bqb'],
               wab_p, wae_p, bact_p]

    vmem = pltpu.MemorySpace.VMEM
    grid = (NR_AGENTS // AGENT_BLOCK,)
    in_specs = ([pl.BlockSpec((AGENT_BLOCK, T_IN, TOKEN_DIM), lambda i: (i, 0, 0)),
                 pl.BlockSpec((AGENT_BLOCK, 1, EMB), lambda i: (i, 0, 0))]
                + [pl.BlockSpec(memory_space=vmem) for _ in weights])
    out_specs = (pl.BlockSpec((AGENT_BLOCK, 1, LANE), lambda i: (i, 0, 0)),
                 pl.BlockSpec((AGENT_BLOCK, 1, EMB), lambda i: (i, 0, 0)))

    q_pad, h_out = pl.pallas_call(
        _dqn_updet_kernel,
        grid=grid,
        out_shape=(jax.ShapeDtypeStruct((NR_AGENTS, 1, LANE), jnp.float32),
                   jax.ShapeDtypeStruct((NR_AGENTS, 1, EMB), jnp.float32)),
        in_specs=in_specs,
        out_specs=out_specs,
        compiler_params=pltpu.CompilerParams(
            dimension_semantics=("parallel",)),
    )(x, h, *weights)
    return q_pad[:, 0, :NR_ACTIONS], h_out


# --------------------------- deterministic params ----------------------------
def init_params(key):
    keys = iter(jax.random.split(key, 64))

    def rnd(shape, fan_in):
        bound = 1.0 / np.sqrt(fan_in)
        return jax.random.uniform(next(keys), shape, jnp.float32, -bound, bound)

    p = {}
    p['w_emb'] = rnd((TOKEN_DIM, EMB), TOKEN_DIM)
    p['b_emb'] = rnd((1, EMB), TOKEN_DIM)
    p['wq'] = rnd((DEPTH, EMB, EMB * HEADS), EMB)
    p['wk'] = rnd((DEPTH, EMB, EMB * HEADS), EMB)
    p['wv'] = rnd((DEPTH, EMB, EMB * HEADS), EMB)
    p['wu'] = rnd((DEPTH, EMB * HEADS, EMB), EMB * HEADS)
    p['bu'] = rnd((DEPTH, 1, EMB), EMB * HEADS)
    p['ln1g'] = jnp.ones((DEPTH, 1, EMB), jnp.float32)
    p['ln1b'] = jnp.zeros((DEPTH, 1, EMB), jnp.float32)
    p['wf1'] = rnd((DEPTH, EMB, FF_MULT * EMB), EMB)
    p['bf1'] = rnd((DEPTH, 1, FF_MULT * EMB), EMB)
    p['wf2'] = rnd((DEPTH, FF_MULT * EMB, EMB), FF_MULT * EMB)
    p['bf2'] = rnd((DEPTH, 1, EMB), FF_MULT * EMB)
    p['ln2g'] = jnp.ones((DEPTH, 1, EMB), jnp.float32)
    p['ln2b'] = jnp.zeros((DEPTH, 1, EMB), jnp.float32)
    p['wtp'] = rnd((EMB, EMB), EMB)
    p['btp'] = rnd((1, EMB), EMB)
    p['wqb'] = rnd((EMB, 6), EMB)
    p['bqb'] = rnd((1, 6), EMB)
    w_act = rnd((NR_ACTIONS, NR_ACTIONS), NR_ACTIONS)   # action_head weight (in, out)
    p['wab'] = w_act[:6, :]
    p['wae'] = w_act[6:, :]
    p['bact'] = rnd((1, NR_ACTIONS), NR_ACTIONS)
    return p


# ---------------------------- pure-JAX reference -----------------------------
def reference_forward(x, h, p):
    def ln(v, g, b):
        mu = jnp.mean(v, -1, keepdims=True)
        var = jnp.mean((v - mu) ** 2, -1, keepdims=True)
        return (v - mu) / jnp.sqrt(var + EPS) * g + b

    tok = jnp.einsum('btd,de->bte', x, p['w_emb']) + p['b_emb']
    cur = jnp.concatenate([tok, h], axis=1)
    B = x.shape[0]
    scale = 1.0 / (EMB ** 0.25)
    for l in range(DEPTH):
        q = (jnp.einsum('bte,ef->btf', cur, p['wq'][l]) * scale).reshape(B, T, HEADS, EMB)
        k = (jnp.einsum('bte,ef->btf', cur, p['wk'][l]) * scale).reshape(B, T, HEADS, EMB)
        v = jnp.einsum('bte,ef->btf', cur, p['wv'][l]).reshape(B, T, HEADS, EMB)
        dot = jnp.einsum('bthe,bshe->bhts', q, k)
        pm = jax.nn.softmax(dot, axis=-1)
        o = jnp.einsum('bhts,bshe->bthe', pm, v).reshape(B, T, HEADS * EMB)
        attended = jnp.einsum('btf,fe->bte', o, p['wu'][l]) + p['bu'][l]
        cur = ln(attended + cur, p['ln1g'][l], p['ln1b'][l])
        ff = jax.nn.relu(jnp.einsum('bte,ef->btf', cur, p['wf1'][l]) + p['bf1'][l])
        ff = jnp.einsum('btf,fe->bte', ff, p['wf2'][l]) + p['bf2'][l]
        cur = ln(ff + cur, p['ln2g'][l], p['ln2b'][l])
    outs = jnp.einsum('bte,ef->btf', cur, p['wtp']) + p['btp']
    h_out = outs[:, -1:, :]
    q_basic = outs[:, 0, :] @ p['wqb'] + p['bqb']
    q_en = jnp.stack([jnp.mean(outs[:, 1 + i, :] @ p['wqb'] + p['bqb'], axis=-1)
                      for i in range(N_ENEMIES)], axis=1)
    q = jnp.concatenate([q_basic, q_en], axis=1)
    w_act = jnp.concatenate([p['wab'], p['wae']], axis=0)
    return q @ w_act + p['bact'], h_out


# ------------------------------------ main ------------------------------------
if __name__ == "__main__":
    key = jax.random.PRNGKey(0)
    kx, kp = jax.random.split(key)

    x = jax.random.normal(kx, (NR_AGENTS, T_IN, TOKEN_DIM), jnp.float32)
    # self.hidden_state = fc_net.init_hidden().expand(nr_agents, 1, -1) == zeros
    h = jnp.zeros((NR_AGENTS, 1, EMB), jnp.float32)
    params = init_params(kp)

    q_out, h_new = dqn_updet_forward(x, h, params)
    jax.block_until_ready((q_out, h_new))

    q_ref, h_ref_new = reference_forward(x, h, params)
    assert q_out.shape == (NR_AGENTS, NR_ACTIONS)
    assert h_new.shape == (NR_AGENTS, 1, EMB)
    # tolerance accounts for the EUP approximate-reciprocal softmax denominator
    np.testing.assert_allclose(np.asarray(q_out), np.asarray(q_ref), rtol=5e-3, atol=5e-3)
    np.testing.assert_allclose(np.asarray(h_new), np.asarray(h_ref_new), rtol=5e-3, atol=5e-3)

    print("KERNEL_OK")
</pallas_src>

<mosaic_0001>
module attributes {stable_mosaic.version = 11 : i64} {
  func.func @_dqn_updet_kernel(%arg0: i32, %arg1: memref<2x7x8xf32, #tpu.memory_space<vmem>>, %arg2: memref<2x1x32xf32, #tpu.memory_space<vmem>>, %arg3: memref<8x32xf32, #tpu.memory_space<vmem>>, %arg4: memref<1x32xf32, #tpu.memory_space<vmem>>, %arg5: memref<2x32x192xf32, #tpu.memory_space<vmem>>, %arg6: memref<2x64x32xf32, #tpu.memory_space<vmem>>, %arg7: memref<2x1x32xf32, #tpu.memory_space<vmem>>, %arg8: memref<2x1x32xf32, #tpu.memory_space<vmem>>, %arg9: memref<2x1x32xf32, #tpu.memory_space<vmem>>, %arg10: memref<2x32x128xf32, #tpu.memory_space<vmem>>, %arg11: memref<2x1x128xf32, #tpu.memory_space<vmem>>, %arg12: memref<2x128x32xf32, #tpu.memory_space<vmem>>, %arg13: memref<2x1x32xf32, #tpu.memory_space<vmem>>, %arg14: memref<2x1x32xf32, #tpu.memory_space<vmem>>, %arg15: memref<2x1x32xf32, #tpu.memory_space<vmem>>, %arg16: memref<32x32xf32, #tpu.memory_space<vmem>>, %arg17: memref<1x32xf32, #tpu.memory_space<vmem>>, %arg18: memref<32x6xf32, #tpu.memory_space<vmem>>, %arg19: memref<1x6xf32, #tpu.memory_space<vmem>>, %arg20: memref<6x128xf32, #tpu.memory_space<vmem>>, %arg21: memref<4x128xf32, #tpu.memory_space<vmem>>, %arg22: memref<1x128xf32, #tpu.memory_space<vmem>>, %arg23: memref<2x1x128xf32, #tpu.memory_space<vmem>>, %arg24: memref<2x1x32xf32, #tpu.memory_space<vmem>>) attributes {dimension_semantics = [#tpu.dimension_semantics<parallel>], iteration_bounds = array<i64: 2>, scalar_prefetch = 0 : i64, scratch_operands = 0 : i64, tpu.core_type = #tpu.core_type<tc>, window_params = [{transform_indices = @transform_0, window_bounds = array<i64: 2, 7, 8>}, {transform_indices = @transform_1, window_bounds = array<i64: 2, 1, 32>}, {pipeline_mode = #tpu.pipeline_mode<synchronous>, transform_indices = @transform_2, window_bounds = array<i64: 8, 32>}, {pipeline_mode = #tpu.pipeline_mode<synchronous>, transform_indices = @transform_3, window_bounds = array<i64: 1, 32>}, {pipeline_mode = #tpu.pipeline_mode<synchronous>, transform_indices = @transform_4, window_bounds = array<i64: 2, 32, 192>}, {pipeline_mode = #tpu.pipeline_mode<synchronous>, transform_indices = @transform_5, window_bounds = array<i64: 2, 64, 32>}, {pipeline_mode = #tpu.pipeline_mode<synchronous>, transform_indices = @transform_6, window_bounds = array<i64: 2, 1, 32>}, {pipeline_mode = #tpu.pipeline_mode<synchronous>, transform_indices = @transform_7, window_bounds = array<i64: 2, 1, 32>}, {pipeline_mode = #tpu.pipeline_mode<synchronous>, transform_indices = @transform_8, window_bounds = array<i64: 2, 1, 32>}, {pipeline_mode = #tpu.pipeline_mode<synchronous>, transform_indices = @transform_9, window_bounds = array<i64: 2, 32, 128>}, {pipeline_mode = #tpu.pipeline_mode<synchronous>, transform_indices = @transform_10, window_bounds = array<i64: 2, 1, 128>}, {pipeline_mode = #tpu.pipeline_mode<synchronous>, transform_indices = @transform_11, window_bounds = array<i64: 2, 128, 32>}, {pipeline_mode = #tpu.pipeline_mode<synchronous>, transform_indices = @transform_12, window_bounds = array<i64: 2, 1, 32>}, {pipeline_mode = #tpu.pipeline_mode<synchronous>, transform_indices = @transform_13, window_bounds = array<i64: 2, 1, 32>}, {pipeline_mode = #tpu.pipeline_mode<synchronous>, transform_indices = @transform_14, window_bounds = array<i64: 2, 1, 32>}, {pipeline_mode = #tpu.pipeline_mode<synchronous>, transform_indices = @transform_15, window_bounds = array<i64: 32, 32>}, {pipeline_mode = #tpu.pipeline_mode<synchronous>, transform_indices = @transform_16, window_bounds = array<i64: 1, 32>}, {pipeline_mode = #tpu.pipeline_mode<synchronous>, transform_indices = @transform_17, window_bounds = array<i64: 32, 6>}, {pipeline_mode = #tpu.pipeline_mode<synchronous>, transform_indices = @transform_18, window_bounds = array<i64: 1, 6>}, {pipeline_mode = #tpu.pipeline_mode<synchronous>, transform_indices = @transform_19, window_bounds = array<i64: 6, 128>}, {pipeline_mode = #tpu.pipeline_mode<synchronous>, transform_indices = @transform_20, window_bounds = array<i64: 4, 128>}, {pipeline_mode = #tpu.pipeline_mode<synchronous>, transform_indices = @transform_21, window_bounds = array<i64: 1, 128>}, {transform_indices = @transform_22, window_bounds = array<i64: 2, 1, 128>}, {transform_indices = @transform_23, window_bounds = array<i64: 2, 1, 32>}]} {
    %c0 = arith.constant 0 : index
    %c0_0 = arith.constant 0 : index
    %c0_1 = arith.constant 0 : index
    %0 = vector.load %arg1[%c0, %c0_0, %c0_1] : memref<2x7x8xf32, #tpu.memory_space<vmem>>, vector<2x7x8xf32>
    %1 = vector.shape_cast %0 : vector<2x7x8xf32> to vector<14x8xf32>
    %c0_2 = arith.constant 0 : index
    %c0_3 = arith.constant 0 : index
    %2 = vector.load %arg3[%c0_2, %c0_3] : memref<8x32xf32, #tpu.memory_space<vmem>>, vector<8x32xf32>
    %cst = arith.constant dense<0.000000e+00> : vector<14x32xf32>
    %3 = tpu.matmul %1, %2, %cst {dimension_numbers = #tpu.dot_dimension_numbers<[1], [0], [0], [1], [0, 0, 1, 1], [], []>} : vector<14x8xf32>, vector<8x32xf32>, vector<14x32xf32> -> vector<14x32xf32>
    %c0_4 = arith.constant 0 : index
    %c0_5 = arith.constant 0 : index
    %4 = vector.load %arg4[%c0_4, %c0_5] : memref<1x32xf32, #tpu.memory_space<vmem>>, vector<1x32xf32>
    %5 = vector.broadcast %4 : vector<1x32xf32> to vector<14x32xf32>
    %6 = arith.addf %3, %5 : vector<14x32xf32>
    %7 = vector.shape_cast %6 : vector<14x32xf32> to vector<2x7x32xf32>
    %c0_6 = arith.constant 0 : index
    %c0_7 = arith.constant 0 : index
    %c0_8 = arith.constant 0 : index
    %8 = vector.load %arg2[%c0_6, %c0_7, %c0_8] : memref<2x1x32xf32, #tpu.memory_space<vmem>>, vector<2x1x32xf32>
    %9 = tpu.concatenate %7, %8 in 1 : vector<2x7x32xf32>, vector<2x1x32xf32> -> vector<2x8x32xf32>
    %10 = vector.shape_cast %9 : vector<2x8x32xf32> to vector<16x32xf32>
    %c0_9 = arith.constant 0 : index
    %c0_10 = arith.constant 0 : index
    %c0_11 = arith.constant 0 : index
    %11 = vector.load %arg5[%c0_9, %c0_10, %c0_11] : memref<2x32x192xf32, #tpu.memory_space<vmem>>, vector<1x32x192xf32>
    %12 = vector.shape_cast %11 : vector<1x32x192xf32> to vector<32x192xf32>
    %cst_12 = arith.constant dense<0.000000e+00> : vector<16x192xf32>
    %13 = tpu.matmul %10, %12, %cst_12 {dimension_numbers = #tpu.dot_dimension_numbers<[1], [0], [0], [1], [0, 0, 1, 1], [], []>} : vector<16x32xf32>, vector<32x192xf32>, vector<16x192xf32> -> vector<16x192xf32>
    %14 = vector.extract_strided_slice %13 {offsets = [0, 0], sizes = [16, 32], strides = [1, 1]} : vector<16x192xf32> to vector<16x32xf32>
    %15 = vector.shape_cast %14 : vector<16x32xf32> to vector<2x8x32xf32>
    %16 = vector.extract_strided_slice %13 {offsets = [0, 32], sizes = [16, 32], strides = [1, 1]} : vector<16x192xf32> to vector<16x32xf32>
    %17 = vector.shape_cast %16 : vector<16x32xf32> to vector<2x8x32xf32>
    %18 = tpu.concatenate %15, %17 in 0 : vector<2x8x32xf32>, vector<2x8x32xf32> -> vector<4x8x32xf32>
    %19 = vector.extract_strided_slice %13 {offsets = [0, 64], sizes = [16, 32], strides = [1, 1]} : vector<16x192xf32> to vector<16x32xf32>
    %20 = vector.shape_cast %19 : vector<16x32xf32> to vector<2x8x32xf32>
    %21 = vector.extract_strided_slice %13 {offsets = [0, 96], sizes = [16, 32], strides = [1, 1]} : vector<16x192xf32> to vector<16x32xf32>
    %22 = vector.shape_cast %21 : vector<16x32xf32> to vector<2x8x32xf32>
    %23 = tpu.concatenate %20, %22 in 0 : vector<2x8x32xf32>, vector<2x8x32xf32> -> vector<4x8x32xf32>
    %24 = vector.extract_strided_slice %13 {offsets = [0, 128], sizes = [16, 32], strides = [1, 1]} : vector<16x192xf32> to vector<16x32xf32>
    %25 = vector.shape_cast %24 : vector<16x32xf32> to vector<2x8x32xf32>
    %26 = vector.extract_strided_slice %13 {offsets = [0, 160], sizes = [16, 32], strides = [1, 1]} : vector<16x192xf32> to vector<16x32xf32>
    %27 = vector.shape_cast %26 : vector<16x32xf32> to vector<2x8x32xf32>
    %28 = tpu.concatenate %25, %27 in 0 : vector<2x8x32xf32>, vector<2x8x32xf32> -> vector<4x8x32xf32>
    "tpu.trace_start"() <{level = 10 : i32, message = "bte,bse->bts"}> : () -> ()
    %cst_13 = arith.constant dense<0.000000e+00> : vector<4x8x8xf32>
    %29 = tpu.matmul %18, %23, %cst_13 {dimension_numbers = #tpu.dot_dimension_numbers<[2], [2], [1], [1], [0, 0, 0, 1, 1, 1], [0], [0]>} : vector<4x8x32xf32>, vector<4x8x32xf32>, vector<4x8x8xf32> -> vector<4x8x8xf32>
    "tpu.trace_stop"() : () -> ()
    %cst_14 = arith.constant 0.176776692 : f32
    %30 = vector.broadcast %cst_14 : f32 to vector<4x8x8xf32>
    %31 = arith.mulf %29, %30 : vector<4x8x8xf32>
    %cst_15 = arith.constant dense<0xFF800000> : vector<4x8xf32>
    %32 = vector.multi_reduction <maximumf>, %31, %cst_15 [2] : vector<4x8x8xf32> to vector<4x8xf32>
    %33 = vector.shape_cast %32 : vector<4x8xf32> to vector<4x8x1xf32>
    %34 = vector.broadcast %33 : vector<4x8x1xf32> to vector<4x8x8xf32>
    %35 = arith.subf %31, %34 : vector<4x8x8xf32>
    %36 = math.exp %35 : vector<4x8x8xf32>
    %cst_16 = arith.constant dense<0.000000e+00> : vector<4x8xf32>
    %37 = vector.multi_reduction <add>, %36, %cst_16 [2] : vector<4x8x8xf32> to vector<4x8xf32>
    %38 = vector.shape_cast %37 : vector<4x8xf32> to vector<4x8x1xf32>
    %39 = tpu.reciprocal %38 {approx = true} : vector<4x8x1xf32> -> vector<4x8x1xf32>
    %40 = vector.broadcast %39 : vector<4x8x1xf32> to vector<4x8x8xf32>
    %41 = arith.mulf %36, %40 : vector<4x8x8xf32>
    "tpu.trace_start"() <{level = 10 : i32, message = "bts,bse->bte"}> : () -> ()
    %cst_17 = arith.constant dense<0.000000e+00> : vector<4x8x32xf32>
    %42 = tpu.matmul %41, %28, %cst_17 {dimension_numbers = #tpu.dot_dimension_numbers<[2], [1], [1], [2], [0, 0, 0, 1, 1, 2], [0], [0]>} : vector<4x8x8xf32>, vector<4x8x32xf32>, vector<4x8x32xf32> -> vector<4x8x32xf32>
    "tpu.trace_stop"() : () -> ()
    %43 = vector.extract_strided_slice %42 {offsets = [0, 0, 0], sizes = [2, 8, 32], strides = [1, 1, 1]} : vector<4x8x32xf32> to vector<2x8x32xf32>
    %44 = vector.shape_cast %43 : vector<2x8x32xf32> to vector<16x32xf32>
    %45 = vector.extract_strided_slice %42 {offsets = [2, 0, 0], sizes = [2, 8, 32], strides = [1, 1, 1]} : vector<4x8x32xf32> to vector<2x8x32xf32>
    %46 = vector.shape_cast %45 : vector<2x8x32xf32> to vector<16x32xf32>
    %47 = tpu.concatenate %44, %46 in 1 : vector<16x32xf32>, vector<16x32xf32> -> vector<16x64xf32>
    %c0_18 = arith.constant 0 : index
    %c0_19 = arith.constant 0 : index
    %c0_20 = arith.constant 0 : index
    %48 = vector.load %arg6[%c0_18, %c0_19, %c0_20] : memref<2x64x32xf32, #tpu.memory_space<vmem>>, vector<1x64x32xf32>
    %49 = vector.shape_cast %48 : vector<1x64x32xf32> to vector<64x32xf32>
    %cst_21 = arith.constant dense<0.000000e+00> : vector<16x32xf32>
    %50 = tpu.matmul %47, %49, %cst_21 {dimension_numbers = #tpu.dot_dimension_numbers<[1], [0], [0], [1], [0, 0, 1, 1], [], []>} : vector<16x64xf32>, vector<64x32xf32>, vector<16x32xf32> -> vector<16x32xf32>
    %c0_22 = arith.constant 0 : index
    %c0_23 = arith.constant 0 : index
    %c0_24 = arith.constant 0 : index
    %51 = vector.load %arg7[%c0_22, %c0_23, %c0_24] : memref<2x1x32xf32, #tpu.memory_space<vmem>>, vector<1x1x32xf32>
    %52 = vector.shape_cast %51 : vector<1x1x32xf32> to vector<1x32xf32>
    %53 = vector.broadcast %52 : vector<1x32xf32> to vector<16x32xf32>
    %54 = arith.addf %50, %53 : vector<16x32xf32>
    %55 = vector.shape_cast %54 : vector<16x32xf32> to vector<2x8x32xf32>
    %56 = arith.addf %55, %9 : vector<2x8x32xf32>
    %c0_25 = arith.constant 0 : index
    %c0_26 = arith.constant 0 : index
    %c0_27 = arith.constant 0 : index
    %57 = vector.load %arg8[%c0_25, %c0_26, %c0_27] : memref<2x1x32xf32, #tpu.memory_space<vmem>>, vector<1x1x32xf32>
    %58 = vector.shape_cast %57 : vector<1x1x32xf32> to vector<1x32xf32>
    %c0_28 = arith.constant 0 : index
    %c0_29 = arith.constant 0 : index
    %c0_30 = arith.constant 0 : index
    %59 = vector.load %arg9[%c0_28, %c0_29, %c0_30] : memref<2x1x32xf32, #tpu.memory_space<vmem>>, vector<1x1x32xf32>
    %60 = vector.shape_cast %59 : vector<1x1x32xf32> to vector<1x32xf32>
    %cst_31 = arith.constant dense<0.000000e+00> : vector<2x8xf32>
    %61 = vector.multi_reduction <add>, %56, %cst_31 [2] : vector<2x8x32xf32> to vector<2x8xf32>
    %62 = vector.shape_cast %61 : vector<2x8xf32> to vector<2x8x1xf32>
    %cst_32 = arith.constant 3.200000e+01 : f32
    %63 = vector.broadcast %cst_32 : f32 to vector<2x8x1xf32>
    %64 = arith.divf %62, %63 : vector<2x8x1xf32>
    %65 = vector.broadcast %64 : vector<2x8x1xf32> to vector<2x8x32xf32>
    %66 = arith.subf %56, %65 : vector<2x8x32xf32>
    %67 = arith.mulf %66, %66 : vector<2x8x32xf32>
    %cst_33 = arith.constant dense<0.000000e+00> : vector<2x8xf32>
    %68 = vector.multi_reduction <add>, %67, %cst_33 [2] : vector<2x8x32xf32> to vector<2x8xf32>
    %69 = vector.shape_cast %68 : vector<2x8xf32> to vector<2x8x1xf32>
    %cst_34 = arith.constant 3.200000e+01 : f32
    %70 = vector.broadcast %cst_34 : f32 to vector<2x8x1xf32>
    %71 = arith.divf %69, %70 : vector<2x8x1xf32>
    %72 = vector.broadcast %64 : vector<2x8x1xf32> to vector<2x8x32xf32>
    %73 = arith.subf %56, %72 : vector<2x8x32xf32>
    %cst_35 = arith.constant 9.99999974E-6 : f32
    %74 = vector.broadcast %cst_35 : f32 to vector<2x8x1xf32>
    %75 = arith.addf %71, %74 : vector<2x8x1xf32>
    %76 = math.rsqrt %75 : vector<2x8x1xf32>
    %77 = vector.broadcast %76 : vector<2x8x1xf32> to vector<2x8x32xf32>
    %78 = arith.mulf %73, %77 : vector<2x8x32xf32>
    %79 = vector.shape_cast %58 : vector<1x32xf32> to vector<1x1x32xf32>
    %80 = vector.broadcast %79 : vector<1x1x32xf32> to vector<2x8x32xf32>
    %81 = arith.mulf %78, %80 : vector<2x8x32xf32>
    %82 = vector.shape_cast %60 : vector<1x32xf32> to vector<1x1x32xf32>
    %83 = vector.broadcast %82 : vector<1x1x32xf32> to vector<2x8x32xf32>
    %84 = arith.addf %81, %83 : vector<2x8x32xf32>
    %85 = vector.shape_cast %84 : vector<2x8x32xf32> to vector<16x32xf32>
    %c0_36 = arith.constant 0 : index
    %c0_37 = arith.constant 0 : index
    %c0_38 = arith.constant 0 : index
    %86 = vector.load %arg10[%c0_36, %c0_37, %c0_38] : memref<2x32x128xf32, #tpu.memory_space<vmem>>, vector<1x32x128xf32>
    %87 = vector.shape_cast %86 : vector<1x32x128xf32> to vector<32x128xf32>
    %cst_39 = arith.constant dense<0.000000e+00> : vector<16x128xf32>
    %88 = tpu.matmul %85, %87, %cst_39 {dimension_numbers = #tpu.dot_dimension_numbers<[1], [0], [0], [1], [0, 0, 1, 1], [], []>} : vector<16x32xf32>, vector<32x128xf32>, vector<16x128xf32> -> vector<16x128xf32>
    %c0_40 = arith.constant 0 : index
    %c0_41 = arith.constant 0 : index
    %c0_42 = arith.constant 0 : index
    %89 = vector.load %arg11[%c0_40, %c0_41, %c0_42] : memref<2x1x128xf32, #tpu.memory_space<vmem>>, vector<1x1x128xf32>
    %90 = vector.shape_cast %89 : vector<1x1x128xf32> to vector<1x128xf32>
    %91 = vector.broadcast %90 : vector<1x128xf32> to vector<16x128xf32>
    %92 = arith.addf %88, %91 : vector<16x128xf32>
    %cst_43 = arith.constant 0.000000e+00 : f32
    %93 = vector.broadcast %cst_43 : f32 to vector<16x128xf32>
    %94 = arith.maximumf %92, %93 : vector<16x128xf32>
    %c0_44 = arith.constant 0 : index
    %c0_45 = arith.constant 0 : index
    %c0_46 = arith.constant 0 : index
    %95 = vector.load %arg12[%c0_44, %c0_45, %c0_46] : memref<2x128x32xf32, #tpu.memory_space<vmem>>, vector<1x128x32xf32>
    %96 = vector.shape_cast %95 : vector<1x128x32xf32> to vector<128x32xf32>
    %cst_47 = arith.constant dense<0.000000e+00> : vector<16x32xf32>
    %97 = tpu.matmul %94, %96, %cst_47 {dimension_numbers = #tpu.dot_dimension_numbers<[1], [0], [0], [1], [0, 0, 1, 1], [], []>} : vector<16x128xf32>, vector<128x32xf32>, vector<16x32xf32> -> vector<16x32xf32>
    %c0_48 = arith.constant 0 : index
    %c0_49 = arith.constant 0 : index
    %c0_50 = arith.constant 0 : index
    %98 = vector.load %arg13[%c0_48, %c0_49, %c0_50] : memref<2x1x32xf32, #tpu.memory_space<vmem>>, vector<1x1x32xf32>
    %99 = vector.shape_cast %98 : vector<1x1x32xf32> to vector<1x32xf32>
    %100 = vector.broadcast %99 : vector<1x32xf32> to vector<16x32xf32>
    %101 = arith.addf %97, %100 : vector<16x32xf32>
    %102 = vector.shape_cast %101 : vector<16x32xf32> to vector<2x8x32xf32>
    %103 = arith.addf %102, %84 : vector<2x8x32xf32>
    %c0_51 = arith.constant 0 : index
    %c0_52 = arith.constant 0 : index
    %c0_53 = arith.constant 0 : index
    %104 = vector.load %arg14[%c0_51, %c0_52, %c0_53] : memref<2x1x32xf32, #tpu.memory_space<vmem>>, vector<1x1x32xf32>
    %105 = vector.shape_cast %104 : vector<1x1x32xf32> to vector<1x32xf32>
    %c0_54 = arith.constant 0 : index
    %c0_55 = arith.constant 0 : index
    %c0_56 = arith.constant 0 : index
    %106 = vector.load %arg15[%c0_54, %c0_55, %c0_56] : memref<2x1x32xf32, #tpu.memory_space<vmem>>, vector<1x1x32xf32>
    %107 = vector.shape_cast %106 : vector<1x1x32xf32> to vector<1x32xf32>
    %cst_57 = arith.constant dense<0.000000e+00> : vector<2x8xf32>
    %108 = vector.multi_reduction <add>, %103, %cst_57 [2] : vector<2x8x32xf32> to vector<2x8xf32>
    %109 = vector.shape_cast %108 : vector<2x8xf32> to vector<2x8x1xf32>
    %cst_58 = arith.constant 3.200000e+01 : f32
    %110 = vector.broadcast %cst_58 : f32 to vector<2x8x1xf32>
    %111 = arith.divf %109, %110 : vector<2x8x1xf32>
    %112 = vector.broadcast %111 : vector<2x8x1xf32> to vector<2x8x32xf32>
    %113 = arith.subf %103, %112 : vector<2x8x32xf32>
    %114 = arith.mulf %113, %113 : vector<2x8x32xf32>
    %cst_59 = arith.constant dense<0.000000e+00> : vector<2x8xf32>
    %115 = vector.multi_reduction <add>, %114, %cst_59 [2] : vector<2x8x32xf32> to vector<2x8xf32>
    %116 = vector.shape_cast %115 : vector<2x8xf32> to vector<2x8x1xf32>
    %cst_60 = arith.constant 3.200000e+01 : f32
    %117 = vector.broadcast %cst_60 : f32 to vector<2x8x1xf32>
    %118 = arith.divf %116, %117 : vector<2x8x1xf32>
    %119 = vector.broadcast %111 : vector<2x8x1xf32> to vector<2x8x32xf32>
    %120 = arith.subf %103, %119 : vector<2x8x32xf32>
    %cst_61 = arith.constant 9.99999974E-6 : f32
    %121 = vector.broadcast %cst_61 : f32 to vector<2x8x1xf32>
    %122 = arith.addf %118, %121 : vector<2x8x1xf32>
    %123 = math.rsqrt %122 : vector<2x8x1xf32>
    %124 = vector.broadcast %123 : vector<2x8x1xf32> to vector<2x8x32xf32>
    %125 = arith.mulf %120, %124 : vector<2x8x32xf32>
    %126 = vector.shape_cast %105 : vector<1x32xf32> to vector<1x1x32xf32>
    %127 = vector.broadcast %126 : vector<1x1x32xf32> to vector<2x8x32xf32>
    %128 = arith.mulf %125, %127 : vector<2x8x32xf32>
    %129 = vector.shape_cast %107 : vector<1x32xf32> to vector<1x1x32xf32>
    %130 = vector.broadcast %129 : vector<1x1x32xf32> to vector<2x8x32xf32>
    %131 = arith.addf %128, %130 : vector<2x8x32xf32>
    %132 = vector.shape_cast %131 : vector<2x8x32xf32> to vector<16x32xf32>
    %c1 = arith.constant 1 : index
    %c0_62 = arith.constant 0 : index
    %c0_63 = arith.constant 0 : index
    %133 = vector.load %arg5[%c1, %c0_62, %c0_63] : memref<2x32x192xf32, #tpu.memory_space<vmem>>, vector<1x32x192xf32>
    %134 = vector.shape_cast %133 : vector<1x32x192xf32> to vector<32x192xf32>
    %cst_64 = arith.constant dense<0.000000e+00> : vector<16x192xf32>
    %135 = tpu.matmul %132, %134, %cst_64 {dimension_numbers = #tpu.dot_dimension_numbers<[1], [0], [0], [1], [0, 0, 1, 1], [], []>} : vector<16x32xf32>, vector<32x192xf32>, vector<16x192xf32> -> vector<16x192xf32>
    %136 = vector.extract_strided_slice %135 {offsets = [0, 0], sizes = [16, 32], strides = [1, 1]} : vector<16x192xf32> to vector<16x32xf32>
    %137 = vector.shape_cast %136 : vector<16x32xf32> to vector<2x8x32xf32>
    %138 = vector.extract_strided_slice %135 {offsets = [0, 32], sizes = [16, 32], strides = [1, 1]} : vector<16x192xf32> to vector<16x32xf32>
    %139 = vector.shape_cast %138 : vector<16x32xf32> to vector<2x8x32xf32>
    %140 = tpu.concatenate %137, %139 in 0 : vector<2x8x32xf32>, vector<2x8x32xf32> -> vector<4x8x32xf32>
    %141 = vector.extract_strided_slice %135 {offsets = [0, 64], sizes = [16, 32], strides = [1, 1]} : vector<16x192xf32> to vector<16x32xf32>
    %142 = vector.shape_cast %141 : vector<16x32xf32> to vector<2x8x32xf32>
    %143 = vector.extract_strided_slice %135 {offsets = [0, 96], sizes = [16, 32], strides = [1, 1]} : vector<16x192xf32> to vector<16x32xf32>
    %144 = vector.shape_cast %143 : vector<16x32xf32> to vector<2x8x32xf32>
    %145 = tpu.concatenate %142, %144 in 0 : vector<2x8x32xf32>, vector<2x8x32xf32> -> vector<4x8x32xf32>
    %146 = vector.extract_strided_slice %135 {offsets = [0, 128], sizes = [16, 32], strides = [1, 1]} : vector<16x192xf32> to vector<16x32xf32>
    %147 = vector.shape_cast %146 : vector<16x32xf32> to vector<2x8x32xf32>
    %148 = vector.extract_strided_slice %135 {offsets = [0, 160], sizes = [16, 32], strides = [1, 1]} : vector<16x192xf32> to vector<16x32xf32>
    %149 = vector.shape_cast %148 : vector<16x32xf32> to vector<2x8x32xf32>
    %150 = tpu.concatenate %147, %149 in 0 : vector<2x8x32xf32>, vector<2x8x32xf32> -> vector<4x8x32xf32>
    "tpu.trace_start"() <{level = 10 : i32, message = "bte,bse->bts"}> : () -> ()
    %cst_65 = arith.constant dense<0.000000e+00> : vector<4x8x8xf32>
    %151 = tpu.matmul %140, %145, %cst_65 {dimension_numbers = #tpu.dot_dimension_numbers<[2], [2], [1], [1], [0, 0, 0, 1, 1, 1], [0], [0]>} : vector<4x8x32xf32>, vector<4x8x32xf32>, vector<4x8x8xf32> -> vector<4x8x8xf32>
    "tpu.trace_stop"() : () -> ()
    %cst_66 = arith.constant 0.176776692 : f32
    %152 = vector.broadcast %cst_66 : f32 to vector<4x8x8xf32>
    %153 = arith.mulf %151, %152 : vector<4x8x8xf32>
    %cst_67 = arith.constant dense<0xFF800000> : vector<4x8xf32>
    %154 = vector.multi_reduction <maximumf>, %153, %cst_67 [2] : vector<4x8x8xf32> to vector<4x8xf32>
    %155 = vector.shape_cast %154 : vector<4x8xf32> to vector<4x8x1xf32>
    %156 = vector.broadcast %155 : vector<4x8x1xf32> to vector<4x8x8xf32>
    %157 = arith.subf %153, %156 : vector<4x8x8xf32>
    %158 = math.exp %157 : vector<4x8x8xf32>
    %cst_68 = arith.constant dense<0.000000e+00> : vector<4x8xf32>
    %159 = vector.multi_reduction <add>, %158, %cst_68 [2] : vector<4x8x8xf32> to vector<4x8xf32>
    %160 = vector.shape_cast %159 : vector<4x8xf32> to vector<4x8x1xf32>
    %161 = tpu.reciprocal %160 {approx = true} : vector<4x8x1xf32> -> vector<4x8x1xf32>
    %162 = vector.broadcast %161 : vector<4x8x1xf32> to vector<4x8x8xf32>
    %163 = arith.mulf %158, %162 : vector<4x8x8xf32>
    "tpu.trace_start"() <{level = 10 : i32, message = "bts,bse->bte"}> : () -> ()
    %cst_69 = arith.constant dense<0.000000e+00> : vector<4x8x32xf32>
    %164 = tpu.matmul %163, %150, %cst_69 {dimension_numbers = #tpu.dot_dimension_numbers<[2], [1], [1], [2], [0, 0, 0, 1, 1, 2], [0], [0]>} : vector<4x8x8xf32>, vector<4x8x32xf32>, vector<4x8x32xf32> -> vector<4x8x32xf32>
    "tpu.trace_stop"() : () -> ()
    %165 = vector.extract_strided_slice %164 {offsets = [0, 0, 0], sizes = [2, 8, 32], strides = [1, 1, 1]} : vector<4x8x32xf32> to vector<2x8x32xf32>
    %166 = vector.shape_cast %165 : vector<2x8x32xf32> to vector<16x32xf32>
    %167 = vector.extract_strided_slice %164 {offsets = [2, 0, 0], sizes = [2, 8, 32], strides = [1, 1, 1]} : vector<4x8x32xf32> to vector<2x8x32xf32>
    %168 = vector.shape_cast %167 : vector<2x8x32xf32> to vector<16x32xf32>
    %169 = tpu.concatenate %166, %168 in 1 : vector<16x32xf32>, vector<16x32xf32> -> vector<16x64xf32>
    %c1_70 = arith.constant 1 : index
    %c0_71 = arith.constant 0 : index
    %c0_72 = arith.constant 0 : index
    %170 = vector.load %arg6[%c1_70, %c0_71, %c0_72] : memref<2x64x32xf32, #tpu.memory_space<vmem>>, vector<1x64x32xf32>
    %171 = vector.shape_cast %170 : vector<1x64x32xf32> to vector<64x32xf32>
    %cst_73 = arith.constant dense<0.000000e+00> : vector<16x32xf32>
    %172 = tpu.matmul %169, %171, %cst_73 {dimension_numbers = #tpu.dot_dimension_numbers<[1], [0], [0], [1], [0, 0, 1, 1], [], []>} : vector<16x64xf32>, vector<64x32xf32>, vector<16x32xf32> -> vector<16x32xf32>
    %c1_74 = arith.constant 1 : index
    %c0_75 = arith.constant 0 : index
    %c0_76 = arith.constant 0 : index
    %173 = vector.load %arg7[%c1_74, %c0_75, %c0_76] : memref<2x1x32xf32, #tpu.memory_space<vmem>>, vector<1x1x32xf32>
    %174 = vector.shape_cast %173 : vector<1x1x32xf32> to vector<1x32xf32>
    %175 = vector.broadcast %174 : vector<1x32xf32> to vector<16x32xf32>
    %176 = arith.addf %172, %175 : vector<16x32xf32>
    %177 = vector.shape_cast %176 : vector<16x32xf32> to vector<2x8x32xf32>
    %178 = arith.addf %177, %131 : vector<2x8x32xf32>
    %c1_77 = arith.constant 1 : index
    %c0_78 = arith.constant 0 : index
    %c0_79 = arith.constant 0 : index
    %179 = vector.load %arg8[%c1_77, %c0_78, %c0_79] : memref<2x1x32xf32, #tpu.memory_space<vmem>>, vector<1x1x32xf32>
    %180 = vector.shape_cast %179 : vector<1x1x32xf32> to vector<1x32xf32>
    %c1_80 = arith.constant 1 : index
    %c0_81 = arith.constant 0 : index
    %c0_82 = arith.constant 0 : index
    %181 = vector.load %arg9[%c1_80, %c0_81, %c0_82] : memref<2x1x32xf32, #tpu.memory_space<vmem>>, vector<1x1x32xf32>
    %182 = vector.shape_cast %181 : vector<1x1x32xf32> to vector<1x32xf32>
    %cst_83 = arith.constant dense<0.000000e+00> : vector<2x8xf32>
    %183 = vector.multi_reduction <add>, %178, %cst_83 [2] : vector<2x8x32xf32> to vector<2x8xf32>
    %184 = vector.shape_cast %183 : vector<2x8xf32> to vector<2x8x1xf32>
    %cst_84 = arith.constant 3.200000e+01 : f32
    %185 = vector.broadcast %cst_84 : f32 to vector<2x8x1xf32>
    %186 = arith.divf %184, %185 : vector<2x8x1xf32>
    %187 = vector.broadcast %186 : vector<2x8x1xf32> to vector<2x8x32xf32>
    %188 = arith.subf %178, %187 : vector<2x8x32xf32>
    %189 = arith.mulf %188, %188 : vector<2x8x32xf32>
    %cst_85 = arith.constant dense<0.000000e+00> : vector<2x8xf32>
    %190 = vector.multi_reduction <add>, %189, %cst_85 [2] : vector<2x8x32xf32> to vector<2x8xf32>
    %191 = vector.shape_cast %190 : vector<2x8xf32> to vector<2x8x1xf32>
    %cst_86 = arith.constant 3.200000e+01 : f32
    %192 = vector.broadcast %cst_86 : f32 to vector<2x8x1xf32>
    %193 = arith.divf %191, %192 : vector<2x8x1xf32>
    %194 = vector.broadcast %186 : vector<2x8x1xf32> to vector<2x8x32xf32>
    %195 = arith.subf %178, %194 : vector<2x8x32xf32>
    %cst_87 = arith.constant 9.99999974E-6 : f32
    %196 = vector.broadcast %cst_87 : f32 to vector<2x8x1xf32>
    %197 = arith.addf %193, %196 : vector<2x8x1xf32>
    %198 = math.rsqrt %197 : vector<2x8x1xf32>
    %199 = vector.broadcast %198 : vector<2x8x1xf32> to vector<2x8x32xf32>
    %200 = arith.mulf %195, %199 : vector<2x8x32xf32>
    %201 = vector.shape_cast %180 : vector<1x32xf32> to vector<1x1x32xf32>
    %202 = vector.broadcast %201 : vector<1x1x32xf32> to vector<2x8x32xf32>
    %203 = arith.mulf %200, %202 : vector<2x8x32xf32>
    %204 = vector.shape_cast %182 : vector<1x32xf32> to vector<1x1x32xf32>
    %205 = vector.broadcast %204 : vector<1x1x32xf32> to vector<2x8x32xf32>
    %206 = arith.addf %203, %205 : vector<2x8x32xf32>
    %207 = vector.shape_cast %206 : vector<2x8x32xf32> to vector<16x32xf32>
    %c1_88 = arith.constant 1 : index
    %c0_89 = arith.constant 0 : index
    %c0_90 = arith.constant 0 : index
    %208 = vector.load %arg10[%c1_88, %c0_89, %c0_90] : memref<2x32x128xf32, #tpu.memory_space<vmem>>, vector<1x32x128xf32>
    %209 = vector.shape_cast %208 : vector<1x32x128xf32> to vector<32x128xf32>
    %cst_91 = arith.constant dense<0.000000e+00> : vector<16x128xf32>
    %210 = tpu.matmul %207, %209, %cst_91 {dimension_numbers = #tpu.dot_dimension_numbers<[1], [0], [0], [1], [0, 0, 1, 1], [], []>} : vector<16x32xf32>, vector<32x128xf32>, vector<16x128xf32> -> vector<16x128xf32>
    %c1_92 = arith.constant 1 : index
    %c0_93 = arith.constant 0 : index
    %c0_94 = arith.constant 0 : index
    %211 = vector.load %arg11[%c1_92, %c0_93, %c0_94] : memref<2x1x128xf32, #tpu.memory_space<vmem>>, vector<1x1x128xf32>
    %212 = vector.shape_cast %211 : vector<1x1x128xf32> to vector<1x128xf32>
    %213 = vector.broadcast %212 : vector<1x128xf32> to vector<16x128xf32>
    %214 = arith.addf %210, %213 : vector<16x128xf32>
    %cst_95 = arith.constant 0.000000e+00 : f32
    %215 = vector.broadcast %cst_95 : f32 to vector<16x128xf32>
    %216 = arith.maximumf %214, %215 : vector<16x128xf32>
    %c1_96 = arith.constant 1 : index
    %c0_97 = arith.constant 0 : index
    %c0_98 = arith.constant 0 : index
    %217 = vector.load %arg12[%c1_96, %c0_97, %c0_98] : memref<2x128x32xf32, #tpu.memory_space<vmem>>, vector<1x128x32xf32>
    %218 = vector.shape_cast %217 : vector<1x128x32xf32> to vector<128x32xf32>
    %cst_99 = arith.constant dense<0.000000e+00> : vector<16x32xf32>
    %219 = tpu.matmul %216, %218, %cst_99 {dimension_numbers = #tpu.dot_dimension_numbers<[1], [0], [0], [1], [0, 0, 1, 1], [], []>} : vector<16x128xf32>, vector<128x32xf32>, vector<16x32xf32> -> vector<16x32xf32>
    %c1_100 = arith.constant 1 : index
    %c0_101 = arith.constant 0 : index
    %c0_102 = arith.constant 0 : index
    %220 = vector.load %arg13[%c1_100, %c0_101, %c0_102] : memref<2x1x32xf32, #tpu.memory_space<vmem>>, vector<1x1x32xf32>
    %221 = vector.shape_cast %220 : vector<1x1x32xf32> to vector<1x32xf32>
    %222 = vector.broadcast %221 : vector<1x32xf32> to vector<16x32xf32>
    %223 = arith.addf %219, %222 : vector<16x32xf32>
    %224 = vector.shape_cast %223 : vector<16x32xf32> to vector<2x8x32xf32>
    %225 = arith.addf %224, %206 : vector<2x8x32xf32>
    %c1_103 = arith.constant 1 : index
    %c0_104 = arith.constant 0 : index
    %c0_105 = arith.constant 0 : index
    %226 = vector.load %arg14[%c1_103, %c0_104, %c0_105] : memref<2x1x32xf32, #tpu.memory_space<vmem>>, vector<1x1x32xf32>
    %227 = vector.shape_cast %226 : vector<1x1x32xf32> to vector<1x32xf32>
    %c1_106 = arith.constant 1 : index
    %c0_107 = arith.constant 0 : index
    %c0_108 = arith.constant 0 : index
    %228 = vector.load %arg15[%c1_106, %c0_107, %c0_108] : memref<2x1x32xf32, #tpu.memory_space<vmem>>, vector<1x1x32xf32>
    %229 = vector.shape_cast %228 : vector<1x1x32xf32> to vector<1x32xf32>
    %cst_109 = arith.constant dense<0.000000e+00> : vector<2x8xf32>
    %230 = vector.multi_reduction <add>, %225, %cst_109 [2] : vector<2x8x32xf32> to vector<2x8xf32>
    %231 = vector.shape_cast %230 : vector<2x8xf32> to vector<2x8x1xf32>
    %cst_110 = arith.constant 3.200000e+01 : f32
    %232 = vector.broadcast %cst_110 : f32 to vector<2x8x1xf32>
    %233 = arith.divf %231, %232 : vector<2x8x1xf32>
    %234 = vector.broadcast %233 : vector<2x8x1xf32> to vector<2x8x32xf32>
    %235 = arith.subf %225, %234 : vector<2x8x32xf32>
    %236 = arith.mulf %235, %235 : vector<2x8x32xf32>
    %cst_111 = arith.constant dense<0.000000e+00> : vector<2x8xf32>
    %237 = vector.multi_reduction <add>, %236, %cst_111 [2] : vector<2x8x32xf32> to vector<2x8xf32>
    %238 = vector.shape_cast %237 : vector<2x8xf32> to vector<2x8x1xf32>
    %cst_112 = arith.constant 3.200000e+01 : f32
    %239 = vector.broadcast %cst_112 : f32 to vector<2x8x1xf32>
    %240 = arith.divf %238, %239 : vector<2x8x1xf32>
    %241 = vector.broadcast %233 : vector<2x8x1xf32> to vector<2x8x32xf32>
    %242 = arith.subf %225, %241 : vector<2x8x32xf32>
    %cst_113 = arith.constant 9.99999974E-6 : f32
    %243 = vector.broadcast %cst_113 : f32 to vector<2x8x1xf32>
    %244 = arith.addf %240, %243 : vector<2x8x1xf32>
    %245 = math.rsqrt %244 : vector<2x8x1xf32>
    %246 = vector.broadcast %245 : vector<2x8x1xf32> to vector<2x8x32xf32>
    %247 = arith.mulf %242, %246 : vector<2x8x32xf32>
    %248 = vector.shape_cast %227 : vector<1x32xf32> to vector<1x1x32xf32>
    %249 = vector.broadcast %248 : vector<1x1x32xf32> to vector<2x8x32xf32>
    %250 = arith.mulf %247, %249 : vector<2x8x32xf32>
    %251 = vector.shape_cast %229 : vector<1x32xf32> to vector<1x1x32xf32>
    %252 = vector.broadcast %251 : vector<1x1x32xf32> to vector<2x8x32xf32>
    %253 = arith.addf %250, %252 : vector<2x8x32xf32>
    %254 = vector.shape_cast %253 : vector<2x8x32xf32> to vector<16x32xf32>
    %c0_114 = arith.constant 0 : index
    %c0_115 = arith.constant 0 : index
    %255 = vector.load %arg16[%c0_114, %c0_115] : memref<32x32xf32, #tpu.memory_space<vmem>>, vector<32x32xf32>
    %cst_116 = arith.constant dense<0.000000e+00> : vector<16x32xf32>
    %256 = tpu.matmul %254, %255, %cst_116 {dimension_numbers = #tpu.dot_dimension_numbers<[1], [0], [0], [1], [0, 0, 1, 1], [], []>} : vector<16x32xf32>, vector<32x32xf32>, vector<16x32xf32> -> vector<16x32xf32>
    %c0_117 = arith.constant 0 : index
    %c0_118 = arith.constant 0 : index
    %257 = vector.load %arg17[%c0_117, %c0_118] : memref<1x32xf32, #tpu.memory_space<vmem>>, vector<1x32xf32>
    %258 = vector.broadcast %257 : vector<1x32xf32> to vector<16x32xf32>
    %259 = arith.addf %256, %258 : vector<16x32xf32>
    %260 = vector.shape_cast %259 : vector<16x32xf32> to vector<2x8x32xf32>
    %261 = vector.extract_strided_slice %260 {offsets = [0, 7, 0], sizes = [2, 1, 32], strides = [1, 1, 1]} : vector<2x8x32xf32> to vector<2x1x32xf32>
    %c0_119 = arith.constant 0 : index
    %c0_120 = arith.constant 0 : index
    %c0_121 = arith.constant 0 : index
    %262 = vector.load %arg24[%c0_119, %c0_120, %c0_121] : memref<2x1x32xf32, #tpu.memory_space<vmem>>, vector<2x1x32xf32>
    tpu.vector_store %arg24[%c0_119, %c0_120, %c0_121], %261 {strides = array<i32>} : memref<2x1x32xf32, #tpu.memory_space<vmem>>, vector<2x1x32xf32>,
    %263 = vector.extract_strided_slice %260 {offsets = [0, 0, 0], sizes = [2, 5, 32], strides = [1, 1, 1]} : vector<2x8x32xf32> to vector<2x5x32xf32>
    %264 = vector.shape_cast %263 : vector<2x5x32xf32> to vector<10x32xf32>
    %c0_122 = arith.constant 0 : index
    %c0_123 = arith.constant 0 : index
    %265 = vector.load %arg18[%c0_122, %c0_123] : memref<32x6xf32, #tpu.memory_space<vmem>>, vector<32x6xf32>
    %cst_124 = arith.constant dense<0.000000e+00> : vector<10x6xf32>
    %266 = tpu.matmul %264, %265, %cst_124 {dimension_numbers = #tpu.dot_dimension_numbers<[1], [0], [0], [1], [0, 0, 1, 1], [], []>} : vector<10x32xf32>, vector<32x6xf32>, vector<10x6xf32> -> vector<10x6xf32>
    %c0_125 = arith.constant 0 : index
    %c0_126 = arith.constant 0 : index
    %267 = vector.load %arg19[%c0_125, %c0_126] : memref<1x6xf32, #tpu.memory_space<vmem>>, vector<1x6xf32>
    %268 = vector.broadcast %267 : vector<1x6xf32> to vector<10x6xf32>
    %269 = arith.addf %266, %268 : vector<10x6xf32>
    %270 = vector.shape_cast %269 : vector<10x6xf32> to vector<2x5x6xf32>
    %271 = vector.extract_strided_slice %270 {offsets = [0, 0, 0], sizes = [2, 1, 6], strides = [1, 1, 1]} : vector<2x5x6xf32> to vector<2x1x6xf32>
    %272 = vector.shape_cast %271 : vector<2x1x6xf32> to vector<2x6xf32>
    %273 = vector.extract_strided_slice %270 {offsets = [0, 1, 0], sizes = [2, 4, 6], strides = [1, 1, 1]} : vector<2x5x6xf32> to vector<2x4x6xf32>
    %cst_127 = arith.constant dense<0.000000e+00> : vector<2x4xf32>
    %274 = vector.multi_reduction <add>, %273, %cst_127 [2] : vector<2x4x6xf32> to vector<2x4xf32>
    %cst_128 = arith.constant 6.000000e+00 : f32
    %275 = vector.broadcast %cst_128 : f32 to vector<2x4xf32>
    %276 = arith.divf %274, %275 : vector<2x4xf32>
    %c0_129 = arith.constant 0 : index
    %c0_130 = arith.constant 0 : index
    %277 = vector.load %arg20[%c0_129, %c0_130] : memref<6x128xf32, #tpu.memory_space<vmem>>, vector<6x128xf32>
    %cst_131 = arith.constant dense<0.000000e+00> : vector<2x128xf32>
    %278 = tpu.matmul %272, %277, %cst_131 {dimension_numbers = #tpu.dot_dimension_numbers<[1], [0], [0], [1], [0, 0, 1, 1], [], []>} : vector<2x6xf32>, vector<6x128xf32>, vector<2x128xf32> -> vector<2x128xf32>
    %c0_132 = arith.constant 0 : index
    %c0_133 = arith.constant 0 : index
    %279 = vector.load %arg21[%c0_132, %c0_133] : memref<4x128xf32, #tpu.memory_space<vmem>>, vector<4x128xf32>
    %cst_134 = arith.constant dense<0.000000e+00> : vector<2x128xf32>
    %280 = tpu.matmul %276, %279, %cst_134 {dimension_numbers = #tpu.dot_dimension_numbers<[1], [0], [0], [1], [0, 0, 1, 1], [], []>} : vector<2x4xf32>, vector<4x128xf32>, vector<2x128xf32> -> vector<2x128xf32>
    %281 = arith.addf %278, %280 : vector<2x128xf32>
    %c0_135 = arith.constant 0 : index
    %c0_136 = arith.constant 0 : index
    %282 = vector.load %arg22[%c0_135, %c0_136] : memref<1x128xf32, #tpu.memory_space<vmem>>, vector<1x128xf32>
    %283 = vector.broadcast %282 : vector<1x128xf32> to vector<2x128xf32>
    %284 = arith.addf %281, %283 : vector<2x128xf32>
    %285 = vector.shape_cast %284 : vector<2x128xf32> to vector<2x1x128xf32>
    %c0_137 = arith.constant 0 : index
    %c0_138 = arith.constant 0 : index
    %c0_139 = arith.constant 0 : index
    %286 = vector.load %arg23[%c0_137, %c0_138, %c0_139] : memref<2x1x128xf32, #tpu.memory_space<vmem>>, vector<2x1x128xf32>
    tpu.vector_store %arg23[%c0_137, %c0_138, %c0_139], %285 {strides = array<i32>} : memref<2x1x128xf32, #tpu.memory_space<vmem>>, vector<2x1x128xf32>,
    return
  }
  func.func @transform_0(%arg0: i32) -> (i32, i32, i32) {
    %c0_i32 = arith.constant 0 : i32
    %c0_i32_0 = arith.constant 0 : i32
    %c0_i32_1 = arith.constant 0 : i32
    return %arg0, %c0_i32, %c0_i32_0 : i32, i32, i32
  }
  func.func @transform_1(%arg0: i32) -> (i32, i32, i32) {
    %c0_i32 = arith.constant 0 : i32
    %c0_i32_0 = arith.constant 0 : i32
    %c0_i32_1 = arith.constant 0 : i32
    return %arg0, %c0_i32, %c0_i32_0 : i32, i32, i32
  }
  func.func @transform_2(%arg0: i32) -> (i32, i32) {
    %c0_i32 = arith.constant 0 : i32
    %c0_i32_0 = arith.constant 0 : i32
    %c0_i32_1 = arith.constant 0 : i32
    return %c0_i32, %c0_i32_0 : i32, i32
  }
  func.func @transform_3(%arg0: i32) -> (i32, i32) {
    %c0_i32 = arith.constant 0 : i32
    %c0_i32_0 = arith.constant 0 : i32
    %c0_i32_1 = arith.constant 0 : i32
    return %c0_i32, %c0_i32_0 : i32, i32
  }
  func.func @transform_4(%arg0: i32) -> (i32, i32, i32) {
    %c0_i32 = arith.constant 0 : i32
    %c0_i32_0 = arith.constant 0 : i32
    %c0_i32_1 = arith.constant 0 : i32
    %c0_i32_2 = arith.constant 0 : i32
    return %c0_i32, %c0_i32_0, %c0_i32_1 : i32, i32, i32
  }
  func.func @transform_5(%arg0: i32) -> (i32, i32, i32) {
    %c0_i32 = arith.constant 0 : i32
    %c0_i32_0 = arith.constant 0 : i32
    %c0_i32_1 = arith.constant 0 : i32
    %c0_i32_2 = arith.constant 0 : i32
    return %c0_i32, %c0_i32_0, %c0_i32_1 : i32, i32, i32
  }
  func.func @transform_6(%arg0: i32) -> (i32, i32, i32) {
    %c0_i32 = arith.constant 0 : i32
    %c0_i32_0 = arith.constant 0 : i32
    %c0_i32_1 = arith.constant 0 : i32
    %c0_i32_2 = arith.constant 0 : i32
    return %c0_i32, %c0_i32_0, %c0_i32_1 : i32, i32, i32
  }
  func.func @transform_7(%arg0: i32) -> (i32, i32, i32) {
    %c0_i32 = arith.constant 0 : i32
    %c0_i32_0 = arith.constant 0 : i32
    %c0_i32_1 = arith.constant 0 : i32
    %c0_i32_2 = arith.constant 0 : i32
    return %c0_i32, %c0_i32_0, %c0_i32_1 : i32, i32, i32
  }
  func.func @transform_8(%arg0: i32) -> (i32, i32, i32) {
    %c0_i32 = arith.constant 0 : i32
    %c0_i32_0 = arith.constant 0 : i32
    %c0_i32_1 = arith.constant 0 : i32
    %c0_i32_2 = arith.constant 0 : i32
    return %c0_i32, %c0_i32_0, %c0_i32_1 : i32, i32, i32
  }
  func.func @transform_9(%arg0: i32) -> (i32, i32, i32) {
    %c0_i32 = arith.constant 0 : i32
    %c0_i32_0 = arith.constant 0 : i32
    %c0_i32_1 = arith.constant 0 : i32
    %c0_i32_2 = arith.constant 0 : i32
    return %c0_i32, %c0_i32_0, %c0_i32_1 : i32, i32, i32
  }
  func.func @transform_10(%arg0: i32) -> (i32, i32, i32) {
    %c0_i32 = arith.constant 0 : i32
    %c0_i32_0 = arith.constant 0 : i32
    %c0_i32_1 = arith.constant 0 : i32
    %c0_i32_2 = arith.constant 0 : i32
    return %c0_i32, %c0_i32_0, %c0_i32_1 : i32, i32, i32
  }
  func.func @transform_11(%arg0: i32) -> (i32, i32, i32) {
    %c0_i32 = arith.constant 0 : i32
    %c0_i32_0 = arith.constant 0 : i32
    %c0_i32_1 = arith.constant 0 : i32
    %c0_i32_2 = arith.constant 0 : i32
    return %c0_i32, %c0_i32_0, %c0_i32_1 : i32, i32, i32
  }
  func.func @transform_12(%arg0: i32) -> (i32, i32, i32) {
    %c0_i32 = arith.constant 0 : i32
    %c0_i32_0 = arith.constant 0 : i32
    %c0_i32_1 = arith.constant 0 : i32
    %c0_i32_2 = arith.constant 0 : i32
    return %c0_i32, %c0_i32_0, %c0_i32_1 : i32, i32, i32
  }
  func.func @transform_13(%arg0: i32) -> (i32, i32, i32) {
    %c0_i32 = arith.constant 0 : i32
    %c0_i32_0 = arith.constant 0 : i32
    %c0_i32_1 = arith.constant 0 : i32
    %c0_i32_2 = arith.constant 0 : i32
    return %c0_i32, %c0_i32_0, %c0_i32_1 : i32, i32, i32
  }
  func.func @transform_14(%arg0: i32) -> (i32, i32, i32) {
    %c0_i32 = arith.constant 0 : i32
    %c0_i32_0 = arith.constant 0 : i32
    %c0_i32_1 = arith.constant 0 : i32
    %c0_i32_2 = arith.constant 0 : i32
    return %c0_i32, %c0_i32_0, %c0_i32_1 : i32, i32, i32
  }
  func.func @transform_15(%arg0: i32) -> (i32, i32) {
    %c0_i32 = arith.constant 0 : i32
    %c0_i32_0 = arith.constant 0 : i32
    %c0_i32_1 = arith.constant 0 : i32
    return %c0_i32, %c0_i32_0 : i32, i32
  }
  func.func @transform_16(%arg0: i32) -> (i32, i32) {
    %c0_i32 = arith.constant 0 : i32
    %c0_i32_0 = arith.constant 0 : i32
    %c0_i32_1 = arith.constant 0 : i32
    return %c0_i32, %c0_i32_0 : i32, i32
  }
  func.func @transform_17(%arg0: i32) -> (i32, i32) {
    %c0_i32 = arith.constant 0 : i32
    %c0_i32_0 = arith.constant 0 : i32
    %c0_i32_1 = arith.constant 0 : i32
    return %c0_i32, %c0_i32_0 : i32, i32
  }
  func.func @transform_18(%arg0: i32) -> (i32, i32) {
    %c0_i32 = arith.constant 0 : i32
    %c0_i32_0 = arith.constant 0 : i32
    %c0_i32_1 = arith.constant 0 : i32
    return %c0_i32, %c0_i32_0 : i32, i32
  }
  func.func @transform_19(%arg0: i32) -> (i32, i32) {
    %c0_i32 = arith.constant 0 : i32
    %c0_i32_0 = arith.constant 0 : i32
    %c0_i32_1 = arith.constant 0 : i32
    return %c0_i32, %c0_i32_0 : i32, i32
  }
  func.func @transform_20(%arg0: i32) -> (i32, i32) {
    %c0_i32 = arith.constant 0 : i32
    %c0_i32_0 = arith.constant 0 : i32
    %c0_i32_1 = arith.constant 0 : i32
    return %c0_i32, %c0_i32_0 : i32, i32
  }
  func.func @transform_21(%arg0: i32) -> (i32, i32) {
    %c0_i32 = arith.constant 0 : i32
    %c0_i32_0 = arith.constant 0 : i32
    %c0_i32_1 = arith.constant 0 : i32
    return %c0_i32, %c0_i32_0 : i32, i32
  }
  func.func @transform_22(%arg0: i32) -> (i32, i32, i32) {
    %c0_i32 = arith.constant 0 : i32
    %c0_i32_0 = arith.constant 0 : i32
    %c0_i32_1 = arith.constant 0 : i32
    return %arg0, %c0_i32, %c0_i32_0 : i32, i32, i32
  }
  func.func @transform_23(%arg0: i32) -> (i32, i32, i32) {
    %c0_i32 = arith.constant 0 : i32
    %c0_i32_0 = arith.constant 0 : i32
    %c0_i32_1 = arith.constant 0 : i32
    return %arg0, %c0_i32, %c0_i32_0 : i32, i32, i32
  }
}

</mosaic_0001>

<llo_original>
// kernel: dqn_updet_forward.1
$region0: #{dqn_updet_forward.1}
  #allocation0 [shape = 'u32[]', space=smem, size = 0x4, offset = 0x4, fixed_abs, tag = 'smem constant byte address 0x4 - core index']
  #allocation1 [shape = 'u32[144,128]{1,0:T(1,128)}', space=vmem, size = 0x12000, scoped, tag = 'internal scratch']
  %s0 = inlined_call_operand.vmem [shape: f32[4,7,8], index: 0, kind: input, shape index: {}]
  %s1 = inlined_call_operand.vmem [shape: f32[4,1,32], index: 1, kind: input, shape index: {}]
  %s2 = inlined_call_operand.vmem [shape: f32[8,32], index: 2, kind: input, shape index: {}]
  %s3 = inlined_call_operand.vmem [shape: f32[1,32], index: 3, kind: input, shape index: {}]
  %s4 = inlined_call_operand.vmem [shape: f32[2,32,192], index: 4, kind: input, shape index: {}]
  %s5 = inlined_call_operand.vmem [shape: f32[2,64,32], index: 5, kind: input, shape index: {}]
  %s6 = inlined_call_operand.vmem [shape: f32[2,1,32], index: 6, kind: input, shape index: {}]
  %s7 = inlined_call_operand.vmem [shape: f32[2,1,32], index: 7, kind: input, shape index: {}]
  %s8 = inlined_call_operand.vmem [shape: f32[2,1,32], index: 8, kind: input, shape index: {}]
  %s9 = inlined_call_operand.vmem [shape: f32[2,32,128], index: 9, kind: input, shape index: {}]
  %s10 = inlined_call_operand.vmem [shape: f32[2,1,128], index: 10, kind: input, shape index: {}]
  %s11 = inlined_call_operand.vmem [shape: f32[2,128,32], index: 11, kind: input, shape index: {}]
  %s12 = inlined_call_operand.vmem [shape: f32[2,1,32], index: 12, kind: input, shape index: {}]
  %s13 = inlined_call_operand.vmem [shape: f32[2,1,32], index: 13, kind: input, shape index: {}]
  %s14 = inlined_call_operand.vmem [shape: f32[2,1,32], index: 14, kind: input, shape index: {}]
  %s15 = inlined_call_operand.vmem [shape: f32[32,32], index: 15, kind: input, shape index: {}]
  %s16 = inlined_call_operand.vmem [shape: f32[1,32], index: 16, kind: input, shape index: {}]
  %s17 = inlined_call_operand.vmem [shape: f32[32,6], index: 17, kind: input, shape index: {}]
  %s18 = inlined_call_operand.vmem [shape: f32[1,6], index: 18, kind: input, shape index: {}]
  %s19 = inlined_call_operand.vmem [shape: f32[6,128], index: 19, kind: input, shape index: {}]
  %s20 = inlined_call_operand.vmem [shape: f32[4,128], index: 20, kind: input, shape index: {}]
  %s21 = inlined_call_operand.vmem [shape: f32[1,128], index: 21, kind: input, shape index: {}]
  %s22 = inlined_call_operand.hbm [shape: f32[4,1,128], index: 22, kind: output, shape index: {0}]
  %s23 = inlined_call_operand.hbm [shape: f32[4,1,32], index: 23, kind: output, shape index: {1}]
  %24 = xla_tuple %s22, %s23
  %s25 = sld [smem:[#allocation0]]
  $region129: #{dqn_updet_forward.1} parent=0
    _
  %s27 = ssub.s32 1, %s25
  %s28 = scalar_select 0, %s27, %s25
  $region1: #{dqn_updet_forward.1} parent=0
    #allocation2 [shape = 'u8[2048]{0}', space=vmem, size = 0x800, scoped, tag = 'output window, operand 0']
    #allocation3 [shape = 's32[2]{0}', space=sflag, size = 0x8, scoped, tag = 'scoped memory for dqn_updet_forward.1']
    #allocation4 [shape = 'u8[2048]{0}', space=vmem, size = 0x800, scoped, tag = 'output window, operand 1']
    #allocation5 [shape = 's32[2]{0}', space=sflag, size = 0x8, scoped, tag = 'scoped memory for dqn_updet_forward.1']
    %29 = vsyncpa [#allocation3], 0
    %s30 = scalar_lea.sflag [#allocation3], 1
    %31 = vsyncpa %s30, 0
    %32 = vsyncpa [#allocation5], 0
    %s33 = scalar_lea.sflag [#allocation5], 1
    %34 = vsyncpa %s33, 0
    loop: start=0, step=1, limit=4
    $region2: #{dqn_updet_forward.1} parent=1 // loop_pre_header
      _
    $region3: #{dqn_updet_forward.1} parent=1 // loop_header
      %s36 = sphi 0, %s40
      %p37 = scmp.ge.s32.totalorder %s36, 4
      %s46 = sphi 0, %s48
      %s49 = sphi 0, %s46
      %s50 = sphi 0, %s49
      %s66 = sphi 0, %s50
      %s72 = sphi 0, %s74
      %s75 = sphi 0, %s72
      %s76 = sphi 0, %s75
      %s92 = sphi 0, %s76
      %s96 = sphi 0, %s96
      %s98 = sphi 0, %s96
      %s99 = sphi 0, %s98
      %s113 = sphi 0, %s99
      %s117 = sphi 0, %s117
      %s119 = sphi 0, %s117
      %s120 = sphi 0, %s119
      %s134 = sphi 0, %s120
      %s138 = sphi 0, %s138
      %s140 = sphi 0, %s138
      %s141 = sphi 0, %s140
      %s155 = sphi 0, %s141
      %s159 = sphi 0, %s159
      %s161 = sphi 0, %s159
      %s162 = sphi 0, %s161
      %s176 = sphi 0, %s162
      %s180 = sphi 0, %s180
      %s182 = sphi 0, %s180
      %s183 = sphi 0, %s182
      %s197 = sphi 0, %s183
      %s201 = sphi 0, %s201
      %s203 = sphi 0, %s201
      %s204 = sphi 0, %s203
      %s218 = sphi 0, %s204
      %s222 = sphi 0, %s222
      %s224 = sphi 0, %s222
      %s225 = sphi 0, %s224
      %s239 = sphi 0, %s225
      %s243 = sphi 0, %s243
      %s245 = sphi 0, %s243
      %s246 = sphi 0, %s245
      %s260 = sphi 0, %s246
      %s264 = sphi 0, %s264
      %s266 = sphi 0, %s264
      %s267 = sphi 0, %s266
      %s281 = sphi 0, %s267
      %s285 = sphi 0, %s285
      %s287 = sphi 0, %s285
      %s288 = sphi 0, %s287
      %s302 = sphi 0, %s288
      %s306 = sphi 0, %s306
      %s308 = sphi 0, %s306
      %s309 = sphi 0, %s308
      %s323 = sphi 0, %s309
      %s327 = sphi 0, %s327
      %s329 = sphi 0, %s327
      %s330 = sphi 0, %s329
      %s344 = sphi 0, %s330
      %s348 = sphi 0, %s348
      %s350 = sphi 0, %s348
      %s351 = sphi 0, %s350
      %s365 = sphi 0, %s351
      %s369 = sphi 0, %s369
      %s371 = sphi 0, %s369
      %s372 = sphi 0, %s371
      %s386 = sphi 0, %s372
      %s390 = sphi 0, %s390
      %s392 = sphi 0, %s390
      %s393 = sphi 0, %s392
      %s407 = sphi 0, %s393
      %s411 = sphi 0, %s411
      %s413 = sphi 0, %s411
      %s414 = sphi 0, %s413
      %s428 = sphi 0, %s414
      %s432 = sphi 0, %s432
      %s434 = sphi 0, %s432
      %s435 = sphi 0, %s434
      %s449 = sphi 0, %s435
      %s453 = sphi 0, %s453
      %s455 = sphi 0, %s453
      %s456 = sphi 0, %s455
      %s470 = sphi 0, %s456
      %s474 = sphi 0, %s474
      %s476 = sphi 0, %s474
      %s477 = sphi 0, %s476
      %s491 = sphi 0, %s477
      %s495 = sphi 0, %s495
      %s497 = sphi 0, %s495
      %s498 = sphi 0, %s497
      %s512 = sphi 0, %s498
      %s518 = sphi 0, %s520
      %s521 = sphi 0, %s518
      %s522 = sphi 0, %s521
      %s538 = sphi 0, %s522
      %s544 = sphi 0, %s546
      %s547 = sphi 0, %s544
      %s548 = sphi 0, %s547
      %s564 = sphi 0, %s548
    $region4: #{dqn_updet_forward.1} parent=1 // loop_header_branch
      %39 = sbr.rel (%p37) target = $region8
    $region5: #{dqn_updet_forward.1} parent=1 // loop_body
      %s41 = ssub.s32 %s36, 1
      %s42 = ssub.s32 %s36, 2
      %s43 = sadd.s32 %s36, 1
      %s44 = ssub.s32 %s36, %s43
      %p45 = scmp.eq.s32.totalorder %s44, 0
      %s47 = sadd.s32 %s46, 1
      %s48 = scalar_select %p45, %s46, %s47
      %p51 = pneg %p45
      %p52 = scmp.eq.s32.totalorder %s36, 1
      %p53 = por %p51, %p52
      %p54 = scmp.ne.s32.totalorder %s46, %s49
      %p55 = scmp.eq.s32.totalorder %s36, 0
      %p56 = por %p54, %p55
      %p57 = scmp.ne.s32.totalorder %s46, %s49
      %p58 = scmp.eq.s32.totalorder %s41, 1
      %p59 = por %p57, %p58
      %p60 = scmp.ne.s32.totalorder %s49, %s50
      %p61 = scmp.eq.s32.totalorder %s41, 0
      %p62 = por %p60, %p61
      %p63 = scmp.ne.s32.totalorder %s49, %s50
      %p64 = scmp.eq.s32.totalorder %s42, 1
      %p65 = por %p63, %p64
      %p67 = scmp.ne.s32.totalorder %s50, %s66
      %p68 = scmp.eq.s32.totalorder %s42, 0
      %p69 = por %p67, %p68
      %s70 = ssub.s32 %s36, %s43
      %p71 = scmp.eq.s32.totalorder %s70, 0
      %s73 = sadd.s32 %s72, 1
      %s74 = scalar_select %p71, %s72, %s73
      %p77 = pneg %p71
      %p78 = scmp.eq.s32.totalorder %s36, 1
      %p79 = por %p77, %p78
      %p80 = scmp.ne.s32.totalorder %s72, %s75
      %p81 = scmp.eq.s32.totalorder %s36, 0
      %p82 = por %p80, %p81
      %p83 = scmp.ne.s32.totalorder %s72, %s75
      %p84 = scmp.eq.s32.totalorder %s41, 1
      %p85 = por %p83, %p84
      %p86 = scmp.ne.s32.totalorder %s75, %s76
      %p87 = scmp.eq.s32.totalorder %s41, 0
      %p88 = por %p86, %p87
      %p89 = scmp.ne.s32.totalorder %s75, %s76
      %p90 = scmp.eq.s32.totalorder %s42, 1
      %p91 = por %p89, %p90
      %p93 = scmp.ne.s32.totalorder %s76, %s92
      %p94 = scmp.eq.s32.totalorder %s42, 0
      %p95 = por %p93, %p94
      %s97 = sadd.s32 %s96, 1
      %p100 = scmp.eq.s32.totalorder %s36, 1
      %p101 = scmp.ne.s32.totalorder %s96, %s98
      %p102 = scmp.eq.s32.totalorder %s36, 0
      %p103 = por %p101, %p102
      %p104 = scmp.ne.s32.totalorder %s96, %s98
      %p105 = scmp.eq.s32.totalorder %s41, 1
      %p106 = por %p104, %p105
      %p107 = scmp.ne.s32.totalorder %s98, %s99
      %p108 = scmp.eq.s32.totalorder %s41, 0
      %p109 = por %p107, %p108
      %p110 = scmp.ne.s32.totalorder %s98, %s99
      %p111 = scmp.eq.s32.totalorder %s42, 1
      %p112 = por %p110, %p111
      %p114 = scmp.ne.s32.totalorder %s99, %s113
      %p115 = scmp.eq.s32.totalorder %s42, 0
      %p116 = por %p114, %p115
      %s118 = sadd.s32 %s117, 1
      %p121 = scmp.eq.s32.totalorder %s36, 1
      %p122 = scmp.ne.s32.totalorder %s117, %s119
      %p123 = scmp.eq.s32.totalorder %s36, 0
      %p124 = por %p122, %p123
      %p125 = scmp.ne.s32.totalorder %s117, %s119
      %p126 = scmp.eq.s32.totalorder %s41, 1
      %p127 = por %p125, %p126
      %p128 = scmp.ne.s32.totalorder %s119, %s120
      %p129 = scmp.eq.s32.totalorder %s41, 0
      %p130 = por %p128, %p129
      %p131 = scmp.ne.s32.totalorder %s119, %s120
      %p132 = scmp.eq.s32.totalorder %s42, 1
      %p133 = por %p131, %p132
      %p135 = scmp.ne.s32.totalorder %s120, %s134
      %p136 = scmp.eq.s32.totalorder %s42, 0
      %p137 = por %p135, %p136
      %s139 = sadd.s32 %s138, 1
      %p142 = scmp.eq.s32.totalorder %s36, 1
      %p143 = scmp.ne.s32.totalorder %s138, %s140
      %p144 = scmp.eq.s32.totalorder %s36, 0
      %p145 = por %p143, %p144
      %p146 = scmp.ne.s32.totalorder %s138, %s140
      %p147 = scmp.eq.s32.totalorder %s41, 1
      %p148 = por %p146, %p147
      %p149 = scmp.ne.s32.totalorder %s140, %s141
      %p150 = scmp.eq.s32.totalorder %s41, 0
      %p151 = por %p149, %p150
      %p152 = scmp.ne.s32.totalorder %s140, %s141
      %p153 = scmp.eq.s32.totalorder %s42, 1
      %p154 = por %p152, %p153
      %p156 = scmp.ne.s32.totalorder %s141, %s155
      %p157 = scmp.eq.s32.totalorder %s42, 0
      %p158 = por %p156, %p157
      %s160 = sadd.s32 %s159, 1
      %p163 = scmp.eq.s32.totalorder %s36, 1
      %p164 = scmp.ne.s32.totalorder %s159, %s161
      %p165 = scmp.eq.s32.totalorder %s36, 0
      %p166 = por %p164, %p165
      %p167 = scmp.ne.s32.totalorder %s159, %s161
      %p168 = scmp.eq.s32.totalorder %s41, 1
      %p169 = por %p167, %p168
      %p170 = scmp.ne.s32.totalorder %s161, %s162
      %p171 = scmp.eq.s32.totalorder %s41, 0
      %p172 = por %p170, %p171
      %p173 = scmp.ne.s32.totalorder %s161, %s162
      %p174 = scmp.eq.s32.totalorder %s42, 1
      %p175 = por %p173, %p174
      %p177 = scmp.ne.s32.totalorder %s162, %s176
      %p178 = scmp.eq.s32.totalorder %s42, 0
      %p179 = por %p177, %p178
      %s181 = sadd.s32 %s180, 1
      %p184 = scmp.eq.s32.totalorder %s36, 1
      %p185 = scmp.ne.s32.totalorder %s180, %s182
      %p186 = scmp.eq.s32.totalorder %s36, 0
      %p187 = por %p185, %p186
      %p188 = scmp.ne.s32.totalorder %s180, %s182
      %p189 = scmp.eq.s32.totalorder %s41, 1
      %p190 = por %p188, %p189
      %p191 = scmp.ne.s32.totalorder %s182, %s183
      %p192 = scmp.eq.s32.totalorder %s41, 0
      %p193 = por %p191, %p192
      %p194 = scmp.ne.s32.totalorder %s182, %s183
      %p195 = scmp.eq.s32.totalorder %s42, 1
      %p196 = por %p194, %p195
      %p198 = scmp.ne.s32.totalorder %s183, %s197
      %p199 = scmp.eq.s32.totalorder %s42, 0
      %p200 = por %p198, %p199
      %s202 = sadd.s32 %s201, 1
      %p205 = scmp.eq.s32.totalorder %s36, 1
      %p206 = scmp.ne.s32.totalorder %s201, %s203
      %p207 = scmp.eq.s32.totalorder %s36, 0
      %p208 = por %p206, %p207
      %p209 = scmp.ne.s32.totalorder %s201, %s203
      %p210 = scmp.eq.s32.totalorder %s41, 1
      %p211 = por %p209, %p210
      %p212 = scmp.ne.s32.totalorder %s203, %s204
      %p213 = scmp.eq.s32.totalorder %s41, 0
      %p214 = por %p212, %p213
      %p215 = scmp.ne.s32.totalorder %s203, %s204
      %p216 = scmp.eq.s32.totalorder %s42, 1
      %p217 = por %p215, %p216
      %p219 = scmp.ne.s32.totalorder %s204, %s218
      %p220 = scmp.eq.s32.totalorder %s42, 0
      %p221 = por %p219, %p220
      %s223 = sadd.s32 %s222, 1
      %p226 = scmp.eq.s32.totalorder %s36, 1
      %p227 = scmp.ne.s32.totalorder %s222, %s224
      %p228 = scmp.eq.s32.totalorder %s36, 0
      %p229 = por %p227, %p228
      %p230 = scmp.ne.s32.totalorder %s222, %s224
      %p231 = scmp.eq.s32.totalorder %s41, 1
      %p232 = por %p230, %p231
      %p233 = scmp.ne.s32.totalorder %s224, %s225
      %p234 = scmp.eq.s32.totalorder %s41, 0
      %p235 = por %p233, %p234
      %p236 = scmp.ne.s32.totalorder %s224, %s225
      %p237 = scmp.eq.s32.totalorder %s42, 1
      %p238 = por %p236, %p237
      %p240 = scmp.ne.s32.totalorder %s225, %s239
      %p241 = scmp.eq.s32.totalorder %s42, 0
      %p242 = por %p240, %p241
      %s244 = sadd.s32 %s243, 1
      %p247 = scmp.eq.s32.totalorder %s36, 1
      %p248 = scmp.ne.s32.totalorder %s243, %s245
      %p249 = scmp.eq.s32.totalorder %s36, 0
      %p250 = por %p248, %p249
      %p251 = scmp.ne.s32.totalorder %s243, %s245
      %p252 = scmp.eq.s32.totalorder %s41, 1
      %p253 = por %p251, %p252
      %p254 = scmp.ne.s32.totalorder %s245, %s246
      %p255 = scmp.eq.s32.totalorder %s41, 0
      %p256 = por %p254, %p255
      %p257 = scmp.ne.s32.totalorder %s245, %s246
      %p258 = scmp.eq.s32.totalorder %s42, 1
      %p259 = por %p257, %p258
      %p261 = scmp.ne.s32.totalorder %s246, %s260
      %p262 = scmp.eq.s32.totalorder %s42, 0
      %p263 = por %p261, %p262
      %s265 = sadd.s32 %s264, 1
      %p268 = scmp.eq.s32.totalorder %s36, 1
      %p269 = scmp.ne.s32.totalorder %s264, %s266
      %p270 = scmp.eq.s32.totalorder %s36, 0
      %p271 = por %p269, %p270
      %p272 = scmp.ne.s32.totalorder %s264, %s266
      %p273 = scmp.eq.s32.totalorder %s41, 1
      %p274 = por %p272, %p273
      %p275 = scmp.ne.s32.totalorder %s266, %s267
      %p276 = scmp.eq.s32.totalorder %s41, 0
      %p277 = por %p275, %p276
      %p278 = scmp.ne.s32.totalorder %s266, %s267
      %p279 = scmp.eq.s32.totalorder %s42, 1
      %p280 = por %p278, %p279
      %p282 = scmp.ne.s32.totalorder %s267, %s281
      %p283 = scmp.eq.s32.totalorder %s42, 0
      %p284 = por %p282, %p283
      %s286 = sadd.s32 %s285, 1
      %p289 = scmp.eq.s32.totalorder %s36, 1
      %p290 = scmp.ne.s32.totalorder %s285, %s287
      %p291 = scmp.eq.s32.totalorder %s36, 0
      %p292 = por %p290, %p291
      %p293 = scmp.ne.s32.totalorder %s285, %s287
      %p294 = scmp.eq.s32.totalorder %s41, 1
      %p295 = por %p293, %p294
      %p296 = scmp.ne.s32.totalorder %s287, %s288
      %p297 = scmp.eq.s32.totalorder %s41, 0
      %p298 = por %p296, %p297
      %p299 = scmp.ne.s32.totalorder %s287, %s288
      %p300 = scmp.eq.s32.totalorder %s42, 1
      %p301 = por %p299, %p300
      %p303 = scmp.ne.s32.totalorder %s288, %s302
      %p304 = scmp.eq.s32.totalorder %s42, 0
      %p305 = por %p303, %p304
      %s307 = sadd.s32 %s306, 1
      %p310 = scmp.eq.s32.totalorder %s36, 1
      %p311 = scmp.ne.s32.totalorder %s306, %s308
      %p312 = scmp.eq.s32.totalorder %s36, 0
      %p313 = por %p311, %p312
      %p314 = scmp.ne.s32.totalorder %s306, %s308
      %p315 = scmp.eq.s32.totalorder %s41, 1
      %p316 = por %p314, %p315
      %p317 = scmp.ne.s32.totalorder %s308, %s309
      %p318 = scmp.eq.s32.totalorder %s41, 0
      %p319 = por %p317, %p318
      %p320 = scmp.ne.s32.totalorder %s308, %s309
      %p321 = scmp.eq.s32.totalorder %s42, 1
      %p322 = por %p320, %p321
      %p324 = scmp.ne.s32.totalorder %s309, %s323
      %p325 = scmp.eq.s32.totalorder %s42, 0
      %p326 = por %p324, %p325
      %s328 = sadd.s32 %s327, 1
      %p331 = scmp.eq.s32.totalorder %s36, 1
      %p332 = scmp.ne.s32.totalorder %s327, %s329
      %p333 = scmp.eq.s32.totalorder %s36, 0
      %p334 = por %p332, %p333
      %p335 = scmp.ne.s32.totalorder %s327, %s329
      %p336 = scmp.eq.s32.totalorder %s41, 1
      %p337 = por %p335, %p336
      %p338 = scmp.ne.s32.totalorder %s329, %s330
      %p339 = scmp.eq.s32.totalorder %s41, 0
      %p340 = por %p338, %p339
      %p341 = scmp.ne.s32.totalorder %s329, %s330
      %p342 = scmp.eq.s32.totalorder %s42, 1
      %p343 = por %p341, %p342
      %p345 = scmp.ne.s32.totalorder %s330, %s344
      %p346 = scmp.eq.s32.totalorder %s42, 0
      %p347 = por %p345, %p346
      %s349 = sadd.s32 %s348, 1
      %p352 = scmp.eq.s32.totalorder %s36, 1
      %p353 = scmp.ne.s32.totalorder %s348, %s350
      %p354 = scmp.eq.s32.totalorder %s36, 0
      %p355 = por %p353, %p354
      %p356 = scmp.ne.s32.totalorder %s348, %s350
      %p357 = scmp.eq.s32.totalorder %s41, 1
      %p358 = por %p356, %p357
      %p359 = scmp.ne.s32.totalorder %s350, %s351
      %p360 = scmp.eq.s32.totalorder %s41, 0
      %p361 = por %p359, %p360
      %p362 = scmp.ne.s32.totalorder %s350, %s351
      %p363 = scmp.eq.s32.totalorder %s42, 1
      %p364 = por %p362, %p363
      %p366 = scmp.ne.s32.totalorder %s351, %s365
      %p367 = scmp.eq.s32.totalorder %s42, 0
      %p368 = por %p366, %p367
      %s370 = sadd.s32 %s369, 1
      %p373 = scmp.eq.s32.totalorder %s36, 1
      %p374 = scmp.ne.s32.totalorder %s369, %s371
      %p375 = scmp.eq.s32.totalorder %s36, 0
      %p376 = por %p374, %p375
      %p377 = scmp.ne.s32.totalorder %s369, %s371
      %p378 = scmp.eq.s32.totalorder %s41, 1
      %p379 = por %p377, %p378
      %p380 = scmp.ne.s32.totalorder %s371, %s372
      %p381 = scmp.eq.s32.totalorder %s41, 0
      %p382 = por %p380, %p381
      %p383 = scmp.ne.s32.totalorder %s371, %s372
      %p384 = scmp.eq.s32.totalorder %s42, 1
      %p385 = por %p383, %p384
      %p387 = scmp.ne.s32.totalorder %s372, %s386
      %p388 = scmp.eq.s32.totalorder %s42, 0
      %p389 = por %p387, %p388
      %s391 = sadd.s32 %s390, 1
      %p394 = scmp.eq.s32.totalorder %s36, 1
      %p395 = scmp.ne.s32.totalorder %s390, %s392
      %p396 = scmp.eq.s32.totalorder %s36, 0
      %p397 = por %p395, %p396
      %p398 = scmp.ne.s32.totalorder %s390, %s392
      %p399 = scmp.eq.s32.totalorder %s41, 1
      %p400 = por %p398, %p399
      %p401 = scmp.ne.s32.totalorder %s392, %s393
      %p402 = scmp.eq.s32.totalorder %s41, 0
      %p403 = por %p401, %p402
      %p404 = scmp.ne.s32.totalorder %s392, %s393
      %p405 = scmp.eq.s32.totalorder %s42, 1
      %p406 = por %p404, %p405
      %p408 = scmp.ne.s32.totalorder %s393, %s407
      %p409 = scmp.eq.s32.totalorder %s42, 0
      %p410 = por %p408, %p409
      %s412 = sadd.s32 %s411, 1
      %p415 = scmp.eq.s32.totalorder %s36, 1
      %p416 = scmp.ne.s32.totalorder %s411, %s413
      %p417 = scmp.eq.s32.totalorder %s36, 0
      %p418 = por %p416, %p417
      %p419 = scmp.ne.s32.totalorder %s411, %s413
      %p420 = scmp.eq.s32.totalorder %s41, 1
      %p421 = por %p419, %p420
      %p422 = scmp.ne.s32.totalorder %s413, %s414
      %p423 = scmp.eq.s32.totalorder %s41, 0
      %p424 = por %p422, %p423
      %p425 = scmp.ne.s32.totalorder %s413, %s414
      %p426 = scmp.eq.s32.totalorder %s42, 1
      %p427 = por %p425, %p426
      %p429 = scmp.ne.s32.totalorder %s414, %s428
      %p430 = scmp.eq.s32.totalorder %s42, 0
      %p431 = por %p429, %p430
      %s433 = sadd.s32 %s432, 1
      %p436 = scmp.eq.s32.totalorder %s36, 1
      %p437 = scmp.ne.s32.totalorder %s432, %s434
      %p438 = scmp.eq.s32.totalorder %s36, 0
      %p439 = por %p437, %p438
      %p440 = scmp.ne.s32.totalorder %s432, %s434
      %p441 = scmp.eq.s32.totalorder %s41, 1
      %p442 = por %p440, %p441
      %p443 = scmp.ne.s32.totalorder %s434, %s435
      %p444 = scmp.eq.s32.totalorder %s41, 0
      %p445 = por %p443, %p444
      %p446 = scmp.ne.s32.totalorder %s434, %s435
      %p447 = scmp.eq.s32.totalorder %s42, 1
      %p448 = por %p446, %p447
      %p450 = scmp.ne.s32.totalorder %s435, %s449
      %p451 = scmp.eq.s32.totalorder %s42, 0
      %p452 = por %p450, %p451
      %s454 = sadd.s32 %s453, 1
      %p457 = scmp.eq.s32.totalorder %s36, 1
      %p458 = scmp.ne.s32.totalorder %s453, %s455
      %p459 = scmp.eq.s32.totalorder %s36, 0
      %p460 = por %p458, %p459
      %p461 = scmp.ne.s32.totalorder %s453, %s455
      %p462 = scmp.eq.s32.totalorder %s41, 1
      %p463 = por %p461, %p462
      %p464 = scmp.ne.s32.totalorder %s455, %s456
      %p465 = scmp.eq.s32.totalorder %s41, 0
      %p466 = por %p464, %p465
      %p467 = scmp.ne.s32.totalorder %s455, %s456
      %p468 = scmp.eq.s32.totalorder %s42, 1
      %p469 = por %p467, %p468
      %p471 = scmp.ne.s32.totalorder %s456, %s470
      %p472 = scmp.eq.s32.totalorder %s42, 0
      %p473 = por %p471, %p472
      %s475 = sadd.s32 %s474, 1
      %p478 = scmp.eq.s32.totalorder %s36, 1
      %p479 = scmp.ne.s32.totalorder %s474, %s476
      %p480 = scmp.eq.s32.totalorder %s36, 0
      %p481 = por %p479, %p480
      %p482 = scmp.ne.s32.totalorder %s474, %s476
      %p483 = scmp.eq.s32.totalorder %s41, 1
      %p484 = por %p482, %p483
      %p485 = scmp.ne.s32.totalorder %s476, %s477
      %p486 = scmp.eq.s32.totalorder %s41, 0
      %p487 = por %p485, %p486
      %p488 = scmp.ne.s32.totalorder %s476, %s477
      %p489 = scmp.eq.s32.totalorder %s42, 1
      %p490 = por %p488, %p489
      %p492 = scmp.ne.s32.totalorder %s477, %s491
      %p493 = scmp.eq.s32.totalorder %s42, 0
      %p494 = por %p492, %p493
      %s496 = sadd.s32 %s495, 1
      %p499 = scmp.eq.s32.totalorder %s36, 1
      %p500 = scmp.ne.s32.totalorder %s495, %s497
      %p501 = scmp.eq.s32.totalorder %s36, 0
      %p502 = por %p500, %p501
      %p503 = scmp.ne.s32.totalorder %s495, %s497
      %p504 = scmp.eq.s32.totalorder %s41, 1
      %p505 = por %p503, %p504
      %p506 = scmp.ne.s32.totalorder %s497, %s498
      %p507 = scmp.eq.s32.totalorder %s41, 0
      %p508 = por %p506, %p507
      %p509 = scmp.ne.s32.totalorder %s497, %s498
      %p510 = scmp.eq.s32.totalorder %s42, 1
      %p511 = por %p509, %p510
      %p513 = scmp.ne.s32.totalorder %s498, %s512
      %p514 = scmp.eq.s32.totalorder %s42, 0
      %p515 = por %p513, %p514
      %s516 = ssub.s32 %s36, %s43
      %p517 = scmp.eq.s32.totalorder %s516, 0
      %s519 = sadd.s32 %s518, 1
      %s520 = scalar_select %p517, %s518, %s519
      %p523 = pneg %p517
      %p524 = scmp.eq.s32.totalorder %s36, 1
      %p525 = por %p523, %p524
      %p526 = scmp.ne.s32.totalorder %s518, %s521
      %p527 = scmp.eq.s32.totalorder %s36, 0
      %p528 = por %p526, %p527
      %p529 = scmp.ne.s32.totalorder %s518, %s521
      %p530 = scmp.eq.s32.totalorder %s41, 1
      %p531 = por %p529, %p530
      %p532 = scmp.ne.s32.totalorder %s521, %s522
      %p533 = scmp.eq.s32.totalorder %s41, 0
      %p534 = por %p532, %p533
      %p535 = scmp.ne.s32.totalorder %s521, %s522
      %p536 = scmp.eq.s32.totalorder %s42, 1
      %p537 = por %p535, %p536
      %p539 = scmp.ne.s32.totalorder %s522, %s538
      %p540 = scmp.eq.s32.totalorder %s42, 0
      %p541 = por %p539, %p540
      %s542 = ssub.s32 %s36, %s43
      %p543 = scmp.eq.s32.totalorder %s542, 0
      %s545 = sadd.s32 %s544, 1
      %s546 = scalar_select %p543, %s544, %s545
      %p549 = pneg %p543
      %p550 = scmp.eq.s32.totalorder %s36, 1
      %p551 = por %p549, %p550
      %p552 = scmp.ne.s32.totalorder %s544, %s547
      %p553 = scmp.eq.s32.totalorder %s36, 0
      %p554 = por %p552, %p553
      %p555 = scmp.ne.s32.totalorder %s544, %s547
      %p556 = scmp.eq.s32.totalorder %s41, 1
      %p557 = por %p555, %p556
      %p558 = scmp.ne.s32.totalorder %s547, %s548
      %p559 = scmp.eq.s32.totalorder %s41, 0
      %p560 = por %p558, %p559
      %p561 = scmp.ne.s32.totalorder %s547, %s548
      %p562 = scmp.eq.s32.totalorder %s42, 1
      %p563 = por %p561, %p562
      %p565 = scmp.ne.s32.totalorder %s548, %s564
      %p566 = scmp.eq.s32.totalorder %s42, 0
      %p567 = por %p565, %p566
      %p568 = scmp.le.s32.totalorder 1, %s36
      %p569 = scmp.lt.s32.totalorder %s36, 3
      %p570 = pnand %p568, %p569
      %p571 = pneg %p570
      // Predicated region
      $region9: #{dqn_updet_forward.1} parent=5 // pred_check
        _
      $region10: #{dqn_updet_forward.1} parent=5 // pred_check_branch
        %573 = sbr.rel (%p570) target = $region12
      $region11: #{dqn_updet_forward.1} parent=5 // pred_region
        %s574 = ssub.s32 %s36, 1
        // Predicated region
        $region13: #{dqn_updet_forward.1} parent=11 // pred_check
          %p575 = pneg %p109
        $region14: #{dqn_updet_forward.1} parent=11 // pred_check_branch
          %577 = sbr.rel (%p575) target = $region16
        $region15: #{dqn_updet_forward.1} parent=11 // pred_region
          _
        $region16: #{dqn_updet_forward.1} parent=11 // pred_fallthru
          _
        // Predicated region
        $region17: #{dqn_updet_forward.1} parent=11 // pred_check
          %p578 = pneg %p130
        $region18: #{dqn_updet_forward.1} parent=11 // pred_check_branch
          %580 = sbr.rel (%p578) target = $region20
        $region19: #{dqn_updet_forward.1} parent=11 // pred_region
          _
        $region20: #{dqn_updet_forward.1} parent=11 // pred_fallthru
          _
        // Predicated region
        $region21: #{dqn_updet_forward.1} parent=11 // pred_check
          %p581 = pneg %p151
        $region22: #{dqn_updet_forward.1} parent=11 // pred_check_branch
          %583 = sbr.rel (%p581) target = $region24
        $region23: #{dqn_updet_forward.1} parent=11 // pred_region
          _
        $region24: #{dqn_updet_forward.1} parent=11 // pred_fallthru
          _
        // Predicated region
        $region25: #{dqn_updet_forward.1} parent=11 // pred_check
          %p584 = pneg %p172
        $region26: #{dqn_updet_forward.1} parent=11 // pred_check_branch
          %586 = sbr.rel (%p584) target = $region28
        $region27: #{dqn_updet_forward.1} parent=11 // pred_region
          _
        $region28: #{dqn_updet_forward.1} parent=11 // pred_fallthru
          _
        // Predicated region
        $region29: #{dqn_updet_forward.1} parent=11 // pred_check
          %p587 = pneg %p193
        $region30: #{dqn_updet_forward.1} parent=11 // pred_check_branch
          %589 = sbr.rel (%p587) target = $region32
        $region31: #{dqn_updet_forward.1} parent=11 // pred_region
          _
        $region32: #{dqn_updet_forward.1} parent=11 // pred_fallthru
          _
        // Predicated region
        $region33: #{dqn_updet_forward.1} parent=11 // pred_check
          %p590 = pneg %p214
        $region34: #{dqn_updet_forward.1} parent=11 // pred_check_branch
          %592 = sbr.rel (%p590) target = $region36
        $region35: #{dqn_updet_forward.1} parent=11 // pred_region
          _
        $region36: #{dqn_updet_forward.1} parent=11 // pred_fallthru
          _
        // Predicated region
        $region37: #{dqn_updet_forward.1} parent=11 // pred_check
          %p593 = pneg %p235
        $region38: #{dqn_updet_forward.1} parent=11 // pred_check_branch
          %595 = sbr.rel (%p593) target = $region40
        $region39: #{dqn_updet_forward.1} parent=11 // pred_region
          _
        $region40: #{dqn_updet_forward.1} parent=11 // pred_fallthru
          _
        // Predicated region
        $region41: #{dqn_updet_forward.1} parent=11 // pred_check
          %p596 = pneg %p256
        $region42: #{dqn_updet_forward.1} parent=11 // pred_check_branch
          %598 = sbr.rel (%p596) target = $region44
        $region43: #{dqn_updet_forward.1} parent=11 // pred_region
          _
        $region44: #{dqn_updet_forward.1} parent=11 // pred_fallthru
          _
        // Predicated region
        $region45: #{dqn_updet_forward.1} parent=11 // pred_check
          %p599 = pneg %p277
        $region46: #{dqn_updet_forward.1} parent=11 // pred_check_branch
          %601 = sbr.rel (%p599) target = $region48
        $region47: #{dqn_updet_forward.1} parent=11 // pred_region
          _
        $region48: #{dqn_updet_forward.1} parent=11 // pred_fallthru
          _
        // Predicated region
        $region49: #{dqn_updet_forward.1} parent=11 // pred_check
          %p602 = pneg %p298
        $region50: #{dqn_updet_forward.1} parent=11 // pred_check_branch
          %604 = sbr.rel (%p602) target = $region52
        $region51: #{dqn_updet_forward.1} parent=11 // pred_region
          _
        $region52: #{dqn_updet_forward.1} parent=11 // pred_fallthru
          _
        // Predicated region
        $region53: #{dqn_updet_forward.1} parent=11 // pred_check
          %p605 = pneg %p319
        $region54: #{dqn_updet_forward.1} parent=11 // pred_check_branch
          %607 = sbr.rel (%p605) target = $region56
        $region55: #{dqn_updet_forward.1} parent=11 // pred_region
          _
        $region56: #{dqn_updet_forward.1} parent=11 // pred_fallthru
          _
        // Predicated region
        $region57: #{dqn_updet_forward.1} parent=11 // pred_check
          %p608 = pneg %p340
        $region58: #{dqn_updet_forward.1} parent=11 // pred_check_branch
          %610 = sbr.rel (%p608) target = $region60
        $region59: #{dqn_updet_forward.1} parent=11 // pred_region
          _
        $region60: #{dqn_updet_forward.1} parent=11 // pred_fallthru
          _
        // Predicated region
        $region61: #{dqn_updet_forward.1} parent=11 // pred_check
          %p611 = pneg %p361
        $region62: #{dqn_updet_forward.1} parent=11 // pred_check_branch
          %613 = sbr.rel (%p611) target = $region64
        $region63: #{dqn_updet_forward.1} parent=11 // pred_region
          _
        $region64: #{dqn_updet_forward.1} parent=11 // pred_fallthru
          _
        // Predicated region
        $region65: #{dqn_updet_forward.1} parent=11 // pred_check
          %p614 = pneg %p382
        $region66: #{dqn_updet_forward.1} parent=11 // pred_check_branch
          %616 = sbr.rel (%p614) target = $region68
        $region67: #{dqn_updet_forward.1} parent=11 // pred_region
          _
        $region68: #{dqn_updet_forward.1} parent=11 // pred_fallthru
          _
        // Predicated region
        $region69: #{dqn_updet_forward.1} parent=11 // pred_check
          %p617 = pneg %p403
        $region70: #{dqn_updet_forward.1} parent=11 // pred_check_branch
          %619 = sbr.rel (%p617) target = $region72
        $region71: #{dqn_updet_forward.1} parent=11 // pred_region
          _
        $region72: #{dqn_updet_forward.1} parent=11 // pred_fallthru
          _
        // Predicated region
        $region73: #{dqn_updet_forward.1} parent=11 // pred_check
          %p620 = pneg %p424
        $region74: #{dqn_updet_forward.1} parent=11 // pred_check_branch
          %622 = sbr.rel (%p620) target = $region76
        $region75: #{dqn_updet_forward.1} parent=11 // pred_region
          _
        $region76: #{dqn_updet_forward.1} parent=11 // pred_fallthru
          _
        // Predicated region
        $region77: #{dqn_updet_forward.1} parent=11 // pred_check
          %p623 = pneg %p445
        $region78: #{dqn_updet_forward.1} parent=11 // pred_check_branch
          %625 = sbr.rel (%p623) target = $region80
        $region79: #{dqn_updet_forward.1} parent=11 // pred_region
          _
        $region80: #{dqn_updet_forward.1} parent=11 // pred_fallthru
          _
        // Predicated region
        $region81: #{dqn_updet_forward.1} parent=11 // pred_check
          %p626 = pneg %p466
        $region82: #{dqn_updet_forward.1} parent=11 // pred_check_branch
          %628 = sbr.rel (%p626) target = $region84
        $region83: #{dqn_updet_forward.1} parent=11 // pred_region
          _
        $region84: #{dqn_updet_forward.1} parent=11 // pred_fallthru
          _
        // Predicated region
        $region85: #{dqn_updet_forward.1} parent=11 // pred_check
          %p629 = pneg %p487
        $region86: #{dqn_updet_forward.1} parent=11 // pred_check_branch
          %631 = sbr.rel (%p629) target = $region88
        $region87: #{dqn_updet_forward.1} parent=11 // pred_region
          _
        $region88: #{dqn_updet_forward.1} parent=11 // pred_fallthru
          _
        // Predicated region
        $region89: #{dqn_updet_forward.1} parent=11 // pred_check
          %p632 = pneg %p508
        $region90: #{dqn_updet_forward.1} parent=11 // pred_check_branch
          %634 = sbr.rel (%p632) target = $region92
        $region91: #{dqn_updet_forward.1} parent=11 // pred_region
          _
        $region92: #{dqn_updet_forward.1} parent=11 // pred_fallthru
          _
      $region12: #{dqn_updet_forward.1} parent=5 // pred_fallthru
        _
      %p635 = scmp.lt.s32.totalorder %s36, 2
      // Predicated region
      $region93: #{dqn_updet_forward.1} parent=5 // pred_check
        %p636 = pneg %p635
      $region94: #{dqn_updet_forward.1} parent=5 // pred_check_branch
        %638 = sbr.rel (%p636) target = $region96
      $region95: #{dqn_updet_forward.1} parent=5 // pred_region
        // Predicated region
        $region97: #{dqn_updet_forward.1} parent=95 // pred_check
          %p639 = pneg %p56
        $region98: #{dqn_updet_forward.1} parent=95 // pred_check_branch
          %641 = sbr.rel (%p639) target = $region100
        $region99: #{dqn_updet_forward.1} parent=95 // pred_region
          %s642 = smul.u32 2, %s36
          %p643 = scmp.lt.s32.totalorder %s642, 3
          %s644 = scalar_select %p643, %s642, 3
          %s645 = smul.addr %s644, 8
          %s646 = scalar_lea.vmem %s0, %s645
          %s647 = smul.u32 2, %s36
        $region100: #{dqn_updet_forward.1} parent=95 // pred_fallthru
          _
        // Predicated region
        $region101: #{dqn_updet_forward.1} parent=95 // pred_check
          %p648 = pneg %p82
        $region102: #{dqn_updet_forward.1} parent=95 // pred_check_branch
          %650 = sbr.rel (%p648) target = $region104
        $region103: #{dqn_updet_forward.1} parent=95 // pred_region
          %s651 = smul.u32 2, %s36
          %p652 = scmp.lt.s32.totalorder %s651, 3
          %s653 = scalar_select %p652, %s651, 3
          %s654 = scalar_lea.vmem %s1, %s653
          %s655 = smul.u32 2, %s36
        $region104: #{dqn_updet_forward.1} parent=95 // pred_fallthru
          _
      $region96: #{dqn_updet_forward.1} parent=5 // pred_fallthru
        _
      %p656 = scmp.le.s32.totalorder 1, %s36
      %p657 = scmp.lt.s32.totalorder %s36, 3
      %p658 = pnand %p656, %p657
      %p659 = pneg %p658
      // Predicated region
      $region105: #{dqn_updet_forward.1} parent=5 // pred_check
        _
      $region106: #{dqn_updet_forward.1} parent=5 // pred_check_branch
        %661 = sbr.rel (%p658) target = $region108
      $region107: #{dqn_updet_forward.1} parent=5 // pred_region
        %s662 = ssub.s32 %s36, 1
        %s663 = smul.u32 2, %s41
        %p664 = scmp.lt.s32.totalorder %s663, 3
        %s665 = scalar_select %p664, %s663, 3
        %s666 = smul.addr %s665, 8
        %s667 = scalar_lea.vmem %s0, %s666
        %p668 = pneg %p62
        %p669 = pneg %p59
        %s670 = smul.u32 2, %s41
        %p671 = scmp.lt.s32.totalorder %s670, 3
        %s672 = scalar_select %p671, %s670, 3
        %s673 = scalar_lea.vmem %s1, %s672
        %p674 = pneg %p88
        %p675 = pneg %p85
        %p676 = pneg %p109
        %p677 = pneg %p106
        %p678 = pneg %p130
        %p679 = pneg %p127
        %p680 = pneg %p151
        %p681 = pneg %p148
        %p682 = pneg %p172
        %p683 = pneg %p169
        %p684 = pneg %p193
        %p685 = pneg %p190
        %p686 = pneg %p214
        %p687 = pneg %p211
        %p688 = pneg %p235
        %p689 = pneg %p232
        %p690 = pneg %p256
        %p691 = pneg %p253
        %p692 = pneg %p277
        %p693 = pneg %p274
        %p694 = pneg %p298
        %p695 = pneg %p295
        %p696 = pneg %p319
        %p697 = pneg %p316
        %p698 = pneg %p340
        %p699 = pneg %p337
        %p700 = pneg %p361
        %p701 = pneg %p358
        %p702 = pneg %p382
        %p703 = pneg %p379
        %p704 = pneg %p403
        %p705 = pneg %p400
        %p706 = pneg %p424
        %p707 = pneg %p421
        %p708 = pneg %p445
        %p709 = pneg %p442
        %p710 = pneg %p466
        %p711 = pneg %p463
        %p712 = pneg %p487
        %p713 = pneg %p484
        %p714 = pneg %p508
        %p715 = pneg %p505
        %p716 = pneg %p534
        %p717 = pneg %p531
        %s718 = sand.u32 %s521, 1
        %s719 = scalar_lea.sflag [#allocation3], %s718
        %s720 = sand.u32 %s521, 1
        %s721 = smul.addr %s720, 2
        %s722 = scalar_lea.vmem [#allocation2], %s721
        %p723 = pneg %p560
        %p724 = pneg %p557
        %s725 = sand.u32 %s547, 1
        %s726 = scalar_lea.sflag [#allocation5], %s725
        %s727 = sand.u32 %s547, 1
        %s728 = smul.addr %s727, 2
        %s729 = scalar_lea.vmem [#allocation4], %s728
        %s730 = smul.u32 2, %s41
        %p731 = scmp.lt.s32.totalorder %s730, 3
        %s732 = scalar_select %p731, %s730, 3
        %s733 = smul.addr %s732, 8
        %s734 = scalar_lea.vmem %s0, %s733
        %s735 = smul.u32 2, %s41
        %s736 = smul.u32 2, %s41
        %p737 = scmp.lt.s32.totalorder %s736, 3
        %s738 = scalar_select %p737, %s736, 3
        %s739 = scalar_lea.vmem %s1, %s738
        %s740 = smul.u32 2, %s41
        %s741 = smul.u32 2, %s41
        %s742 = smul.u32 2, %s41
        %v743 = vld [vmem:[%s734] sm:$0x7f]
        %v744 = vld [vmem:[%s734 + $0x8] sm:$0x7f]
        %v747 = vcombine.high %v743, %v743
        %v749 = vunpack.c.l.s4 1966171168
        %v750 = vunpack.c.0.s8 %v749
        %v751 = vlaneseq
        %v752 = vshrl.u32 %v751, 7
        %v753 = vsub.s32 %v750, %v752
        %v754 = vrot.slane %v743, %v753
        %v756 = vunpack.c.l.s4 1966171168
        %v757 = vunpack.c.0.s8 %v756
        %v758 = vlaneseq
        %v759 = vshrl.u32 %v758, 7
        %v760 = vsub.s32 %v757, %v759
        %v761 = vrot.slane %v747, %v760
        %v762 = vcombine.high %v754, %v754
        %v763 = vcombine.high %v761, %v761
        %v765 = vunpack.c.l.s4 1966171168
        %v766 = vunpack.c.0.s8 %v765
        %v767 = vlaneseq
        %v768 = vshrl.u32 %v767, 7
        %v769 = vsub.s32 %v766, %v768
        %v770 = vrot.slane %v754, %v769
        %v772 = vunpack.c.l.s4 1966171168
        %v773 = vunpack.c.0.s8 %v772
        %v774 = vlaneseq
        %v775 = vshrl.u32 %v774, 7
        %v776 = vsub.s32 %v773, %v775
        %v777 = vrot.slane %v761, %v776
        %v779 = vunpack.c.l.s4 1966171168
        %v780 = vunpack.c.0.s8 %v779
        %v781 = vlaneseq
        %v782 = vshrl.u32 %v781, 7
        %v783 = vsub.s32 %v780, %v782
        %v784 = vrot.slane %v762, %v783
        %v786 = vunpack.c.l.s4 1966171168
        %v787 = vunpack.c.0.s8 %v786
        %v788 = vlaneseq
        %v789 = vshrl.u32 %v788, 7
        %v790 = vsub.s32 %v787, %v789
        %v791 = vrot.slane %v763, %v790
        %v792 = vcombine.high %v770, %v770
        %v793 = vcombine.high %v777, %v777
        %v794 = vcombine.high %v784, %v784
        %v795 = vcombine.high %v744, %v744
        %v797 = vunpack.c.l.s4 1966171168
        %v798 = vunpack.c.0.s8 %v797
        %v799 = vlaneseq
        %v800 = vshrl.u32 %v799, 7
        %v801 = vsub.s32 %v798, %v800
        %v802 = vrot.slane %v744, %v801
        %v804 = vunpack.c.l.s4 1966171168
        %v805 = vunpack.c.0.s8 %v804
        %v806 = vlaneseq
        %v807 = vshrl.u32 %v806, 7
        %v808 = vsub.s32 %v805, %v807
        %v809 = vrot.slane %v795, %v808
        %v810 = vcombine.high %v802, %v802
        %v811 = vcombine.high %v809, %v809
        %v813 = vunpack.c.l.s4 1966171168
        %v814 = vunpack.c.0.s8 %v813
        %v815 = vlaneseq
        %v816 = vshrl.u32 %v815, 7
        %v817 = vsub.s32 %v814, %v816
        %v818 = vrot.slane %v802, %v817
        %v820 = vunpack.c.l.s4 1966171168
        %v821 = vunpack.c.0.s8 %v820
        %v822 = vlaneseq
        %v823 = vshrl.u32 %v822, 7
        %v824 = vsub.s32 %v821, %v823
        %v825 = vrot.slane %v809, %v824
        %v827 = vunpack.c.l.s4 1966171168
        %v828 = vunpack.c.0.s8 %v827
        %v829 = vlaneseq
        %v830 = vshrl.u32 %v829, 7
        %v831 = vsub.s32 %v828, %v830
        %v832 = vrot.slane %v810, %v831
        %v834 = vunpack.c.l.s4 1966171168
        %v835 = vunpack.c.0.s8 %v834
        %v836 = vlaneseq
        %v837 = vshrl.u32 %v836, 7
        %v838 = vsub.s32 %v835, %v837
        %v839 = vrot.slane %v811, %v838
        %v840 = vcombine.high %v818, %v818
        %v841 = vcombine.high %v825, %v825
        %v842 = vcombine.high %v832, %v832
        %v843 = vld [vmem:[%s2] sm:$0xff]
        %v844 = vld [vmem:[%s3] sm:$0x1]
        %v846 = vlaneseq
        %v847 = vshrl.u32 %v846, 7
        %v848 = vsub.s32 0, %v847
        %v849 = vrot.slane %v844, %v848
        %v851 = vcombine.low %v770, %v784
        %v852 = vcombine.low %v792, %v794
        %v853 = vcombine.low %v777, %v791
        %v854 = vcombine.low %v793, %v818
        %v856 = vunpack.c.l.s4 1966171168
        %v857 = vunpack.c.0.s8 %v856
        %v858 = vlaneseq
        %v859 = vshrl.u32 %v858, 7
        %v860 = vsub.s32 %v857, %v859
        %v861 = vrot.slane %v851, %v860
        %v863 = vunpack.c.l.s4 1966171168
        %v864 = vunpack.c.0.s8 %v863
        %v865 = vlaneseq
        %v866 = vshrl.u32 %v865, 7
        %v867 = vsub.s32 %v864, %v866
        %v868 = vrot.slane %v852, %v867
        %v870 = vunpack.c.l.s4 1966171168
        %v871 = vunpack.c.0.s8 %v870
        %v872 = vlaneseq
        %v873 = vshrl.u32 %v872, 7
        %v874 = vsub.s32 %v871, %v873
        %v875 = vrot.slane %v853, %v874
        %v877 = vunpack.c.l.s4 1966171168
        %v878 = vunpack.c.0.s8 %v877
        %v879 = vlaneseq
        %v880 = vshrl.u32 %v879, 7
        %v881 = vsub.s32 %v878, %v880
        %v882 = vrot.slane %v854, %v881
        %v883 = vcombine.low %v861, %v868
        %v884 = vcombine.low %v875, %v882
        %v886 = vunpack.c.l.s4 1966171168
        %v887 = vunpack.c.0.s8 %v886
        %v888 = vlaneseq
        %v889 = vshrl.u32 %v888, 7
        %v890 = vsub.s32 %v887, %v889
        %v891 = vrot.slane %v883, %v890
        %v893 = vunpack.c.l.s4 1966171168
        %v894 = vunpack.c.0.s8 %v893
        %v895 = vlaneseq
        %v896 = vshrl.u32 %v895, 7
        %v897 = vsub.s32 %v894, %v896
        %v898 = vrot.slane %v884, %v897
        %v899 = vcombine.low %v891, %v898
        %v900 = vcombine.low %v832, %v840
        %v901 = vcombine.low %v842, %v825
        %v902 = vcombine.low %v839, %v841
        %v904 = vunpack.c.l.s4 1966171168
        %v905 = vunpack.c.0.s8 %v904
        %v906 = vlaneseq
        %v907 = vshrl.u32 %v906, 7
        %v908 = vsub.s32 %v905, %v907
        %v909 = vrot.slane %v900, %v908
        %v911 = vunpack.c.l.s4 1966171168
        %v912 = vunpack.c.0.s8 %v911
        %v913 = vlaneseq
        %v914 = vshrl.u32 %v913, 7
        %v915 = vsub.s32 %v912, %v914
        %v916 = vrot.slane %v901, %v915
        %v918 = vunpack.c.l.s4 1966171168
        %v919 = vunpack.c.0.s8 %v918
        %v920 = vlaneseq
        %v921 = vshrl.u32 %v920, 7
        %v922 = vsub.s32 %v919, %v921
        %v923 = vrot.slane %v902, %v922
        %v924 = vcombine.low %v909, %v916
        %v926 = vunpack.c.l.s4 1966171168
        %v927 = vunpack.c.0.s8 %v926
        %v928 = vlaneseq
        %v929 = vshrl.u32 %v928, 7
        %v930 = vsub.s32 %v927, %v929
        %v931 = vrot.slane %v924, %v930
        %v933 = vunpack.c.l.s4 1966171168
        %v934 = vunpack.c.0.s8 %v933
        %v935 = vlaneseq
        %v936 = vshrl.u32 %v935, 7
        %v937 = vsub.s32 %v934, %v936
        %v938 = vrot.slane %v923, %v937
        %v939 = vcombine.low %v931, %v938
        %vm940 = vcmask 64512
        %v941 = vsel %vm940, %v899, 0
        %v943 = vsel %vm940, %v939, 0
        %945 = vmatprep.subr.mxu0 0.0
        %946 = vmatpush1.msra.mxu0 %v843
        %947 = vmatprep.subr.mxu0 0.0
        %948 = vmatpush1.msra.mxu0 0.0
        %949 = vmatprep.subr.mxu0 0.0
        %950 = vmatpush1.msra.mxu0 0.0
        %951 = vmatprep.subr.mxu0 0.0
        %952 = vmatpush1.msra.mxu0 0.0
        %953 = vmatprep.subr.mxu0 0.0
        %954 = vmatpush1.msra.mxu0 0.0
        %955 = vmatprep.subr.mxu0 0.0
        %956 = vmatpush1.msra.mxu0 0.0
        %957 = vmatprep.subr.mxu0 0.0
        %958 = vmatpush1.msra.mxu0 0.0
        %959 = vmatprep.subr.mxu0 0.0
        %960 = vmatpush1.msra.mxu0 0.0
        %961 = vmatprep.subr.mxu0 0.0
        %962 = vmatpush1.msra.mxu0 0.0
        %963 = vmatprep.subr.mxu0 0.0
        %964 = vmatpush1.msra.mxu0 0.0
        %965 = vmatprep.subr.mxu0 0.0
        %966 = vmatpush1.msra.mxu0 0.0
        %967 = vmatprep.subr.mxu0 0.0
        %968 = vmatpush1.msra.mxu0 0.0
        %969 = vmatprep.subr.mxu0 0.0
        %970 = vmatpush1.msra.mxu0 0.0
        %971 = vmatprep.subr.mxu0 0.0
        %972 = vmatpush1.msra.mxu0 0.0
        %973 = vmatprep.subr.mxu0 0.0
        %974 = vmatpush1.msra.mxu0 0.0
        %975 = vmatprep.subr.mxu0 0.0
        %976 = vmatpush1.msra.mxu0 0.0
        %977 = vmatprep.subr.mxu0 0.0
        %978 = vmatpush1.msra.mxu0 0.0
        %979 = vmatprep.subr.mxu0 0.0
        %980 = vmatpush1.msra.mxu0 0.0
        %981 = vmatprep.subr.mxu0 0.0
        %982 = vmatpush1.msra.mxu0 0.0
        %983 = vmatprep.subr.mxu0 0.0
        %984 = vmatpush1.msra.mxu0 0.0
        %985 = vmatprep.subr.mxu0 0.0
        %986 = vmatpush1.msra.mxu0 0.0
        %987 = vmatprep.subr.mxu0 0.0
        %988 = vmatpush1.msra.mxu0 0.0
        %989 = vmatprep.subr.mxu0 0.0
        %990 = vmatpush1.msra.mxu0 0.0
        %991 = vmatprep.subr.mxu0 0.0
        %992 = vmatpush1.msra.mxu0 0.0
        %993 = vmatprep.subr.mxu0 0.0
        %994 = vmatpush1.msra.mxu0 0.0
        %995 = vmatprep.subr.mxu0 0.0
        %996 = vmatpush1.msra.mxu0 0.0
        %997 = vmatprep.subr.mxu0 0.0
        %998 = vmatpush1.msra.mxu0 0.0
        %999 = vmatprep.subr.mxu0 0.0
        %1000 = vmatpush1.msra.mxu0 0.0
        %1001 = vmatprep.subr.mxu0 0.0
        %1002 = vmatpush1.msra.mxu0 0.0
        %1003 = vmatprep.subr.mxu0 0.0
        %1004 = vmatpush1.msra.mxu0 0.0
        %1005 = vmatprep.subr.mxu0 0.0
        %1006 = vmatpush1.msra.mxu0 0.0
        %1007 = vmatprep.subr.mxu0 0.0
        %1008 = vmatpush1.msra.mxu0 0.0
        %1009 = vmatprep.mubr.f32.mxu0 0.0
        %1010 = vmatmul.mubr.f32.gmra.mrb[0].mxu0 %v941
        %v1011 = vpop.f32.mrb[0].mxu0
        %v1012 = vadd.f32 %v849, %v1011
        %v1013 = vpop.f32.mrb[0].mxu0
        %1014 = vmatprep.mubr.f32.mxu0 0.0
        %1015 = vmatmul.mubr.f32.gmra.mrb[0].mxu0 %v943
        %v1016 = vpop.f32.mrb[0].mxu0
        %v1017 = vadd.f32 %v849, %v1016
        %v1018 = vpop.f32.mrb[0].mxu0
        %1019 = vdwg.mxu0
        %v1022 = vcombine.high %v1012, %v1012
        %v1024 = vunpack.c.l.s4 1966171168
        %v1025 = vunpack.c.0.s8 %v1024
        %v1026 = vlaneseq
        %v1027 = vshrl.u32 %v1026, 7
        %v1028 = vsub.s32 %v1025, %v1027
        %v1029 = vrot.slane %v1012, %v1028
        %v1031 = vunpack.c.l.s4 1966171168
        %v1032 = vunpack.c.0.s8 %v1031
        %v1033 = vlaneseq
        %v1034 = vshrl.u32 %v1033, 7
        %v1035 = vsub.s32 %v1032, %v1034
        %v1036 = vrot.slane %v1022, %v1035
        %v1037 = vcombine.high %v1029, %v1029
        %v1038 = vcombine.high %v1036, %v1036
        %v1040 = vunpack.c.l.s4 1966171168
        %v1041 = vunpack.c.0.s8 %v1040
        %v1042 = vlaneseq
        %v1043 = vshrl.u32 %v1042, 7
        %v1044 = vsub.s32 %v1041, %v1043
        %v1045 = vrot.slane %v1029, %v1044
        %v1047 = vunpack.c.l.s4 1966171168
        %v1048 = vunpack.c.0.s8 %v1047
        %v1049 = vlaneseq
        %v1050 = vshrl.u32 %v1049, 7
        %v1051 = vsub.s32 %v1048, %v1050
        %v1052 = vrot.slane %v1036, %v1051
        %v1054 = vunpack.c.l.s4 1966171168
        %v1055 = vunpack.c.0.s8 %v1054
        %v1056 = vlaneseq
        %v1057 = vshrl.u32 %v1056, 7
        %v1058 = vsub.s32 %v1055, %v1057
        %v1059 = vrot.slane %v1037, %v1058
        %v1061 = vunpack.c.l.s4 1966171168
        %v1062 = vunpack.c.0.s8 %v1061
        %v1063 = vlaneseq
        %v1064 = vshrl.u32 %v1063, 7
        %v1065 = vsub.s32 %v1062, %v1064
        %v1066 = vrot.slane %v1038, %v1065
        %v1067 = vcombine.high %v1045, %v1045
        %v1068 = vcombine.high %v1052, %v1052
        %v1069 = vcombine.high %v1059, %v1059
        %v1070 = vcombine.high %v1066, %v1066
        %v1071 = vcombine.high %v1017, %v1017
        %v1073 = vunpack.c.l.s4 1966171168
        %v1074 = vunpack.c.0.s8 %v1073
        %v1075 = vlaneseq
        %v1076 = vshrl.u32 %v1075, 7
        %v1077 = vsub.s32 %v1074, %v1076
        %v1078 = vrot.slane %v1017, %v1077
        %v1080 = vunpack.c.l.s4 1966171168
        %v1081 = vunpack.c.0.s8 %v1080
        %v1082 = vlaneseq
        %v1083 = vshrl.u32 %v1082, 7
        %v1084 = vsub.s32 %v1081, %v1083
        %v1085 = vrot.slane %v1071, %v1084
        %v1086 = vcombine.high %v1078, %v1078
        %v1087 = vcombine.high %v1085, %v1085
        %v1089 = vunpack.c.l.s4 1966171168
        %v1090 = vunpack.c.0.s8 %v1089
        %v1091 = vlaneseq
        %v1092 = vshrl.u32 %v1091, 7
        %v1093 = vsub.s32 %v1090, %v1092
        %v1094 = vrot.slane %v1078, %v1093
        %v1096 = vunpack.c.l.s4 1966171168
        %v1097 = vunpack.c.0.s8 %v1096
        %v1098 = vlaneseq
        %v1099 = vshrl.u32 %v1098, 7
        %v1100 = vsub.s32 %v1097, %v1099
        %v1101 = vrot.slane %v1085, %v1100
        %v1103 = vunpack.c.l.s4 1966171168
        %v1104 = vunpack.c.0.s8 %v1103
        %v1105 = vlaneseq
        %v1106 = vshrl.u32 %v1105, 7
        %v1107 = vsub.s32 %v1104, %v1106
        %v1108 = vrot.slane %v1086, %v1107
        %v1110 = vunpack.c.l.s4 1966171168
        %v1111 = vunpack.c.0.s8 %v1110
        %v1112 = vlaneseq
        %v1113 = vshrl.u32 %v1112, 7
        %v1114 = vsub.s32 %v1111, %v1113
        %v1115 = vrot.slane %v1087, %v1114
        %v1116 = vcombine.high %v1094, %v1094
        %v1117 = vcombine.high %v1108, %v1108
        %v1118 = vld [vmem:[%s739] sm:$0x1]
        %v1119 = vld [vmem:[%s739 + $0x1] sm:$0x1]
        %v1120 = vcombine.low %v1045, %v1059
        %v1121 = vcombine.low %v1067, %v1069
        %v1122 = vcombine.low %v1052, %v1066
        %v1124 = vunpack.c.l.s4 1966171168
        %v1125 = vunpack.c.0.s8 %v1124
        %v1126 = vlaneseq
        %v1127 = vshrl.u32 %v1126, 7
        %v1128 = vsub.s32 %v1125, %v1127
        %v1129 = vrot.slane %v1120, %v1128
        %v1131 = vunpack.c.l.s4 1966171168
        %v1132 = vunpack.c.0.s8 %v1131
        %v1133 = vlaneseq
        %v1134 = vshrl.u32 %v1133, 7
        %v1135 = vsub.s32 %v1132, %v1134
        %v1136 = vrot.slane %v1121, %v1135
        %v1138 = vunpack.c.l.s4 1966171168
        %v1139 = vunpack.c.0.s8 %v1138
        %v1140 = vlaneseq
        %v1141 = vshrl.u32 %v1140, 7
        %v1142 = vsub.s32 %v1139, %v1141
        %v1143 = vrot.slane %v1122, %v1142
        %v1145 = vunpack.c.l.s4 1966171168
        %v1146 = vunpack.c.0.s8 %v1145
        %v1147 = vlaneseq
        %v1148 = vshrl.u32 %v1147, 7
        %v1149 = vsub.s32 %v1146, %v1148
        %v1150 = vrot.slane %v1068, %v1149
        %v1151 = vcombine.low %v1129, %v1136
        %v1152 = vcombine.low %v1143, %v1150
        %v1154 = vunpack.c.l.s4 1966171168
        %v1155 = vunpack.c.0.s8 %v1154
        %v1156 = vlaneseq
        %v1157 = vshrl.u32 %v1156, 7
        %v1158 = vsub.s32 %v1155, %v1157
        %v1159 = vrot.slane %v1151, %v1158
        %v1161 = vunpack.c.l.s4 1966171168
        %v1162 = vunpack.c.0.s8 %v1161
        %v1163 = vlaneseq
        %v1164 = vshrl.u32 %v1163, 7
        %v1165 = vsub.s32 %v1162, %v1164
        %v1166 = vrot.slane %v1152, %v1165
        %v1167 = vcombine.low %v1159, %v1166
        %v1168 = vcombine.low %v1070, %v1094
        %v1169 = vcombine.low %v1108, %v1116
        %v1170 = vcombine.low %v1117, %v1101
        %v1172 = vunpack.c.l.s4 1966171168
        %v1173 = vunpack.c.0.s8 %v1172
        %v1174 = vlaneseq
        %v1175 = vshrl.u32 %v1174, 7
        %v1176 = vsub.s32 %v1173, %v1175
        %v1177 = vrot.slane %v1168, %v1176
        %v1179 = vunpack.c.l.s4 1966171168
        %v1180 = vunpack.c.0.s8 %v1179
        %v1181 = vlaneseq
        %v1182 = vshrl.u32 %v1181, 7
        %v1183 = vsub.s32 %v1180, %v1182
        %v1184 = vrot.slane %v1169, %v1183
        %v1186 = vunpack.c.l.s4 1966171168
        %v1187 = vunpack.c.0.s8 %v1186
        %v1188 = vlaneseq
        %v1189 = vshrl.u32 %v1188, 7
        %v1190 = vsub.s32 %v1187, %v1189
        %v1191 = vrot.slane %v1170, %v1190
        %v1193 = vunpack.c.l.s4 1966171168
        %v1194 = vunpack.c.0.s8 %v1193
        %v1195 = vlaneseq
        %v1196 = vshrl.u32 %v1195, 7
        %v1197 = vsub.s32 %v1194, %v1196
        %v1198 = vrot.slane %v1115, %v1197
        %v1199 = vcombine.low %v1177, %v1184
        %v1200 = vcombine.low %v1191, %v1198
        %v1202 = vunpack.c.l.s4 1966171168
        %v1203 = vunpack.c.0.s8 %v1202
        %v1204 = vlaneseq
        %v1205 = vshrl.u32 %v1204, 7
        %v1206 = vsub.s32 %v1203, %v1205
        %v1207 = vrot.slane %v1199, %v1206
        %v1209 = vunpack.c.l.s4 1966171168
        %v1210 = vunpack.c.0.s8 %v1209
        %v1211 = vlaneseq
        %v1212 = vshrl.u32 %v1211, 7
        %v1213 = vsub.s32 %v1210, %v1212
        %v1214 = vrot.slane %v1200, %v1213
        %v1215 = vcombine.low %v1207, %v1214
        %v1220 = vlaneseq
        %v1221 = vshrl.u32 %v1220, 7
        %v1222 = vsub.s32 0, %v1221
        %v1223 = vrot.slane %v1118, %v1222
        %v1224 = vlaneseq
        %v1225 = vshrl.u32 %v1224, 7
        %v1226 = vsub.s32 0, %v1225
        %v1227 = vrot.slane %v1119, %v1226
        %vm1230 = vcmask 1046528
        %v1231 = vsel %vm1230, %v1167, %v1223
        %v1232 = vsel %vm1230, %v1215, %v1227
        %v1233 = vld [vmem:[%s4] sm:$0xff]
        %v1234 = vld [vmem:[%s4 + $0x8] sm:$0xff]
        %v1235 = vld [vmem:[%s4 + $0x10] sm:$0xff]
        %v1236 = vld [vmem:[%s4 + $0x18] sm:$0xff]
        %v1237 = vld [vmem:[%s4 + $0x20] sm:$0xff]
        %v1238 = vld [vmem:[%s4 + $0x28] sm:$0xff]
        %v1239 = vld [vmem:[%s4 + $0x30] sm:$0xff]
        %v1240 = vld [vmem:[%s4 + $0x38] sm:$0xff]
        %vm1241 = vcmask 261120
        %v1243 = vsel %vm1241, %v1231, 0
        %v1246 = vsel %vm1241, %v1232, 0
        %1248 = vmatprep.subr.mxu0 %v1234
        %1249 = vmatpush1.msra.mxu0 %v1233
        %1250 = vmatprep.subr.mxu0 %v1236
        %1251 = vmatpush1.msra.mxu0 %v1235
        %1252 = vmatprep.subr.mxu0 %v1238
        %1253 = vmatpush1.msra.mxu0 %v1237
        %1254 = vmatprep.subr.mxu0 %v1240
        %1255 = vmatpush1.msra.mxu0 %v1239
        %1256 = vmatprep.subr.mxu0 0.0
        %1257 = vmatpush1.msra.mxu0 0.0
        %1258 = vmatprep.subr.mxu0 0.0
        %1259 = vmatpush1.msra.mxu0 0.0
        %1260 = vmatprep.subr.mxu0 0.0
        %1261 = vmatpush1.msra.mxu0 0.0
        %1262 = vmatprep.subr.mxu0 0.0
        %1263 = vmatpush1.msra.mxu0 0.0
        %1264 = vmatprep.subr.mxu0 0.0
        %1265 = vmatpush1.msra.mxu0 0.0
        %1266 = vmatprep.subr.mxu0 0.0
        %1267 = vmatpush1.msra.mxu0 0.0
        %1268 = vmatprep.subr.mxu0 0.0
        %1269 = vmatpush1.msra.mxu0 0.0
        %1270 = vmatprep.subr.mxu0 0.0
        %1271 = vmatpush1.msra.mxu0 0.0
        %1272 = vmatprep.subr.mxu0 0.0
        %1273 = vmatpush1.msra.mxu0 0.0
        %1274 = vmatprep.subr.mxu0 0.0
        %1275 = vmatpush1.msra.mxu0 0.0
        %1276 = vmatprep.subr.mxu0 0.0
        %1277 = vmatpush1.msra.mxu0 0.0
        %1278 = vmatprep.subr.mxu0 0.0
        %1279 = vmatpush1.msra.mxu0 0.0
        %1280 = vmatprep.subr.mxu0 0.0
        %1281 = vmatpush1.msra.mxu0 0.0
        %1282 = vmatprep.subr.mxu0 0.0
        %1283 = vmatpush1.msra.mxu0 0.0
        %1284 = vmatprep.subr.mxu0 0.0
        %1285 = vmatpush1.msra.mxu0 0.0
        %1286 = vmatprep.subr.mxu0 0.0
        %1287 = vmatpush1.msra.mxu0 0.0
        %1288 = vmatprep.subr.mxu0 0.0
        %1289 = vmatpush1.msra.mxu0 0.0
        %1290 = vmatprep.subr.mxu0 0.0
        %1291 = vmatpush1.msra.mxu0 0.0
        %1292 = vmatprep.subr.mxu0 0.0
        %1293 = vmatpush1.msra.mxu0 0.0
        %1294 = vmatprep.subr.mxu0 0.0
        %1295 = vmatpush1.msra.mxu0 0.0
        %1296 = vmatprep.subr.mxu0 0.0
        %1297 = vmatpush1.msra.mxu0 0.0
        %1298 = vmatprep.subr.mxu0 0.0
        %1299 = vmatpush1.msra.mxu0 0.0
        %1300 = vmatprep.subr.mxu0 0.0
        %1301 = vmatpush1.msra.mxu0 0.0
        %1302 = vmatprep.subr.mxu0 0.0
        %1303 = vmatpush1.msra.mxu0 0.0
        %1304 = vmatprep.subr.mxu0 0.0
        %1305 = vmatpush1.msra.mxu0 0.0
        %1306 = vmatprep.subr.mxu0 0.0
        %1307 = vmatpush1.msra.mxu0 0.0
        %1308 = vmatprep.subr.mxu0 0.0
        %1309 = vmatpush1.msra.mxu0 0.0
        %1310 = vmatprep.subr.mxu0 0.0
        %1311 = vmatpush1.msra.mxu0 0.0
        %1312 = vmatprep.mubr.f32.mxu0 0.0
        %1313 = vmatmul.mubr.f32.gmra.mrb[0].mxu0 %v1243
        %v1314 = vpop.f32.mrb[0].mxu0
        %v1315 = vadd.f32 0.0, %v1314
        %v1316 = vpop.f32.mrb[0].mxu0
        %v1317 = vadd.f32 0.0, %v1316
        %1318 = vmatprep.mubr.f32.mxu0 0.0
        %1319 = vmatmul.mubr.f32.gmra.mrb[0].mxu0 %v1246
        %v1320 = vpop.f32.mrb[0].mxu0
        %v1321 = vadd.f32 0.0, %v1320
        %v1322 = vpop.f32.mrb[0].mxu0
        %v1323 = vadd.f32 0.0, %v1322
        %1324 = vdwg.mxu0
        %1327 = vrot.lane.b32.xlu0 %v1315, 96
        %v1328 = vpop.permute.xlu0 %1327
        %1329 = vrot.lane.b32.xlu0 %v1321, 96
        %v1330 = vpop.permute.xlu0 %1329
        %1333 = vrot.lane.b32.xlu0 %v1317, 96
        %v1334 = vpop.permute.xlu0 %1333
        %1335 = vrot.lane.b32.xlu0 %v1323, 96
        %v1336 = vpop.permute.xlu0 %1335
        %1339 = vrot.lane.b32.xlu0 %v1315, 64
        %v1340 = vpop.permute.xlu0 %1339
        %v1341 = vsel %vm1241, %v1315, 0
        %v1343 = vsel %vm1241, %v1340, 0
        %1345 = vmatprep.subr.mxu0 0.0
        %1346 = vmatpush1.xpose.msra.mxu0 %v1343
        %1347 = vmatprep.subr.mxu0 0.0
        %1348 = vmatpush1.xpose.msra.mxu0 0.0
        %1349 = vmatprep.subr.mxu0 0.0
        %1350 = vmatpush1.xpose.msra.mxu0 0.0
        %1351 = vmatprep.subr.mxu0 0.0
        %1352 = vmatpush1.xpose.msra.mxu0 0.0
        %1353 = vmatprep.subr.mxu0 0.0
        %1354 = vmatpush1.xpose.msra.mxu0 0.0
        %1355 = vmatprep.subr.mxu0 0.0
        %1356 = vmatpush1.xpose.msra.mxu0 0.0
        %1357 = vmatprep.subr.mxu0 0.0
        %1358 = vmatpush1.xpose.msra.mxu0 0.0
        %1359 = vmatprep.subr.mxu0 0.0
        %1360 = vmatpush1.xpose.msra.mxu0 0.0
        %1361 = vmatprep.subr.mxu0 0.0
        %1362 = vmatpush1.xpose.msra.mxu0 0.0
        %1363 = vmatprep.subr.mxu0 0.0
        %1364 = vmatpush1.xpose.msra.mxu0 0.0
        %1365 = vmatprep.subr.mxu0 0.0
        %1366 = vmatpush1.xpose.msra.mxu0 0.0
        %1367 = vmatprep.subr.mxu0 0.0
        %1368 = vmatpush1.xpose.msra.mxu0 0.0
        %1369 = vmatprep.subr.mxu0 0.0
        %1370 = vmatpush1.xpose.msra.mxu0 0.0
        %1371 = vmatprep.subr.mxu0 0.0
        %1372 = vmatpush1.xpose.msra.mxu0 0.0
        %1373 = vmatprep.subr.mxu0 0.0
        %1374 = vmatpush1.xpose.msra.mxu0 0.0
        %1375 = vmatprep.subr.mxu0 0.0
        %1376 = vmatpush1.xpose.msra.mxu0 0.0
        %1377 = vmatprep.subr.mxu0 0.0
        %1378 = vmatpush1.xpose.msra.mxu0 0.0
        %1379 = vmatprep.subr.mxu0 0.0
        %1380 = vmatpush1.xpose.msra.mxu0 0.0
        %1381 = vmatprep.subr.mxu0 0.0
        %1382 = vmatpush1.xpose.msra.mxu0 0.0
        %1383 = vmatprep.subr.mxu0 0.0
        %1384 = vmatpush1.xpose.msra.mxu0 0.0
        %1385 = vmatprep.subr.mxu0 0.0
        %1386 = vmatpush1.xpose.msra.mxu0 0.0
        %1387 = vmatprep.subr.mxu0 0.0
        %1388 = vmatpush1.xpose.msra.mxu0 0.0
        %1389 = vmatprep.subr.mxu0 0.0
        %1390 = vmatpush1.xpose.msra.mxu0 0.0
        %1391 = vmatprep.subr.mxu0 0.0
        %1392 = vmatpush1.xpose.msra.mxu0 0.0
        %1393 = vmatprep.subr.mxu0 0.0
        %1394 = vmatpush1.xpose.msra.mxu0 0.0
        %1395 = vmatprep.subr.mxu0 0.0
        %1396 = vmatpush1.xpose.msra.mxu0 0.0
        %1397 = vmatprep.subr.mxu0 0.0
        %1398 = vmatpush1.xpose.msra.mxu0 0.0
        %1399 = vmatprep.subr.mxu0 0.0
        %1400 = vmatpush1.xpose.msra.mxu0 0.0
        %1401 = vmatprep.subr.mxu0 0.0
        %1402 = vmatpush1.xpose.msra.mxu0 0.0
        %1403 = vmatprep.subr.mxu0 0.0
        %1404 = vmatpush1.xpose.msra.mxu0 0.0
        %1405 = vmatprep.subr.mxu0 0.0
        %1406 = vmatpush1.xpose.msra.mxu0 0.0
        %1407 = vmatprep.subr.mxu0 0.0
        %1408 = vmatpush1.xpose.msra.mxu0 0.0
        %1409 = vmatprep.mubr.f32.mxu0 0.0
        %1410 = vmatmul.mubr.f32.gmra.mrb[0].mxu0 %v1341
        %v1411 = vpop.f32.mrb[0].mxu0
        %v1412 = vadd.f32 0.0, %v1411
        %v1413 = vpop.f32.mrb[0].mxu0
        %1414 = vdwg.mxu0
        %1415 = vrot.lane.b32.xlu0 %v1321, 64
        %v1416 = vpop.permute.xlu0 %1415
        %v1417 = vsel %vm1241, %v1321, 0
        %v1419 = vsel %vm1241, %v1416, 0
        %1421 = vmatprep.subr.mxu0 0.0
        %1422 = vmatpush1.xpose.msra.mxu0 %v1419
        %1423 = vmatprep.subr.mxu0 0.0
        %1424 = vmatpush1.xpose.msra.mxu0 0.0
        %1425 = vmatprep.subr.mxu0 0.0
        %1426 = vmatpush1.xpose.msra.mxu0 0.0
        %1427 = vmatprep.subr.mxu0 0.0
        %1428 = vmatpush1.xpose.msra.mxu0 0.0
        %1429 = vmatprep.subr.mxu0 0.0
        %1430 = vmatpush1.xpose.msra.mxu0 0.0
        %1431 = vmatprep.subr.mxu0 0.0
        %1432 = vmatpush1.xpose.msra.mxu0 0.0
        %1433 = vmatprep.subr.mxu0 0.0
        %1434 = vmatpush1.xpose.msra.mxu0 0.0
        %1435 = vmatprep.subr.mxu0 0.0
        %1436 = vmatpush1.xpose.msra.mxu0 0.0
        %1437 = vmatprep.subr.mxu0 0.0
        %1438 = vmatpush1.xpose.msra.mxu0 0.0
        %1439 = vmatprep.subr.mxu0 0.0
        %1440 = vmatpush1.xpose.msra.mxu0 0.0
        %1441 = vmatprep.subr.mxu0 0.0
        %1442 = vmatpush1.xpose.msra.mxu0 0.0
        %1443 = vmatprep.subr.mxu0 0.0
        %1444 = vmatpush1.xpose.msra.mxu0 0.0
        %1445 = vmatprep.subr.mxu0 0.0
        %1446 = vmatpush1.xpose.msra.mxu0 0.0
        %1447 = vmatprep.subr.mxu0 0.0
        %1448 = vmatpush1.xpose.msra.mxu0 0.0
        %1449 = vmatprep.subr.mxu0 0.0
        %1450 = vmatpush1.xpose.msra.mxu0 0.0
        %1451 = vmatprep.subr.mxu0 0.0
        %1452 = vmatpush1.xpose.msra.mxu0 0.0
        %1453 = vmatprep.subr.mxu0 0.0
        %1454 = vmatpush1.xpose.msra.mxu0 0.0
        %1455 = vmatprep.subr.mxu0 0.0
        %1456 = vmatpush1.xpose.msra.mxu0 0.0
        %1457 = vmatprep.subr.mxu0 0.0
        %1458 = vmatpush1.xpose.msra.mxu0 0.0
        %1459 = vmatprep.subr.mxu0 0.0
        %1460 = vmatpush1.xpose.msra.mxu0 0.0
        %1461 = vmatprep.subr.mxu0 0.0
        %1462 = vmatpush1.xpose.msra.mxu0 0.0
        %1463 = vmatprep.subr.mxu0 0.0
        %1464 = vmatpush1.xpose.msra.mxu0 0.0
        %1465 = vmatprep.subr.mxu0 0.0
        %1466 = vmatpush1.xpose.msra.mxu0 0.0
        %1467 = vmatprep.subr.mxu0 0.0
        %1468 = vmatpush1.xpose.msra.mxu0 0.0
        %1469 = vmatprep.subr.mxu0 0.0
        %1470 = vmatpush1.xpose.msra.mxu0 0.0
        %1471 = vmatprep.subr.mxu0 0.0
        %1472 = vmatpush1.xpose.msra.mxu0 0.0
        %1473 = vmatprep.subr.mxu0 0.0
        %1474 = vmatpush1.xpose.msra.mxu0 0.0
        %1475 = vmatprep.subr.mxu0 0.0
        %1476 = vmatpush1.xpose.msra.mxu0 0.0
        %1477 = vmatprep.subr.mxu0 0.0
        %1478 = vmatpush1.xpose.msra.mxu0 0.0
        %1479 = vmatprep.subr.mxu0 0.0
        %1480 = vmatpush1.xpose.msra.mxu0 0.0
        %1481 = vmatprep.subr.mxu0 0.0
        %1482 = vmatpush1.xpose.msra.mxu0 0.0
        %1483 = vmatprep.subr.mxu0 0.0
        %1484 = vmatpush1.xpose.msra.mxu0 0.0
        %1485 = vmatprep.mubr.f32.mxu0 0.0
        %1486 = vmatmul.mubr.f32.gmra.mrb[0].mxu0 %v1417
        %v1487 = vpop.f32.mrb[0].mxu0
        %v1488 = vadd.f32 0.0, %v1487
        %v1489 = vpop.f32.mrb[0].mxu0
        %1490 = vdwg.mxu0
        %1491 = vrot.lane.b32.xlu0 %v1328, 64
        %v1492 = vpop.permute.xlu0 %1491
        %v1493 = vsel %vm1241, %v1328, 0
        %v1495 = vsel %vm1241, %v1492, 0
        %1497 = vmatprep.subr.mxu0 0.0
        %1498 = vmatpush1.xpose.msra.mxu0 %v1495
        %1499 = vmatprep.subr.mxu0 0.0
        %1500 = vmatpush1.xpose.msra.mxu0 0.0
        %1501 = vmatprep.subr.mxu0 0.0
        %1502 = vmatpush1.xpose.msra.mxu0 0.0
        %1503 = vmatprep.subr.mxu0 0.0
        %1504 = vmatpush1.xpose.msra.mxu0 0.0
        %1505 = vmatprep.subr.mxu0 0.0
        %1506 = vmatpush1.xpose.msra.mxu0 0.0
        %1507 = vmatprep.subr.mxu0 0.0
        %1508 = vmatpush1.xpose.msra.mxu0 0.0
        %1509 = vmatprep.subr.mxu0 0.0
        %1510 = vmatpush1.xpose.msra.mxu0 0.0
        %1511 = vmatprep.subr.mxu0 0.0
        %1512 = vmatpush1.xpose.msra.mxu0 0.0
        %1513 = vmatprep.subr.mxu0 0.0
        %1514 = vmatpush1.xpose.msra.mxu0 0.0
        %1515 = vmatprep.subr.mxu0 0.0
        %1516 = vmatpush1.xpose.msra.mxu0 0.0
        %1517 = vmatprep.subr.mxu0 0.0
        %1518 = vmatpush1.xpose.msra.mxu0 0.0
        %1519 = vmatprep.subr.mxu0 0.0
        %1520 = vmatpush1.xpose.msra.mxu0 0.0
        %1521 = vmatprep.subr.mxu0 0.0
        %1522 = vmatpush1.xpose.msra.mxu0 0.0
        %1523 = vmatprep.subr.mxu0 0.0
        %1524 = vmatpush1.xpose.msra.mxu0 0.0
        %1525 = vmatprep.subr.mxu0 0.0
        %1526 = vmatpush1.xpose.msra.mxu0 0.0
        %1527 = vmatprep.subr.mxu0 0.0
        %1528 = vmatpush1.xpose.msra.mxu0 0.0
        %1529 = vmatprep.subr.mxu0 0.0
        %1530 = vmatpush1.xpose.msra.mxu0 0.0
        %1531 = vmatprep.subr.mxu0 0.0
        %1532 = vmatpush1.xpose.msra.mxu0 0.0
        %1533 = vmatprep.subr.mxu0 0.0
        %1534 = vmatpush1.xpose.msra.mxu0 0.0
        %1535 = vmatprep.subr.mxu0 0.0
        %1536 = vmatpush1.xpose.msra.mxu0 0.0
        %1537 = vmatprep.subr.mxu0 0.0
        %1538 = vmatpush1.xpose.msra.mxu0 0.0
        %1539 = vmatprep.subr.mxu0 0.0
        %1540 = vmatpush1.xpose.msra.mxu0 0.0
        %1541 = vmatprep.subr.mxu0 0.0
        %1542 = vmatpush1.xpose.msra.mxu0 0.0
        %1543 = vmatprep.subr.mxu0 0.0
        %1544 = vmatpush1.xpose.msra.mxu0 0.0
        %1545 = vmatprep.subr.mxu0 0.0
        %1546 = vmatpush1.xpose.msra.mxu0 0.0
        %1547 = vmatprep.subr.mxu0 0.0
        %1548 = vmatpush1.xpose.msra.mxu0 0.0
        %1549 = vmatprep.subr.mxu0 0.0
        %1550 = vmatpush1.xpose.msra.mxu0 0.0
        %1551 = vmatprep.subr.mxu0 0.0
        %1552 = vmatpush1.xpose.msra.mxu0 0.0
        %1553 = vmatprep.subr.mxu0 0.0
        %1554 = vmatpush1.xpose.msra.mxu0 0.0
        %1555 = vmatprep.subr.mxu0 0.0
        %1556 = vmatpush1.xpose.msra.mxu0 0.0
        %1557 = vmatprep.subr.mxu0 0.0
        %1558 = vmatpush1.xpose.msra.mxu0 0.0
        %1559 = vmatprep.subr.mxu0 0.0
        %1560 = vmatpush1.xpose.msra.mxu0 0.0
        %1561 = vmatprep.mubr.f32.mxu0 0.0
        %1562 = vmatmul.mubr.f32.gmra.mrb[0].mxu0 %v1493
        %v1563 = vpop.f32.mrb[0].mxu0
        %v1564 = vadd.f32 0.0, %v1563
        %v1565 = vpop.f32.mrb[0].mxu0
        %1566 = vdwg.mxu0
        %1567 = vrot.lane.b32.xlu0 %v1330, 64
        %v1568 = vpop.permute.xlu0 %1567
        %v1569 = vsel %vm1241, %v1330, 0
        %v1571 = vsel %vm1241, %v1568, 0
        %1573 = vmatprep.subr.mxu0 0.0
        %1574 = vmatpush1.xpose.msra.mxu0 %v1571
        %1575 = vmatprep.subr.mxu0 0.0
        %1576 = vmatpush1.xpose.msra.mxu0 0.0
        %1577 = vmatprep.subr.mxu0 0.0
        %1578 = vmatpush1.xpose.msra.mxu0 0.0
        %1579 = vmatprep.subr.mxu0 0.0
        %1580 = vmatpush1.xpose.msra.mxu0 0.0
        %1581 = vmatprep.subr.mxu0 0.0
        %1582 = vmatpush1.xpose.msra.mxu0 0.0
        %1583 = vmatprep.subr.mxu0 0.0
        %1584 = vmatpush1.xpose.msra.mxu0 0.0
        %1585 = vmatprep.subr.mxu0 0.0
        %1586 = vmatpush1.xpose.msra.mxu0 0.0
        %1587 = vmatprep.subr.mxu0 0.0
        %1588 = vmatpush1.xpose.msra.mxu0 0.0
        %1589 = vmatprep.subr.mxu0 0.0
        %1590 = vmatpush1.xpose.msra.mxu0 0.0
        %1591 = vmatprep.subr.mxu0 0.0
        %1592 = vmatpush1.xpose.msra.mxu0 0.0
        %1593 = vmatprep.subr.mxu0 0.0
        %1594 = vmatpush1.xpose.msra.mxu0 0.0
        %1595 = vmatprep.subr.mxu0 0.0
        %1596 = vmatpush1.xpose.msra.mxu0 0.0
        %1597 = vmatprep.subr.mxu0 0.0
        %1598 = vmatpush1.xpose.msra.mxu0 0.0
        %1599 = vmatprep.subr.mxu0 0.0
        %1600 = vmatpush1.xpose.msra.mxu0 0.0
        %1601 = vmatprep.subr.mxu0 0.0
        %1602 = vmatpush1.xpose.msra.mxu0 0.0
        %1603 = vmatprep.subr.mxu0 0.0
        %1604 = vmatpush1.xpose.msra.mxu0 0.0
        %1605 = vmatprep.subr.mxu0 0.0
        %1606 = vmatpush1.xpose.msra.mxu0 0.0
        %1607 = vmatprep.subr.mxu0 0.0
        %1608 = vmatpush1.xpose.msra.mxu0 0.0
        %1609 = vmatprep.subr.mxu0 0.0
        %1610 = vmatpush1.xpose.msra.mxu0 0.0
        %1611 = vmatprep.subr.mxu0 0.0
        %1612 = vmatpush1.xpose.msra.mxu0 0.0
        %1613 = vmatprep.subr.mxu0 0.0
        %1614 = vmatpush1.xpose.msra.mxu0 0.0
        %1615 = vmatprep.subr.mxu0 0.0
        %1616 = vmatpush1.xpose.msra.mxu0 0.0
        %1617 = vmatprep.subr.mxu0 0.0
        %1618 = vmatpush1.xpose.msra.mxu0 0.0
        %1619 = vmatprep.subr.mxu0 0.0
        %1620 = vmatpush1.xpose.msra.mxu0 0.0
        %1621 = vmatprep.subr.mxu0 0.0
        %1622 = vmatpush1.xpose.msra.mxu0 0.0
        %1623 = vmatprep.subr.mxu0 0.0
        %1624 = vmatpush1.xpose.msra.mxu0 0.0
        %1625 = vmatprep.subr.mxu0 0.0
        %1626 = vmatpush1.xpose.msra.mxu0 0.0
        %1627 = vmatprep.subr.mxu0 0.0
        %1628 = vmatpush1.xpose.msra.mxu0 0.0
        %1629 = vmatprep.subr.mxu0 0.0
        %1630 = vmatpush1.xpose.msra.mxu0 0.0
        %1631 = vmatprep.subr.mxu0 0.0
        %1632 = vmatpush1.xpose.msra.mxu0 0.0
        %1633 = vmatprep.subr.mxu0 0.0
        %1634 = vmatpush1.xpose.msra.mxu0 0.0
        %1635 = vmatprep.subr.mxu0 0.0
        %1636 = vmatpush1.xpose.msra.mxu0 0.0
        %1637 = vmatprep.mubr.f32.mxu0 0.0
        %1638 = vmatmul.mubr.f32.gmra.mrb[0].mxu0 %v1569
        %v1639 = vpop.f32.mrb[0].mxu0
        %v1640 = vadd.f32 0.0, %v1639
        %v1641 = vpop.f32.mrb[0].mxu0
        %1642 = vdwg.mxu0
        %v1643 = vmul.f32 %v1412, 0.17677669
        %v1644 = vmul.f32 %v1488, 0.17677669
        %v1645 = vmul.f32 %v1564, 0.17677669
        %v1646 = vmul.f32 %v1640, 0.17677669
        %v1647 = vsel %vm940, %v1643, -inf
        %1648 = vmax.xlane.f32.xlu0 %v1647
        %v1649 = vpop.xlane.xlu0 %1648
        %v1650 = vsel %vm940, %v1644, -inf
        %1651 = vmax.xlane.f32.xlu0 %v1650
        %v1652 = vpop.xlane.xlu0 %1651
        %v1653 = vsel %vm940, %v1645, -inf
        %1654 = vmax.xlane.f32.xlu0 %v1653
        %v1655 = vpop.xlane.xlu0 %1654
        %v1656 = vsel %vm940, %v1646, -inf
        %1657 = vmax.xlane.f32.xlu0 %v1656
        %v1658 = vpop.xlane.xlu0 %1657
        %v1659 = vsub.f32 %v1643, %v1649
        %v1660 = vsub.f32 %v1644, %v1652
        %v1661 = vsub.f32 %v1645, %v1655
        %v1662 = vsub.f32 %v1646, %v1658
        %v1663 = vmul.f32 %v1659, 1.442695
        %v1664 = vpow.pop %v1663
        %v1665 = vmul.f32 %v1660, 1.442695
        %v1666 = vpow.pop %v1665
        %v1667 = vmul.f32 %v1661, 1.442695
        %v1668 = vpow.pop %v1667
        %v1669 = vmul.f32 %v1662, 1.442695
        %v1670 = vpow.pop %v1669
        %v1671 = vsel %vm940, %v1664, 0.0
        %1672 = vadd.xlane.f32.xlu0 %v1671
        %v1673 = vpop.xlane.xlu0 %1672
        %v1674 = vsel %vm940, %v1666, 0.0
        %1675 = vadd.xlane.f32.xlu0 %v1674
        %v1676 = vpop.xlane.xlu0 %1675
        %v1677 = vsel %vm940, %v1668, 0.0
        %1678 = vadd.xlane.f32.xlu0 %v1677
        %v1679 = vpop.xlane.xlu0 %1678
        %v1680 = vsel %vm940, %v1670, 0.0
        %1681 = vadd.xlane.f32.xlu0 %v1680
        %v1682 = vpop.xlane.xlu0 %1681
        %v1683 = vrcp.pop %v1673
        %v1684 = vrcp.pop %v1676
        %v1685 = vrcp.pop %v1679
        %v1686 = vrcp.pop %v1682
        %v1687 = vmul.f32 %v1664, %v1683
        %v1688 = vmul.f32 %v1666, %v1684
        %v1689 = vmul.f32 %v1668, %v1685
        %v1690 = vmul.f32 %v1670, %v1686
        %v1692 = vsel %vm940, %v1687, 0
        %1694 = vmatprep.subr.mxu0 0.0
        %1695 = vmatpush1.msra.mxu0 %v1317
        %1696 = vmatprep.subr.mxu0 0.0
        %1697 = vmatpush1.msra.mxu0 0.0
        %1698 = vmatprep.subr.mxu0 0.0
        %1699 = vmatpush1.msra.mxu0 0.0
        %1700 = vmatprep.subr.mxu0 0.0
        %1701 = vmatpush1.msra.mxu0 0.0
        %1702 = vmatprep.subr.mxu0 0.0
        %1703 = vmatpush1.msra.mxu0 0.0
        %1704 = vmatprep.subr.mxu0 0.0
        %1705 = vmatpush1.msra.mxu0 0.0
        %1706 = vmatprep.subr.mxu0 0.0
        %1707 = vmatpush1.msra.mxu0 0.0
        %1708 = vmatprep.subr.mxu0 0.0
        %1709 = vmatpush1.msra.mxu0 0.0
        %1710 = vmatprep.subr.mxu0 0.0
        %1711 = vmatpush1.msra.mxu0 0.0
        %1712 = vmatprep.subr.mxu0 0.0
        %1713 = vmatpush1.msra.mxu0 0.0
        %1714 = vmatprep.subr.mxu0 0.0
        %1715 = vmatpush1.msra.mxu0 0.0
        %1716 = vmatprep.subr.mxu0 0.0
        %1717 = vmatpush1.msra.mxu0 0.0
        %1718 = vmatprep.subr.mxu0 0.0
        %1719 = vmatpush1.msra.mxu0 0.0
        %1720 = vmatprep.subr.mxu0 0.0
        %1721 = vmatpush1.msra.mxu0 0.0
        %1722 = vmatprep.subr.mxu0 0.0
        %1723 = vmatpush1.msra.mxu0 0.0
        %1724 = vmatprep.subr.mxu0 0.0
        %1725 = vmatpush1.msra.mxu0 0.0
        %1726 = vmatprep.subr.mxu0 0.0
        %1727 = vmatpush1.msra.mxu0 0.0
        %1728 = vmatprep.subr.mxu0 0.0
        %1729 = vmatpush1.msra.mxu0 0.0
        %1730 = vmatprep.subr.mxu0 0.0
        %1731 = vmatpush1.msra.mxu0 0.0
        %1732 = vmatprep.subr.mxu0 0.0
        %1733 = vmatpush1.msra.mxu0 0.0
        %1734 = vmatprep.subr.mxu0 0.0
        %1735 = vmatpush1.msra.mxu0 0.0
        %1736 = vmatprep.subr.mxu0 0.0
        %1737 = vmatpush1.msra.mxu0 0.0
        %1738 = vmatprep.subr.mxu0 0.0
        %1739 = vmatpush1.msra.mxu0 0.0
        %1740 = vmatprep.subr.mxu0 0.0
        %1741 = vmatpush1.msra.mxu0 0.0
        %1742 = vmatprep.subr.mxu0 0.0
        %1743 = vmatpush1.msra.mxu0 0.0
        %1744 = vmatprep.subr.mxu0 0.0
        %1745 = vmatpush1.msra.mxu0 0.0
        %1746 = vmatprep.subr.mxu0 0.0
        %1747 = vmatpush1.msra.mxu0 0.0
        %1748 = vmatprep.subr.mxu0 0.0
        %1749 = vmatpush1.msra.mxu0 0.0
        %1750 = vmatprep.subr.mxu0 0.0
        %1751 = vmatpush1.msra.mxu0 0.0
        %1752 = vmatprep.subr.mxu0 0.0
        %1753 = vmatpush1.msra.mxu0 0.0
        %1754 = vmatprep.subr.mxu0 0.0
        %1755 = vmatpush1.msra.mxu0 0.0
        %1756 = vmatprep.subr.mxu0 0.0
        %1757 = vmatpush1.msra.mxu0 0.0
        %1758 = vmatprep.mubr.f32.mxu0 0.0
        %1759 = vmatmul.mubr.f32.gmra.mrb[0].mxu0 %v1692
        %v1760 = vpop.f32.mrb[0].mxu0
        %v1761 = vadd.f32 0.0, %v1760
        %v1762 = vpop.f32.mrb[0].mxu0
        %1763 = vdwg.mxu0
        %v1765 = vsel %vm940, %v1688, 0
        %1767 = vmatprep.subr.mxu0 0.0
        %1768 = vmatpush1.msra.mxu0 %v1323
        %1769 = vmatprep.subr.mxu0 0.0
        %1770 = vmatpush1.msra.mxu0 0.0
        %1771 = vmatprep.subr.mxu0 0.0
        %1772 = vmatpush1.msra.mxu0 0.0
        %1773 = vmatprep.subr.mxu0 0.0
        %1774 = vmatpush1.msra.mxu0 0.0
        %1775 = vmatprep.subr.mxu0 0.0
        %1776 = vmatpush1.msra.mxu0 0.0
        %1777 = vmatprep.subr.mxu0 0.0
        %1778 = vmatpush1.msra.mxu0 0.0
        %1779 = vmatprep.subr.mxu0 0.0
        %1780 = vmatpush1.msra.mxu0 0.0
        %1781 = vmatprep.subr.mxu0 0.0
        %1782 = vmatpush1.msra.mxu0 0.0
        %1783 = vmatprep.subr.mxu0 0.0
        %1784 = vmatpush1.msra.mxu0 0.0
        %1785 = vmatprep.subr.mxu0 0.0
        %1786 = vmatpush1.msra.mxu0 0.0
        %1787 = vmatprep.subr.mxu0 0.0
        %1788 = vmatpush1.msra.mxu0 0.0
        %1789 = vmatprep.subr.mxu0 0.0
        %1790 = vmatpush1.msra.mxu0 0.0
        %1791 = vmatprep.subr.mxu0 0.0
        %1792 = vmatpush1.msra.mxu0 0.0
        %1793 = vmatprep.subr.mxu0 0.0
        %1794 = vmatpush1.msra.mxu0 0.0
        %1795 = vmatprep.subr.mxu0 0.0
        %1796 = vmatpush1.msra.mxu0 0.0
        %1797 = vmatprep.subr.mxu0 0.0
        %1798 = vmatpush1.msra.mxu0 0.0
        %1799 = vmatprep.subr.mxu0 0.0
        %1800 = vmatpush1.msra.mxu0 0.0
        %1801 = vmatprep.subr.mxu0 0.0
        %1802 = vmatpush1.msra.mxu0 0.0
        %1803 = vmatprep.subr.mxu0 0.0
        %1804 = vmatpush1.msra.mxu0 0.0
        %1805 = vmatprep.subr.mxu0 0.0
        %1806 = vmatpush1.msra.mxu0 0.0
        %1807 = vmatprep.subr.mxu0 0.0
        %1808 = vmatpush1.msra.mxu0 0.0
        %1809 = vmatprep.subr.mxu0 0.0
        %1810 = vmatpush1.msra.mxu0 0.0
        %1811 = vmatprep.subr.mxu0 0.0
        %1812 = vmatpush1.msra.mxu0 0.0
        %1813 = vmatprep.subr.mxu0 0.0
        %1814 = vmatpush1.msra.mxu0 0.0
        %1815 = vmatprep.subr.mxu0 0.0
        %1816 = vmatpush1.msra.mxu0 0.0
        %1817 = vmatprep.subr.mxu0 0.0
        %1818 = vmatpush1.msra.mxu0 0.0
        %1819 = vmatprep.subr.mxu0 0.0
        %1820 = vmatpush1.msra.mxu0 0.0
        %1821 = vmatprep.subr.mxu0 0.0
        %1822 = vmatpush1.msra.mxu0 0.0
        %1823 = vmatprep.subr.mxu0 0.0
        %1824 = vmatpush1.msra.mxu0 0.0
        %1825 = vmatprep.subr.mxu0 0.0
        %1826 = vmatpush1.msra.mxu0 0.0
        %1827 = vmatprep.subr.mxu0 0.0
        %1828 = vmatpush1.msra.mxu0 0.0
        %1829 = vmatprep.subr.mxu0 0.0
        %1830 = vmatpush1.msra.mxu0 0.0
        %1831 = vmatprep.mubr.f32.mxu0 0.0
        %1832 = vmatmul.mubr.f32.gmra.mrb[0].mxu0 %v1765
        %v1833 = vpop.f32.mrb[0].mxu0
        %v1834 = vadd.f32 0.0, %v1833
        %v1835 = vpop.f32.mrb[0].mxu0
        %1836 = vdwg.mxu0
        %v1838 = vsel %vm940, %v1689, 0
        %1840 = vmatprep.subr.mxu0 0.0
        %1841 = vmatpush1.msra.mxu0 %v1334
        %1842 = vmatprep.subr.mxu0 0.0
        %1843 = vmatpush1.msra.mxu0 0.0
        %1844 = vmatprep.subr.mxu0 0.0
        %1845 = vmatpush1.msra.mxu0 0.0
        %1846 = vmatprep.subr.mxu0 0.0
        %1847 = vmatpush1.msra.mxu0 0.0
        %1848 = vmatprep.subr.mxu0 0.0
        %1849 = vmatpush1.msra.mxu0 0.0
        %1850 = vmatprep.subr.mxu0 0.0
        %1851 = vmatpush1.msra.mxu0 0.0
        %1852 = vmatprep.subr.mxu0 0.0
        %1853 = vmatpush1.msra.mxu0 0.0
        %1854 = vmatprep.subr.mxu0 0.0
        %1855 = vmatpush1.msra.mxu0 0.0
        %1856 = vmatprep.subr.mxu0 0.0
        %1857 = vmatpush1.msra.mxu0 0.0
        %1858 = vmatprep.subr.mxu0 0.0
        %1859 = vmatpush1.msra.mxu0 0.0
        %1860 = vmatprep.subr.mxu0 0.0
        %1861 = vmatpush1.msra.mxu0 0.0
        %1862 = vmatprep.subr.mxu0 0.0
        %1863 = vmatpush1.msra.mxu0 0.0
        %1864 = vmatprep.subr.mxu0 0.0
        %1865 = vmatpush1.msra.mxu0 0.0
        %1866 = vmatprep.subr.mxu0 0.0
        %1867 = vmatpush1.msra.mxu0 0.0
        %1868 = vmatprep.subr.mxu0 0.0
        %1869 = vmatpush1.msra.mxu0 0.0
        %1870 = vmatprep.subr.mxu0 0.0
        %1871 = vmatpush1.msra.mxu0 0.0
        %1872 = vmatprep.subr.mxu0 0.0
        %1873 = vmatpush1.msra.mxu0 0.0
        %1874 = vmatprep.subr.mxu0 0.0
        %1875 = vmatpush1.msra.mxu0 0.0
        %1876 = vmatprep.subr.mxu0 0.0
        %1877 = vmatpush1.msra.mxu0 0.0
        %1878 = vmatprep.subr.mxu0 0.0
        %1879 = vmatpush1.msra.mxu0 0.0
        %1880 = vmatprep.subr.mxu0 0.0
        %1881 = vmatpush1.msra.mxu0 0.0
        %1882 = vmatprep.subr.mxu0 0.0
        %1883 = vmatpush1.msra.mxu0 0.0
        %1884 = vmatprep.subr.mxu0 0.0
        %1885 = vmatpush1.msra.mxu0 0.0
        %1886 = vmatprep.subr.mxu0 0.0
        %1887 = vmatpush1.msra.mxu0 0.0
        %1888 = vmatprep.subr.mxu0 0.0
        %1889 = vmatpush1.msra.mxu0 0.0
        %1890 = vmatprep.subr.mxu0 0.0
        %1891 = vmatpush1.msra.mxu0 0.0
        %1892 = vmatprep.subr.mxu0 0.0
        %1893 = vmatpush1.msra.mxu0 0.0
        %1894 = vmatprep.subr.mxu0 0.0
        %1895 = vmatpush1.msra.mxu0 0.0
        %1896 = vmatprep.subr.mxu0 0.0
        %1897 = vmatpush1.msra.mxu0 0.0
        %1898 = vmatprep.subr.mxu0 0.0
        %1899 = vmatpush1.msra.mxu0 0.0
        %1900 = vmatprep.subr.mxu0 0.0
        %1901 = vmatpush1.msra.mxu0 0.0
        %1902 = vmatprep.subr.mxu0 0.0
        %1903 = vmatpush1.msra.mxu0 0.0
        %1904 = vmatprep.mubr.f32.mxu0 0.0
        %1905 = vmatmul.mubr.f32.gmra.mrb[0].mxu0 %v1838
        %v1906 = vpop.f32.mrb[0].mxu0
        %v1907 = vadd.f32 0.0, %v1906
        %v1908 = vpop.f32.mrb[0].mxu0
        %1909 = vdwg.mxu0
        %v1911 = vsel %vm940, %v1690, 0
        %1913 = vmatprep.subr.mxu0 0.0
        %1914 = vmatpush1.msra.mxu0 %v1336
        %1915 = vmatprep.subr.mxu0 0.0
        %1916 = vmatpush1.msra.mxu0 0.0
        %1917 = vmatprep.subr.mxu0 0.0
        %1918 = vmatpush1.msra.mxu0 0.0
        %1919 = vmatprep.subr.mxu0 0.0
        %1920 = vmatpush1.msra.mxu0 0.0
        %1921 = vmatprep.subr.mxu0 0.0
        %1922 = vmatpush1.msra.mxu0 0.0
        %1923 = vmatprep.subr.mxu0 0.0
        %1924 = vmatpush1.msra.mxu0 0.0
        %1925 = vmatprep.subr.mxu0 0.0
        %1926 = vmatpush1.msra.mxu0 0.0
        %1927 = vmatprep.subr.mxu0 0.0
        %1928 = vmatpush1.msra.mxu0 0.0
        %1929 = vmatprep.subr.mxu0 0.0
        %1930 = vmatpush1.msra.mxu0 0.0
        %1931 = vmatprep.subr.mxu0 0.0
        %1932 = vmatpush1.msra.mxu0 0.0
        %1933 = vmatprep.subr.mxu0 0.0
        %1934 = vmatpush1.msra.mxu0 0.0
        %1935 = vmatprep.subr.mxu0 0.0
        %1936 = vmatpush1.msra.mxu0 0.0
        %1937 = vmatprep.subr.mxu0 0.0
        %1938 = vmatpush1.msra.mxu0 0.0
        %1939 = vmatprep.subr.mxu0 0.0
        %1940 = vmatpush1.msra.mxu0 0.0
        %1941 = vmatprep.subr.mxu0 0.0
        %1942 = vmatpush1.msra.mxu0 0.0
        %1943 = vmatprep.subr.mxu0 0.0
        %1944 = vmatpush1.msra.mxu0 0.0
        %1945 = vmatprep.subr.mxu0 0.0
        %1946 = vmatpush1.msra.mxu0 0.0
        %1947 = vmatprep.subr.mxu0 0.0
        %1948 = vmatpush1.msra.mxu0 0.0
        %1949 = vmatprep.subr.mxu0 0.0
        %1950 = vmatpush1.msra.mxu0 0.0
        %1951 = vmatprep.subr.mxu0 0.0
        %1952 = vmatpush1.msra.mxu0 0.0
        %1953 = vmatprep.subr.mxu0 0.0
        %1954 = vmatpush1.msra.mxu0 0.0
        %1955 = vmatprep.subr.mxu0 0.0
        %1956 = vmatpush1.msra.mxu0 0.0
        %1957 = vmatprep.subr.mxu0 0.0
        %1958 = vmatpush1.msra.mxu0 0.0
        %1959 = vmatprep.subr.mxu0 0.0
        %1960 = vmatpush1.msra.mxu0 0.0
        %1961 = vmatprep.subr.mxu0 0.0
        %1962 = vmatpush1.msra.mxu0 0.0
        %1963 = vmatprep.subr.mxu0 0.0
        %1964 = vmatpush1.msra.mxu0 0.0
        %1965 = vmatprep.subr.mxu0 0.0
        %1966 = vmatpush1.msra.mxu0 0.0
        %1967 = vmatprep.subr.mxu0 0.0
        %1968 = vmatpush1.msra.mxu0 0.0
        %1969 = vmatprep.subr.mxu0 0.0
        %1970 = vmatpush1.msra.mxu0 0.0
        %1971 = vmatprep.subr.mxu0 0.0
        %1972 = vmatpush1.msra.mxu0 0.0
        %1973 = vmatprep.subr.mxu0 0.0
        %1974 = vmatpush1.msra.mxu0 0.0
        %1975 = vmatprep.subr.mxu0 0.0
        %1976 = vmatpush1.msra.mxu0 0.0
        %1977 = vmatprep.mubr.f32.mxu0 0.0
        %1978 = vmatmul.mubr.f32.gmra.mrb[0].mxu0 %v1911
        %v1979 = vpop.f32.mrb[0].mxu0
        %v1980 = vadd.f32 0.0, %v1979
        %v1981 = vpop.f32.mrb[0].mxu0
        %1982 = vdwg.mxu0
        %1985 = vrot.lane.b32.xlu0 %v1907, 32
        %v1986 = vpop.permute.xlu0 %1985
        %1987 = vrot.lane.b32.xlu0 %v1980, 32
        %v1988 = vpop.permute.xlu0 %1987
        %v1991 = vsel %vm1241, %v1761, %v1986
        %v1992 = vsel %vm1241, %v1834, %v1988
        %v1993 = vld [vmem:[%s5] sm:$0xff]
        %v1994 = vld [vmem:[%s5 + $0x8] sm:$0xff]
        %v1995 = vld [vmem:[%s5 + $0x10] sm:$0xff]
        %v1996 = vld [vmem:[%s5 + $0x18] sm:$0xff]
        %v1997 = vld [vmem:[%s5 + $0x20] sm:$0xff]
        %v1998 = vld [vmem:[%s5 + $0x28] sm:$0xff]
        %v1999 = vld [vmem:[%s5 + $0x30] sm:$0xff]
        %v2000 = vld [vmem:[%s5 + $0x38] sm:$0xff]
        %v2001 = vld [vmem:[%s6] sm:$0x1]
        %v2003 = vlaneseq
        %v2004 = vshrl.u32 %v2003, 7
        %v2005 = vsub.s32 0, %v2004
        %v2006 = vrot.slane %v2001, %v2005
        %vm2008 = vcmask 523264
        %v2010 = vsel %vm2008, %v1991, 0
        %v2013 = vsel %vm2008, %v1992, 0
        %2015 = vmatprep.subr.mxu0 0.0
        %2016 = vmatpush1.msra.mxu0 %v1993
        %2017 = vmatprep.subr.mxu0 0.0
        %2018 = vmatpush1.msra.mxu0 %v1994
        %2019 = vmatprep.subr.mxu0 0.0
        %2020 = vmatpush1.msra.mxu0 %v1995
        %2021 = vmatprep.subr.mxu0 0.0
        %2022 = vmatpush1.msra.mxu0 %v1996
        %2023 = vmatprep.subr.mxu0 0.0
        %2024 = vmatpush1.msra.mxu0 %v1997
        %2025 = vmatprep.subr.mxu0 0.0
        %2026 = vmatpush1.msra.mxu0 %v1998
        %2027 = vmatprep.subr.mxu0 0.0
        %2028 = vmatpush1.msra.mxu0 %v1999
        %2029 = vmatprep.subr.mxu0 0.0
        %2030 = vmatpush1.msra.mxu0 %v2000
        %2031 = vmatprep.subr.mxu0 0.0
        %2032 = vmatpush1.msra.mxu0 0.0
        %2033 = vmatprep.subr.mxu0 0.0
        %2034 = vmatpush1.msra.mxu0 0.0
        %2035 = vmatprep.subr.mxu0 0.0
        %2036 = vmatpush1.msra.mxu0 0.0
        %2037 = vmatprep.subr.mxu0 0.0
        %2038 = vmatpush1.msra.mxu0 0.0
        %2039 = vmatprep.subr.mxu0 0.0
        %2040 = vmatpush1.msra.mxu0 0.0
        %2041 = vmatprep.subr.mxu0 0.0
        %2042 = vmatpush1.msra.mxu0 0.0
        %2043 = vmatprep.subr.mxu0 0.0
        %2044 = vmatpush1.msra.mxu0 0.0
        %2045 = vmatprep.subr.mxu0 0.0
        %2046 = vmatpush1.msra.mxu0 0.0
        %2047 = vmatprep.subr.mxu0 0.0
        %2048 = vmatpush1.msra.mxu0 0.0
        %2049 = vmatprep.subr.mxu0 0.0
        %2050 = vmatpush1.msra.mxu0 0.0
        %2051 = vmatprep.subr.mxu0 0.0
        %2052 = vmatpush1.msra.mxu0 0.0
        %2053 = vmatprep.subr.mxu0 0.0
        %2054 = vmatpush1.msra.mxu0 0.0
        %2055 = vmatprep.subr.mxu0 0.0
        %2056 = vmatpush1.msra.mxu0 0.0
        %2057 = vmatprep.subr.mxu0 0.0
        %2058 = vmatpush1.msra.mxu0 0.0
        %2059 = vmatprep.subr.mxu0 0.0
        %2060 = vmatpush1.msra.mxu0 0.0
        %2061 = vmatprep.subr.mxu0 0.0
        %2062 = vmatpush1.msra.mxu0 0.0
        %2063 = vmatprep.subr.mxu0 0.0
        %2064 = vmatpush1.msra.mxu0 0.0
        %2065 = vmatprep.subr.mxu0 0.0
        %2066 = vmatpush1.msra.mxu0 0.0
        %2067 = vmatprep.subr.mxu0 0.0
        %2068 = vmatpush1.msra.mxu0 0.0
        %2069 = vmatprep.subr.mxu0 0.0
        %2070 = vmatpush1.msra.mxu0 0.0
        %2071 = vmatprep.subr.mxu0 0.0
        %2072 = vmatpush1.msra.mxu0 0.0
        %2073 = vmatprep.subr.mxu0 0.0
        %2074 = vmatpush1.msra.mxu0 0.0
        %2075 = vmatprep.subr.mxu0 0.0
        %2076 = vmatpush1.msra.mxu0 0.0
        %2077 = vmatprep.subr.mxu0 0.0
        %2078 = vmatpush1.msra.mxu0 0.0
        %2079 = vmatprep.mubr.f32.mxu0 0.0
        %2080 = vmatmul.mubr.f32.gmra.mrb[0].mxu0 %v2010
        %v2081 = vpop.f32.mrb[0].mxu0
        %v2082 = vadd.f32 %v2006, %v2081
        %v2083 = vpop.f32.mrb[0].mxu0
        %2084 = vmatprep.mubr.f32.mxu0 0.0
        %2085 = vmatmul.mubr.f32.gmra.mrb[0].mxu0 %v2013
        %v2086 = vpop.f32.mrb[0].mxu0
        %v2087 = vadd.f32 %v2006, %v2086
        %v2088 = vpop.f32.mrb[0].mxu0
        %2089 = vdwg.mxu0
        %v2090 = vadd.f32 %v2082, %v1231
        %v2091 = vadd.f32 %v2087, %v1232
        %v2092 = vld [vmem:[%s7] sm:$0x1]
        %v2093 = vld [vmem:[%s8] sm:$0x1]
        %v2094 = vsel %vm1241, %v2090, 0.0
        %2095 = vadd.xlane.f32.xlu0 %v2094
        %v2096 = vpop.xlane.xlu0 %2095
        %v2097 = vsel %vm1241, %v2091, 0.0
        %2098 = vadd.xlane.f32.xlu0 %v2097
        %v2099 = vpop.xlane.xlu0 %2098
        %v2100 = vrcp.pop 32.0
        %v2101 = vmul.f32 %v2096, %v2100
        %v2102 = vmul.f32 %v2099, %v2100
        %v2103 = vsub.f32 %v2090, %v2101
        %v2104 = vsub.f32 %v2091, %v2102
        %v2105 = vmul.f32 %v2103, %v2103
        %v2106 = vmul.f32 %v2104, %v2104
        %v2107 = vsel %vm1241, %v2105, 0.0
        %2108 = vadd.xlane.f32.xlu0 %v2107
        %v2109 = vpop.xlane.xlu0 %2108
        %v2110 = vsel %vm1241, %v2106, 0.0
        %2111 = vadd.xlane.f32.xlu0 %v2110
        %v2112 = vpop.xlane.xlu0 %2111
        %v2113 = vmul.f32 %v2109, %v2100
        %v2114 = vmul.f32 %v2112, %v2100
        %v2115 = vadd.f32 %v2113, 1e-05
        %v2116 = vadd.f32 %v2114, 1e-05
        %v2117 = vrsqrt.pop %v2115
        %v2118 = vrsqrt.pop %v2116
        %v2119 = vmul.f32 %v2103, %v2117
        %v2120 = vmul.f32 %v2104, %v2118
        %v2122 = vlaneseq
        %v2123 = vshrl.u32 %v2122, 7
        %v2124 = vsub.s32 0, %v2123
        %v2125 = vrot.slane %v2092, %v2124
        %v2127 = vmul.f32 %v2119, %v2125
        %v2128 = vmul.f32 %v2120, %v2125
        %v2130 = vlaneseq
        %v2131 = vshrl.u32 %v2130, 7
        %v2132 = vsub.s32 0, %v2131
        %v2133 = vrot.slane %v2093, %v2132
        %v2135 = vadd.f32 %v2127, %v2133
        %v2136 = vadd.f32 %v2128, %v2133
        %v2137 = vld [vmem:[%s9] sm:$0xff]
        %v2138 = vld [vmem:[%s9 + $0x8] sm:$0xff]
        %v2139 = vld [vmem:[%s9 + $0x10] sm:$0xff]
        %v2140 = vld [vmem:[%s9 + $0x18] sm:$0xff]
        %v2141 = vld [vmem:[%s10] sm:$0x1]
        %v2143 = vlaneseq
        %v2144 = vshrl.u32 %v2143, 7
        %v2145 = vsub.s32 0, %v2144
        %v2146 = vrot.slane %v2141, %v2145
        %v2149 = vsel %vm1241, %v2135, 0
        %v2152 = vsel %vm1241, %v2136, 0
        %2154 = vmatprep.subr.mxu0 0.0
        %2155 = vmatpush1.msra.mxu0 %v2137
        %2156 = vmatprep.subr.mxu0 0.0
        %2157 = vmatpush1.msra.mxu0 %v2138
        %2158 = vmatprep.subr.mxu0 0.0
        %2159 = vmatpush1.msra.mxu0 %v2139
        %2160 = vmatprep.subr.mxu0 0.0
        %2161 = vmatpush1.msra.mxu0 %v2140
        %2162 = vmatprep.subr.mxu0 0.0
        %2163 = vmatpush1.msra.mxu0 0.0
        %2164 = vmatprep.subr.mxu0 0.0
        %2165 = vmatpush1.msra.mxu0 0.0
        %2166 = vmatprep.subr.mxu0 0.0
        %2167 = vmatpush1.msra.mxu0 0.0
        %2168 = vmatprep.subr.mxu0 0.0
        %2169 = vmatpush1.msra.mxu0 0.0
        %2170 = vmatprep.subr.mxu0 0.0
        %2171 = vmatpush1.msra.mxu0 0.0
        %2172 = vmatprep.subr.mxu0 0.0
        %2173 = vmatpush1.msra.mxu0 0.0
        %2174 = vmatprep.subr.mxu0 0.0
        %2175 = vmatpush1.msra.mxu0 0.0
        %2176 = vmatprep.subr.mxu0 0.0
        %2177 = vmatpush1.msra.mxu0 0.0
        %2178 = vmatprep.subr.mxu0 0.0
        %2179 = vmatpush1.msra.mxu0 0.0
        %2180 = vmatprep.subr.mxu0 0.0
        %2181 = vmatpush1.msra.mxu0 0.0
        %2182 = vmatprep.subr.mxu0 0.0
        %2183 = vmatpush1.msra.mxu0 0.0
        %2184 = vmatprep.subr.mxu0 0.0
        %2185 = vmatpush1.msra.mxu0 0.0
        %2186 = vmatprep.subr.mxu0 0.0
        %2187 = vmatpush1.msra.mxu0 0.0
        %2188 = vmatprep.subr.mxu0 0.0
        %2189 = vmatpush1.msra.mxu0 0.0
        %2190 = vmatprep.subr.mxu0 0.0
        %2191 = vmatpush1.msra.mxu0 0.0
        %2192 = vmatprep.subr.mxu0 0.0
        %2193 = vmatpush1.msra.mxu0 0.0
        %2194 = vmatprep.subr.mxu0 0.0
        %2195 = vmatpush1.msra.mxu0 0.0
        %2196 = vmatprep.subr.mxu0 0.0
        %2197 = vmatpush1.msra.mxu0 0.0
        %2198 = vmatprep.subr.mxu0 0.0
        %2199 = vmatpush1.msra.mxu0 0.0
        %2200 = vmatprep.subr.mxu0 0.0
        %2201 = vmatpush1.msra.mxu0 0.0
        %2202 = vmatprep.subr.mxu0 0.0
        %2203 = vmatpush1.msra.mxu0 0.0
        %2204 = vmatprep.subr.mxu0 0.0
        %2205 = vmatpush1.msra.mxu0 0.0
        %2206 = vmatprep.subr.mxu0 0.0
        %2207 = vmatpush1.msra.mxu0 0.0
        %2208 = vmatprep.subr.mxu0 0.0
        %2209 = vmatpush1.msra.mxu0 0.0
        %2210 = vmatprep.subr.mxu0 0.0
        %2211 = vmatpush1.msra.mxu0 0.0
        %2212 = vmatprep.subr.mxu0 0.0
        %2213 = vmatpush1.msra.mxu0 0.0
        %2214 = vmatprep.subr.mxu0 0.0
        %2215 = vmatpush1.msra.mxu0 0.0
        %2216 = vmatprep.subr.mxu0 0.0
        %2217 = vmatpush1.msra.mxu0 0.0
        %2218 = vmatprep.mubr.f32.mxu0 0.0
        %2219 = vmatmul.mubr.f32.gmra.mrb[0].mxu0 %v2149
        %v2220 = vpop.f32.mrb[0].mxu0
        %v2221 = vadd.f32 %v2146, %v2220
        %v2222 = vpop.f32.mrb[0].mxu0
        %2223 = vmatprep.mubr.f32.mxu0 0.0
        %2224 = vmatmul.mubr.f32.gmra.mrb[0].mxu0 %v2152
        %v2225 = vpop.f32.mrb[0].mxu0
        %v2226 = vadd.f32 %v2146, %v2225
        %v2227 = vpop.f32.mrb[0].mxu0
        %2228 = vdwg.mxu0
        %v2229 = vmax.f32 %v2221, 0.0
        %v2230 = vmax.f32 %v2226, 0.0
        %v2231 = vld [vmem:[%s11] sm:$0xff]
        %v2232 = vld [vmem:[%s11 + $0x8] sm:$0xff]
        %v2233 = vld [vmem:[%s11 + $0x10] sm:$0xff]
        %v2234 = vld [vmem:[%s11 + $0x18] sm:$0xff]
        %v2235 = vld [vmem:[%s11 + $0x20] sm:$0xff]
        %v2236 = vld [vmem:[%s11 + $0x28] sm:$0xff]
        %v2237 = vld [vmem:[%s11 + $0x30] sm:$0xff]
        %v2238 = vld [vmem:[%s11 + $0x38] sm:$0xff]
        %v2239 = vld [vmem:[%s11 + $0x40] sm:$0xff]
        %v2240 = vld [vmem:[%s11 + $0x48] sm:$0xff]
        %v2241 = vld [vmem:[%s11 + $0x50] sm:$0xff]
        %v2242 = vld [vmem:[%s11 + $0x58] sm:$0xff]
        %v2243 = vld [vmem:[%s11 + $0x60] sm:$0xff]
        %v2244 = vld [vmem:[%s11 + $0x68] sm:$0xff]
        %v2245 = vld [vmem:[%s11 + $0x70] sm:$0xff]
        %v2246 = vld [vmem:[%s11 + $0x78] sm:$0xff]
        %v2247 = vld [vmem:[%s12] sm:$0x1]
        %v2249 = vlaneseq
        %v2250 = vshrl.u32 %v2249, 7
        %v2251 = vsub.s32 0, %v2250
        %v2252 = vrot.slane %v2247, %v2251
        %2254 = vmatprep.subr.mxu0 0.0
        %2255 = vmatpush1.msra.mxu0 %v2231
        %2256 = vmatprep.subr.mxu0 0.0
        %2257 = vmatpush1.msra.mxu0 %v2232
        %2258 = vmatprep.subr.mxu0 0.0
        %2259 = vmatpush1.msra.mxu0 %v2233
        %2260 = vmatprep.subr.mxu0 0.0
        %2261 = vmatpush1.msra.mxu0 %v2234
        %2262 = vmatprep.subr.mxu0 0.0
        %2263 = vmatpush1.msra.mxu0 %v2235
        %2264 = vmatprep.subr.mxu0 0.0
        %2265 = vmatpush1.msra.mxu0 %v2236
        %2266 = vmatprep.subr.mxu0 0.0
        %2267 = vmatpush1.msra.mxu0 %v2237
        %2268 = vmatprep.subr.mxu0 0.0
        %2269 = vmatpush1.msra.mxu0 %v2238
        %2270 = vmatprep.subr.mxu0 0.0
        %2271 = vmatpush1.msra.mxu0 %v2239
        %2272 = vmatprep.subr.mxu0 0.0
        %2273 = vmatpush1.msra.mxu0 %v2240
        %2274 = vmatprep.subr.mxu0 0.0
        %2275 = vmatpush1.msra.mxu0 %v2241
        %2276 = vmatprep.subr.mxu0 0.0
        %2277 = vmatpush1.msra.mxu0 %v2242
        %2278 = vmatprep.subr.mxu0 0.0
        %2279 = vmatpush1.msra.mxu0 %v2243
        %2280 = vmatprep.subr.mxu0 0.0
        %2281 = vmatpush1.msra.mxu0 %v2244
        %2282 = vmatprep.subr.mxu0 0.0
        %2283 = vmatpush1.msra.mxu0 %v2245
        %2284 = vmatprep.subr.mxu0 0.0
        %2285 = vmatpush1.msra.mxu0 %v2246
        %2286 = vmatprep.subr.mxu0 0.0
        %2287 = vmatpush1.msra.mxu0 0.0
        %2288 = vmatprep.subr.mxu0 0.0
        %2289 = vmatpush1.msra.mxu0 0.0
        %2290 = vmatprep.subr.mxu0 0.0
        %2291 = vmatpush1.msra.mxu0 0.0
        %2292 = vmatprep.subr.mxu0 0.0
        %2293 = vmatpush1.msra.mxu0 0.0
        %2294 = vmatprep.subr.mxu0 0.0
        %2295 = vmatpush1.msra.mxu0 0.0
        %2296 = vmatprep.subr.mxu0 0.0
        %2297 = vmatpush1.msra.mxu0 0.0
        %2298 = vmatprep.subr.mxu0 0.0
        %2299 = vmatpush1.msra.mxu0 0.0
        %2300 = vmatprep.subr.mxu0 0.0
        %2301 = vmatpush1.msra.mxu0 0.0
        %2302 = vmatprep.subr.mxu0 0.0
        %2303 = vmatpush1.msra.mxu0 0.0
        %2304 = vmatprep.subr.mxu0 0.0
        %2305 = vmatpush1.msra.mxu0 0.0
        %2306 = vmatprep.subr.mxu0 0.0
        %2307 = vmatpush1.msra.mxu0 0.0
        %2308 = vmatprep.subr.mxu0 0.0
        %2309 = vmatpush1.msra.mxu0 0.0
        %2310 = vmatprep.subr.mxu0 0.0
        %2311 = vmatpush1.msra.mxu0 0.0
        %2312 = vmatprep.subr.mxu0 0.0
        %2313 = vmatpush1.msra.mxu0 0.0
        %2314 = vmatprep.subr.mxu0 0.0
        %2315 = vmatpush1.msra.mxu0 0.0
        %2316 = vmatprep.subr.mxu0 0.0
        %2317 = vmatpush1.msra.mxu0 0.0
        %2318 = vmatprep.mubr.f32.mxu0 0.0
        %2319 = vmatmul.mubr.f32.gmra.mrb[0].mxu0 %v2229
        %v2320 = vpop.f32.mrb[0].mxu0
        %v2321 = vadd.f32 %v2252, %v2320
        %v2322 = vpop.f32.mrb[0].mxu0
        %2323 = vmatprep.mubr.f32.mxu0 0.0
        %2324 = vmatmul.mubr.f32.gmra.mrb[0].mxu0 %v2230
        %v2325 = vpop.f32.mrb[0].mxu0
        %v2326 = vadd.f32 %v2252, %v2325
        %v2327 = vpop.f32.mrb[0].mxu0
        %2328 = vdwg.mxu0
        %v2329 = vadd.f32 %v2321, %v2135
        %v2330 = vadd.f32 %v2326, %v2136
        %v2331 = vld [vmem:[%s13] sm:$0x1]
        %v2332 = vld [vmem:[%s14] sm:$0x1]
        %v2333 = vsel %vm1241, %v2329, 0.0
        %2334 = vadd.xlane.f32.xlu0 %v2333
        %v2335 = vpop.xlane.xlu0 %2334
        %v2336 = vsel %vm1241, %v2330, 0.0
        %2337 = vadd.xlane.f32.xlu0 %v2336
        %v2338 = vpop.xlane.xlu0 %2337
        %v2339 = vmul.f32 %v2335, %v2100
        %v2340 = vmul.f32 %v2338, %v2100
        %v2341 = vsub.f32 %v2329, %v2339
        %v2342 = vsub.f32 %v2330, %v2340
        %v2343 = vmul.f32 %v2341, %v2341
        %v2344 = vmul.f32 %v2342, %v2342
        %v2345 = vsel %vm1241, %v2343, 0.0
        %2346 = vadd.xlane.f32.xlu0 %v2345
        %v2347 = vpop.xlane.xlu0 %2346
        %v2348 = vsel %vm1241, %v2344, 0.0
        %2349 = vadd.xlane.f32.xlu0 %v2348
        %v2350 = vpop.xlane.xlu0 %2349
        %v2351 = vmul.f32 %v2347, %v2100
        %v2352 = vmul.f32 %v2350, %v2100
        %v2353 = vadd.f32 %v2351, 1e-05
        %v2354 = vadd.f32 %v2352, 1e-05
        %v2355 = vrsqrt.pop %v2353
        %v2356 = vrsqrt.pop %v2354
        %v2357 = vmul.f32 %v2341, %v2355
        %v2358 = vmul.f32 %v2342, %v2356
        %v2360 = vlaneseq
        %v2361 = vshrl.u32 %v2360, 7
        %v2362 = vsub.s32 0, %v2361
        %v2363 = vrot.slane %v2331, %v2362
        %v2365 = vmul.f32 %v2357, %v2363
        %v2366 = vmul.f32 %v2358, %v2363
        %v2368 = vlaneseq
        %v2369 = vshrl.u32 %v2368, 7
        %v2370 = vsub.s32 0, %v2369
        %v2371 = vrot.slane %v2332, %v2370
        %v2373 = vadd.f32 %v2365, %v2371
        %v2374 = vadd.f32 %v2366, %v2371
        %s2375 = scalar_lea.vmem %s4, 64
        %v2376 = vld [vmem:[%s2375] sm:$0xff]
        %v2377 = vld [vmem:[%s2375 + $0x8] sm:$0xff]
        %v2378 = vld [vmem:[%s2375 + $0x10] sm:$0xff]
        %v2379 = vld [vmem:[%s2375 + $0x18] sm:$0xff]
        %v2380 = vld [vmem:[%s2375 + $0x20] sm:$0xff]
        %v2381 = vld [vmem:[%s2375 + $0x28] sm:$0xff]
        %v2382 = vld [vmem:[%s2375 + $0x30] sm:$0xff]
        %v2383 = vld [vmem:[%s2375 + $0x38] sm:$0xff]
        %v2385 = vsel %vm1241, %v2373, 0
        %v2388 = vsel %vm1241, %v2374, 0
        %2390 = vmatprep.subr.mxu0 %v2377
        %2391 = vmatpush1.msra.mxu0 %v2376
        %2392 = vmatprep.subr.mxu0 %v2379
        %2393 = vmatpush1.msra.mxu0 %v2378
        %2394 = vmatprep.subr.mxu0 %v2381
        %2395 = vmatpush1.msra.mxu0 %v2380
        %2396 = vmatprep.subr.mxu0 %v2383
        %2397 = vmatpush1.msra.mxu0 %v2382
        %2398 = vmatprep.subr.mxu0 0.0
        %2399 = vmatpush1.msra.mxu0 0.0
        %2400 = vmatprep.subr.mxu0 0.0
        %2401 = vmatpush1.msra.mxu0 0.0
        %2402 = vmatprep.subr.mxu0 0.0
        %2403 = vmatpush1.msra.mxu0 0.0
        %2404 = vmatprep.subr.mxu0 0.0
        %2405 = vmatpush1.msra.mxu0 0.0
        %2406 = vmatprep.subr.mxu0 0.0
        %2407 = vmatpush1.msra.mxu0 0.0
        %2408 = vmatprep.subr.mxu0 0.0
        %2409 = vmatpush1.msra.mxu0 0.0
        %2410 = vmatprep.subr.mxu0 0.0
        %2411 = vmatpush1.msra.mxu0 0.0
        %2412 = vmatprep.subr.mxu0 0.0
        %2413 = vmatpush1.msra.mxu0 0.0
        %2414 = vmatprep.subr.mxu0 0.0
        %2415 = vmatpush1.msra.mxu0 0.0
        %2416 = vmatprep.subr.mxu0 0.0
        %2417 = vmatpush1.msra.mxu0 0.0
        %2418 = vmatprep.subr.mxu0 0.0
        %2419 = vmatpush1.msra.mxu0 0.0
        %2420 = vmatprep.subr.mxu0 0.0
        %2421 = vmatpush1.msra.mxu0 0.0
        %2422 = vmatprep.subr.mxu0 0.0
        %2423 = vmatpush1.msra.mxu0 0.0
        %2424 = vmatprep.subr.mxu0 0.0
        %2425 = vmatpush1.msra.mxu0 0.0
        %2426 = vmatprep.subr.mxu0 0.0
        %2427 = vmatpush1.msra.mxu0 0.0
        %2428 = vmatprep.subr.mxu0 0.0
        %2429 = vmatpush1.msra.mxu0 0.0
        %2430 = vmatprep.subr.mxu0 0.0
        %2431 = vmatpush1.msra.mxu0 0.0
        %2432 = vmatprep.subr.mxu0 0.0
        %2433 = vmatpush1.msra.mxu0 0.0
        %2434 = vmatprep.subr.mxu0 0.0
        %2435 = vmatpush1.msra.mxu0 0.0
        %2436 = vmatprep.subr.mxu0 0.0
        %2437 = vmatpush1.msra.mxu0 0.0
        %2438 = vmatprep.subr.mxu0 0.0
        %2439 = vmatpush1.msra.mxu0 0.0
        %2440 = vmatprep.subr.mxu0 0.0
        %2441 = vmatpush1.msra.mxu0 0.0
        %2442 = vmatprep.subr.mxu0 0.0
        %2443 = vmatpush1.msra.mxu0 0.0
        %2444 = vmatprep.subr.mxu0 0.0
        %2445 = vmatpush1.msra.mxu0 0.0
        %2446 = vmatprep.subr.mxu0 0.0
        %2447 = vmatpush1.msra.mxu0 0.0
        %2448 = vmatprep.subr.mxu0 0.0
        %2449 = vmatpush1.msra.mxu0 0.0
        %2450 = vmatprep.subr.mxu0 0.0
        %2451 = vmatpush1.msra.mxu0 0.0
        %2452 = vmatprep.subr.mxu0 0.0
        %2453 = vmatpush1.msra.mxu0 0.0
        %2454 = vmatprep.mubr.f32.mxu0 0.0
        %2455 = vmatmul.mubr.f32.gmra.mrb[0].mxu0 %v2385
        %v2456 = vpop.f32.mrb[0].mxu0
        %v2457 = vadd.f32 0.0, %v2456
        %v2458 = vpop.f32.mrb[0].mxu0
        %v2459 = vadd.f32 0.0, %v2458
        %2460 = vmatprep.mubr.f32.mxu0 0.0
        %2461 = vmatmul.mubr.f32.gmra.mrb[0].mxu0 %v2388
        %v2462 = vpop.f32.mrb[0].mxu0
        %v2463 = vadd.f32 0.0, %v2462
        %v2464 = vpop.f32.mrb[0].mxu0
        %v2465 = vadd.f32 0.0, %v2464
        %2466 = vdwg.mxu0
        %2469 = vrot.lane.b32.xlu0 %v2457, 96
        %v2470 = vpop.permute.xlu0 %2469
        %2471 = vrot.lane.b32.xlu0 %v2463, 96
        %v2472 = vpop.permute.xlu0 %2471
        %2475 = vrot.lane.b32.xlu0 %v2459, 96
        %v2476 = vpop.permute.xlu0 %2475
        %2477 = vrot.lane.b32.xlu0 %v2465, 96
        %v2478 = vpop.permute.xlu0 %2477
        %2481 = vrot.lane.b32.xlu0 %v2457, 64
        %v2482 = vpop.permute.xlu0 %2481
        %v2483 = vsel %vm1241, %v2457, 0
        %v2485 = vsel %vm1241, %v2482, 0
        %2487 = vmatprep.subr.mxu0 0.0
        %2488 = vmatpush1.xpose.msra.mxu0 %v2485
        %2489 = vmatprep.subr.mxu0 0.0
        %2490 = vmatpush1.xpose.msra.mxu0 0.0
        %2491 = vmatprep.subr.mxu0 0.0
        %2492 = vmatpush1.xpose.msra.mxu0 0.0
        %2493 = vmatprep.subr.mxu0 0.0
        %2494 = vmatpush1.xpose.msra.mxu0 0.0
        %2495 = vmatprep.subr.mxu0 0.0
        %2496 = vmatpush1.xpose.msra.mxu0 0.0
        %2497 = vmatprep.subr.mxu0 0.0
        %2498 = vmatpush1.xpose.msra.mxu0 0.0
        %2499 = vmatprep.subr.mxu0 0.0
        %2500 = vmatpush1.xpose.msra.mxu0 0.0
        %2501 = vmatprep.subr.mxu0 0.0
        %2502 = vmatpush1.xpose.msra.mxu0 0.0
        %2503 = vmatprep.subr.mxu0 0.0
        %2504 = vmatpush1.xpose.msra.mxu0 0.0
        %2505 = vmatprep.subr.mxu0 0.0
        %2506 = vmatpush1.xpose.msra.mxu0 0.0
        %2507 = vmatprep.subr.mxu0 0.0
        %2508 = vmatpush1.xpose.msra.mxu0 0.0
        %2509 = vmatprep.subr.mxu0 0.0
        %2510 = vmatpush1.xpose.msra.mxu0 0.0
        %2511 = vmatprep.subr.mxu0 0.0
        %2512 = vmatpush1.xpose.msra.mxu0 0.0
        %2513 = vmatprep.subr.mxu0 0.0
        %2514 = vmatpush1.xpose.msra.mxu0 0.0
        %2515 = vmatprep.subr.mxu0 0.0
        %2516 = vmatpush1.xpose.msra.mxu0 0.0
        %2517 = vmatprep.subr.mxu0 0.0
        %2518 = vmatpush1.xpose.msra.mxu0 0.0
        %2519 = vmatprep.subr.mxu0 0.0
        %2520 = vmatpush1.xpose.msra.mxu0 0.0
        %2521 = vmatprep.subr.mxu0 0.0
        %2522 = vmatpush1.xpose.msra.mxu0 0.0
        %2523 = vmatprep.subr.mxu0 0.0
        %2524 = vmatpush1.xpose.msra.mxu0 0.0
        %2525 = vmatprep.subr.mxu0 0.0
        %2526 = vmatpush1.xpose.msra.mxu0 0.0
        %2527 = vmatprep.subr.mxu0 0.0
        %2528 = vmatpush1.xpose.msra.mxu0 0.0
        %2529 = vmatprep.subr.mxu0 0.0
        %2530 = vmatpush1.xpose.msra.mxu0 0.0
        %2531 = vmatprep.subr.mxu0 0.0
        %2532 = vmatpush1.xpose.msra.mxu0 0.0
        %2533 = vmatprep.subr.mxu0 0.0
        %2534 = vmatpush1.xpose.msra.mxu0 0.0
        %2535 = vmatprep.subr.mxu0 0.0
        %2536 = vmatpush1.xpose.msra.mxu0 0.0
        %2537 = vmatprep.subr.mxu0 0.0
        %2538 = vmatpush1.xpose.msra.mxu0 0.0
        %2539 = vmatprep.subr.mxu0 0.0
        %2540 = vmatpush1.xpose.msra.mxu0 0.0
        %2541 = vmatprep.subr.mxu0 0.0
        %2542 = vmatpush1.xpose.msra.mxu0 0.0
        %2543 = vmatprep.subr.mxu0 0.0
        %2544 = vmatpush1.xpose.msra.mxu0 0.0
        %2545 = vmatprep.subr.mxu0 0.0
        %2546 = vmatpush1.xpose.msra.mxu0 0.0
        %2547 = vmatprep.subr.mxu0 0.0
        %2548 = vmatpush1.xpose.msra.mxu0 0.0
        %2549 = vmatprep.subr.mxu0 0.0
        %2550 = vmatpush1.xpose.msra.mxu0 0.0
        %2551 = vmatprep.mubr.f32.mxu0 0.0
        %2552 = vmatmul.mubr.f32.gmra.mrb[0].mxu0 %v2483
        %v2553 = vpop.f32.mrb[0].mxu0
        %v2554 = vadd.f32 0.0, %v2553
        %v2555 = vpop.f32.mrb[0].mxu0
        %2556 = vdwg.mxu0
        %2557 = vrot.lane.b32.xlu0 %v2463, 64
        %v2558 = vpop.permute.xlu0 %2557
        %v2559 = vsel %vm1241, %v2463, 0
        %v2561 = vsel %vm1241, %v2558, 0
        %2563 = vmatprep.subr.mxu0 0.0
        %2564 = vmatpush1.xpose.msra.mxu0 %v2561
        %2565 = vmatprep.subr.mxu0 0.0
        %2566 = vmatpush1.xpose.msra.mxu0 0.0
        %2567 = vmatprep.subr.mxu0 0.0
        %2568 = vmatpush1.xpose.msra.mxu0 0.0
        %2569 = vmatprep.subr.mxu0 0.0
        %2570 = vmatpush1.xpose.msra.mxu0 0.0
        %2571 = vmatprep.subr.mxu0 0.0
        %2572 = vmatpush1.xpose.msra.mxu0 0.0
        %2573 = vmatprep.subr.mxu0 0.0
        %2574 = vmatpush1.xpose.msra.mxu0 0.0
        %2575 = vmatprep.subr.mxu0 0.0
        %2576 = vmatpush1.xpose.msra.mxu0 0.0
        %2577 = vmatprep.subr.mxu0 0.0
        %2578 = vmatpush1.xpose.msra.mxu0 0.0
        %2579 = vmatprep.subr.mxu0 0.0
        %2580 = vmatpush1.xpose.msra.mxu0 0.0
        %2581 = vmatprep.subr.mxu0 0.0
        %2582 = vmatpush1.xpose.msra.mxu0 0.0
        %2583 = vmatprep.subr.mxu0 0.0
        %2584 = vmatpush1.xpose.msra.mxu0 0.0
        %2585 = vmatprep.subr.mxu0 0.0
        %2586 = vmatpush1.xpose.msra.mxu0 0.0
        %2587 = vmatprep.subr.mxu0 0.0
        %2588 = vmatpush1.xpose.msra.mxu0 0.0
        %2589 = vmatprep.subr.mxu0 0.0
        %2590 = vmatpush1.xpose.msra.mxu0 0.0
        %2591 = vmatprep.subr.mxu0 0.0
        %2592 = vmatpush1.xpose.msra.mxu0 0.0
        %2593 = vmatprep.subr.mxu0 0.0
        %2594 = vmatpush1.xpose.msra.mxu0 0.0
        %2595 = vmatprep.subr.mxu0 0.0
        %2596 = vmatpush1.xpose.msra.mxu0 0.0
        %2597 = vmatprep.subr.mxu0 0.0
        %2598 = vmatpush1.xpose.msra.mxu0 0.0
        %2599 = vmatprep.subr.mxu0 0.0
        %2600 = vmatpush1.xpose.msra.mxu0 0.0
        %2601 = vmatprep.subr.mxu0 0.0
        %2602 = vmatpush1.xpose.msra.mxu0 0.0
        %2603 = vmatprep.subr.mxu0 0.0
        %2604 = vmatpush1.xpose.msra.mxu0 0.0
        %2605 = vmatprep.subr.mxu0 0.0
        %2606 = vmatpush1.xpose.msra.mxu0 0.0
        %2607 = vmatprep.subr.mxu0 0.0
        %2608 = vmatpush1.xpose.msra.mxu0 0.0
        %2609 = vmatprep.subr.mxu0 0.0
        %2610 = vmatpush1.xpose.msra.mxu0 0.0
        %2611 = vmatprep.subr.mxu0 0.0
        %2612 = vmatpush1.xpose.msra.mxu0 0.0
        %2613 = vmatprep.subr.mxu0 0.0
        %2614 = vmatpush1.xpose.msra.mxu0 0.0
        %2615 = vmatprep.subr.mxu0 0.0
        %2616 = vmatpush1.xpose.msra.mxu0 0.0
        %2617 = vmatprep.subr.mxu0 0.0
        %2618 = vmatpush1.xpose.msra.mxu0 0.0
        %2619 = vmatprep.subr.mxu0 0.0
        %2620 = vmatpush1.xpose.msra.mxu0 0.0
        %2621 = vmatprep.subr.mxu0 0.0
        %2622 = vmatpush1.xpose.msra.mxu0 0.0
        %2623 = vmatprep.subr.mxu0 0.0
        %2624 = vmatpush1.xpose.msra.mxu0 0.0
        %2625 = vmatprep.subr.mxu0 0.0
        %2626 = vmatpush1.xpose.msra.mxu0 0.0
        %2627 = vmatprep.mubr.f32.mxu0 0.0
        %2628 = vmatmul.mubr.f32.gmra.mrb[0].mxu0 %v2559
        %v2629 = vpop.f32.mrb[0].mxu0
        %v2630 = vadd.f32 0.0, %v2629
        %v2631 = vpop.f32.mrb[0].mxu0
        %2632 = vdwg.mxu0
        %2633 = vrot.lane.b32.xlu0 %v2470, 64
        %v2634 = vpop.permute.xlu0 %2633
        %v2635 = vsel %vm1241, %v2470, 0
        %v2637 = vsel %vm1241, %v2634, 0
        %2639 = vmatprep.subr.mxu0 0.0
        %2640 = vmatpush1.xpose.msra.mxu0 %v2637
        %2641 = vmatprep.subr.mxu0 0.0
        %2642 = vmatpush1.xpose.msra.mxu0 0.0
        %2643 = vmatprep.subr.mxu0 0.0
        %2644 = vmatpush1.xpose.msra.mxu0 0.0
        %2645 = vmatprep.subr.mxu0 0.0
        %2646 = vmatpush1.xpose.msra.mxu0 0.0
        %2647 = vmatprep.subr.mxu0 0.0
        %2648 = vmatpush1.xpose.msra.mxu0 0.0
        %2649 = vmatprep.subr.mxu0 0.0
        %2650 = vmatpush1.xpose.msra.mxu0 0.0
        %2651 = vmatprep.subr.mxu0 0.0
        %2652 = vmatpush1.xpose.msra.mxu0 0.0
        %2653 = vmatprep.subr.mxu0 0.0
        %2654 = vmatpush1.xpose.msra.mxu0 0.0
        %2655 = vmatprep.subr.mxu0 0.0
        %2656 = vmatpush1.xpose.msra.mxu0 0.0
        %2657 = vmatprep.subr.mxu0 0.0
        %2658 = vmatpush1.xpose.msra.mxu0 0.0
        %2659 = vmatprep.subr.mxu0 0.0
        %2660 = vmatpush1.xpose.msra.mxu0 0.0
        %2661 = vmatprep.subr.mxu0 0.0
        %2662 = vmatpush1.xpose.msra.mxu0 0.0
        %2663 = vmatprep.subr.mxu0 0.0
        %2664 = vmatpush1.xpose.msra.mxu0 0.0
        %2665 = vmatprep.subr.mxu0 0.0
        %2666 = vmatpush1.xpose.msra.mxu0 0.0
        %2667 = vmatprep.subr.mxu0 0.0
        %2668 = vmatpush1.xpose.msra.mxu0 0.0
        %2669 = vmatprep.subr.mxu0 0.0
        %2670 = vmatpush1.xpose.msra.mxu0 0.0
        %2671 = vmatprep.subr.mxu0 0.0
        %2672 = vmatpush1.xpose.msra.mxu0 0.0
        %2673 = vmatprep.subr.mxu0 0.0
        %2674 = vmatpush1.xpose.msra.mxu0 0.0
        %2675 = vmatprep.subr.mxu0 0.0
        %2676 = vmatpush1.xpose.msra.mxu0 0.0
        %2677 = vmatprep.subr.mxu0 0.0
        %2678 = vmatpush1.xpose.msra.mxu0 0.0
        %2679 = vmatprep.subr.mxu0 0.0
        %2680 = vmatpush1.xpose.msra.mxu0 0.0
        %2681 = vmatprep.subr.mxu0 0.0
        %2682 = vmatpush1.xpose.msra.mxu0 0.0
        %2683 = vmatprep.subr.mxu0 0.0
        %2684 = vmatpush1.xpose.msra.mxu0 0.0
        %2685 = vmatprep.subr.mxu0 0.0
        %2686 = vmatpush1.xpose.msra.mxu0 0.0
        %2687 = vmatprep.subr.mxu0 0.0
        %2688 = vmatpush1.xpose.msra.mxu0 0.0
        %2689 = vmatprep.subr.mxu0 0.0
        %2690 = vmatpush1.xpose.msra.mxu0 0.0
        %2691 = vmatprep.subr.mxu0 0.0
        %2692 = vmatpush1.xpose.msra.mxu0 0.0
        %2693 = vmatprep.subr.mxu0 0.0
        %2694 = vmatpush1.xpose.msra.mxu0 0.0
        %2695 = vmatprep.subr.mxu0 0.0
        %2696 = vmatpush1.xpose.msra.mxu0 0.0
        %2697 = vmatprep.subr.mxu0 0.0
        %2698 = vmatpush1.xpose.msra.mxu0 0.0
        %2699 = vmatprep.subr.mxu0 0.0
        %2700 = vmatpush1.xpose.msra.mxu0 0.0
        %2701 = vmatprep.subr.mxu0 0.0
        %2702 = vmatpush1.xpose.msra.mxu0 0.0
        %2703 = vmatprep.mubr.f32.mxu0 0.0
        %2704 = vmatmul.mubr.f32.gmra.mrb[0].mxu0 %v2635
        %v2705 = vpop.f32.mrb[0].mxu0
        %v2706 = vadd.f32 0.0, %v2705
        %v2707 = vpop.f32.mrb[0].mxu0
        %2708 = vdwg.mxu0
        %2709 = vrot.lane.b32.xlu0 %v2472, 64
        %v2710 = vpop.permute.xlu0 %2709
        %v2711 = vsel %vm1241, %v2472, 0
        %v2713 = vsel %vm1241, %v2710, 0
        %2715 = vmatprep.subr.mxu0 0.0
        %2716 = vmatpush1.xpose.msra.mxu0 %v2713
        %2717 = vmatprep.subr.mxu0 0.0
        %2718 = vmatpush1.xpose.msra.mxu0 0.0
        %2719 = vmatprep.subr.mxu0 0.0
        %2720 = vmatpush1.xpose.msra.mxu0 0.0
        %2721 = vmatprep.subr.mxu0 0.0
        %2722 = vmatpush1.xpose.msra.mxu0 0.0
        %2723 = vmatprep.subr.mxu0 0.0
        %2724 = vmatpush1.xpose.msra.mxu0 0.0
        %2725 = vmatprep.subr.mxu0 0.0
        %2726 = vmatpush1.xpose.msra.mxu0 0.0
        %2727 = vmatprep.subr.mxu0 0.0
        %2728 = vmatpush1.xpose.msra.mxu0 0.0
        %2729 = vmatprep.subr.mxu0 0.0
        %2730 = vmatpush1.xpose.msra.mxu0 0.0
        %2731 = vmatprep.subr.mxu0 0.0
        %2732 = vmatpush1.xpose.msra.mxu0 0.0
        %2733 = vmatprep.subr.mxu0 0.0
        %2734 = vmatpush1.xpose.msra.mxu0 0.0
        %2735 = vmatprep.subr.mxu0 0.0
        %2736 = vmatpush1.xpose.msra.mxu0 0.0
        %2737 = vmatprep.subr.mxu0 0.0
        %2738 = vmatpush1.xpose.msra.mxu0 0.0
        %2739 = vmatprep.subr.mxu0 0.0
        %2740 = vmatpush1.xpose.msra.mxu0 0.0
        %2741 = vmatprep.subr.mxu0 0.0
        %2742 = vmatpush1.xpose.msra.mxu0 0.0
        %2743 = vmatprep.subr.mxu0 0.0
        %2744 = vmatpush1.xpose.msra.mxu0 0.0
        %2745 = vmatprep.subr.mxu0 0.0
        %2746 = vmatpush1.xpose.msra.mxu0 0.0
        %2747 = vmatprep.subr.mxu0 0.0
        %2748 = vmatpush1.xpose.msra.mxu0 0.0
        %2749 = vmatprep.subr.mxu0 0.0
        %2750 = vmatpush1.xpose.msra.mxu0 0.0
        %2751 = vmatprep.subr.mxu0 0.0
        %2752 = vmatpush1.xpose.msra.mxu0 0.0
        %2753 = vmatprep.subr.mxu0 0.0
        %2754 = vmatpush1.xpose.msra.mxu0 0.0
        %2755 = vmatprep.subr.mxu0 0.0
        %2756 = vmatpush1.xpose.msra.mxu0 0.0
        %2757 = vmatprep.subr.mxu0 0.0
        %2758 = vmatpush1.xpose.msra.mxu0 0.0
        %2759 = vmatprep.subr.mxu0 0.0
        %2760 = vmatpush1.xpose.msra.mxu0 0.0
        %2761 = vmatprep.subr.mxu0 0.0
        %2762 = vmatpush1.xpose.msra.mxu0 0.0
        %2763 = vmatprep.subr.mxu0 0.0
        %2764 = vmatpush1.xpose.msra.mxu0 0.0
        %2765 = vmatprep.subr.mxu0 0.0
        %2766 = vmatpush1.xpose.msra.mxu0 0.0
        %2767 = vmatprep.subr.mxu0 0.0
        %2768 = vmatpush1.xpose.msra.mxu0 0.0
        %2769 = vmatprep.subr.mxu0 0.0
        %2770 = vmatpush1.xpose.msra.mxu0 0.0
        %2771 = vmatprep.subr.mxu0 0.0
        %2772 = vmatpush1.xpose.msra.mxu0 0.0
        %2773 = vmatprep.subr.mxu0 0.0
        %2774 = vmatpush1.xpose.msra.mxu0 0.0
        %2775 = vmatprep.subr.mxu0 0.0
        %2776 = vmatpush1.xpose.msra.mxu0 0.0
        %2777 = vmatprep.subr.mxu0 0.0
        %2778 = vmatpush1.xpose.msra.mxu0 0.0
        %2779 = vmatprep.mubr.f32.mxu0 0.0
        %2780 = vmatmul.mubr.f32.gmra.mrb[0].mxu0 %v2711
        %v2781 = vpop.f32.mrb[0].mxu0
        %v2782 = vadd.f32 0.0, %v2781
        %v2783 = vpop.f32.mrb[0].mxu0
        %2784 = vdwg.mxu0
        %v2785 = vmul.f32 %v2554, 0.17677669
        %v2786 = vmul.f32 %v2630, 0.17677669
        %v2787 = vmul.f32 %v2706, 0.17677669
        %v2788 = vmul.f32 %v2782, 0.17677669
        %v2789 = vsel %vm940, %v2785, -inf
        %2790 = vmax.xlane.f32.xlu0 %v2789
        %v2791 = vpop.xlane.xlu0 %2790
        %v2792 = vsel %vm940, %v2786, -inf
        %2793 = vmax.xlane.f32.xlu0 %v2792
        %v2794 = vpop.xlane.xlu0 %2793
        %v2795 = vsel %vm940, %v2787, -inf
        %2796 = vmax.xlane.f32.xlu0 %v2795
        %v2797 = vpop.xlane.xlu0 %2796
        %v2798 = vsel %vm940, %v2788, -inf
        %2799 = vmax.xlane.f32.xlu0 %v2798
        %v2800 = vpop.xlane.xlu0 %2799
        %v2801 = vsub.f32 %v2785, %v2791
        %v2802 = vsub.f32 %v2786, %v2794
        %v2803 = vsub.f32 %v2787, %v2797
        %v2804 = vsub.f32 %v2788, %v2800
        %v2805 = vmul.f32 %v2801, 1.442695
        %v2806 = vpow.pop %v2805
        %v2807 = vmul.f32 %v2802, 1.442695
        %v2808 = vpow.pop %v2807
        %v2809 = vmul.f32 %v2803, 1.442695
        %v2810 = vpow.pop %v2809
        %v2811 = vmul.f32 %v2804, 1.442695
        %v2812 = vpow.pop %v2811
        %v2813 = vsel %vm940, %v2806, 0.0
        %2814 = vadd.xlane.f32.xlu0 %v2813
        %v2815 = vpop.xlane.xlu0 %2814
        %v2816 = vsel %vm940, %v2808, 0.0
        %2817 = vadd.xlane.f32.xlu0 %v2816
        %v2818 = vpop.xlane.xlu0 %2817
        %v2819 = vsel %vm940, %v2810, 0.0
        %2820 = vadd.xlane.f32.xlu0 %v2819
        %v2821 = vpop.xlane.xlu0 %2820
        %v2822 = vsel %vm940, %v2812, 0.0
        %2823 = vadd.xlane.f32.xlu0 %v2822
        %v2824 = vpop.xlane.xlu0 %2823
        %v2825 = vrcp.pop %v2815
        %v2826 = vrcp.pop %v2818
        %v2827 = vrcp.pop %v2821
        %v2828 = vrcp.pop %v2824
        %v2829 = vmul.f32 %v2806, %v2825
        %v2830 = vmul.f32 %v2808, %v2826
        %v2831 = vmul.f32 %v2810, %v2827
        %v2832 = vmul.f32 %v2812, %v2828
        %v2834 = vsel %vm940, %v2829, 0
        %2836 = vmatprep.subr.mxu0 0.0
        %2837 = vmatpush1.msra.mxu0 %v2459
        %2838 = vmatprep.subr.mxu0 0.0
        %2839 = vmatpush1.msra.mxu0 0.0
        %2840 = vmatprep.subr.mxu0 0.0
        %2841 = vmatpush1.msra.mxu0 0.0
        %2842 = vmatprep.subr.mxu0 0.0
        %2843 = vmatpush1.msra.mxu0 0.0
        %2844 = vmatprep.subr.mxu0 0.0
        %2845 = vmatpush1.msra.mxu0 0.0
        %2846 = vmatprep.subr.mxu0 0.0
        %2847 = vmatpush1.msra.mxu0 0.0
        %2848 = vmatprep.subr.mxu0 0.0
        %2849 = vmatpush1.msra.mxu0 0.0
        %2850 = vmatprep.subr.mxu0 0.0
        %2851 = vmatpush1.msra.mxu0 0.0
        %2852 = vmatprep.subr.mxu0 0.0
        %2853 = vmatpush1.msra.mxu0 0.0
        %2854 = vmatprep.subr.mxu0 0.0
        %2855 = vmatpush1.msra.mxu0 0.0
        %2856 = vmatprep.subr.mxu0 0.0
        %2857 = vmatpush1.msra.mxu0 0.0
        %2858 = vmatprep.subr.mxu0 0.0
        %2859 = vmatpush1.msra.mxu0 0.0
        %2860 = vmatprep.subr.mxu0 0.0
        %2861 = vmatpush1.msra.mxu0 0.0
        %2862 = vmatprep.subr.mxu0 0.0
        %2863 = vmatpush1.msra.mxu0 0.0
        %2864 = vmatprep.subr.mxu0 0.0
        %2865 = vmatpush1.msra.mxu0 0.0
        %2866 = vmatprep.subr.mxu0 0.0
        %2867 = vmatpush1.msra.mxu0 0.0
        %2868 = vmatprep.subr.mxu0 0.0
        %2869 = vmatpush1.msra.mxu0 0.0
        %2870 = vmatprep.subr.mxu0 0.0
        %2871 = vmatpush1.msra.mxu0 0.0
        %2872 = vmatprep.subr.mxu0 0.0
        %2873 = vmatpush1.msra.mxu0 0.0
        %2874 = vmatprep.subr.mxu0 0.0
        %2875 = vmatpush1.msra.mxu0 0.0
        %2876 = vmatprep.subr.mxu0 0.0
        %2877 = vmatpush1.msra.mxu0 0.0
        %2878 = vmatprep.subr.mxu0 0.0
        %2879 = vmatpush1.msra.mxu0 0.0
        %2880 = vmatprep.subr.mxu0 0.0
        %2881 = vmatpush1.msra.mxu0 0.0
        %2882 = vmatprep.subr.mxu0 0.0
        %2883 = vmatpush1.msra.mxu0 0.0
        %2884 = vmatprep.subr.mxu0 0.0
        %2885 = vmatpush1.msra.mxu0 0.0
        %2886 = vmatprep.subr.mxu0 0.0
        %2887 = vmatpush1.msra.mxu0 0.0
        %2888 = vmatprep.subr.mxu0 0.0
        %2889 = vmatpush1.msra.mxu0 0.0
        %2890 = vmatprep.subr.mxu0 0.0
        %2891 = vmatpush1.msra.mxu0 0.0
        %2892 = vmatprep.subr.mxu0 0.0
        %2893 = vmatpush1.msra.mxu0 0.0
        %2894 = vmatprep.subr.mxu0 0.0
        %2895 = vmatpush1.msra.mxu0 0.0
        %2896 = vmatprep.subr.mxu0 0.0
        %2897 = vmatpush1.msra.mxu0 0.0
        %2898 = vmatprep.subr.mxu0 0.0
        %2899 = vmatpush1.msra.mxu0 0.0
        %2900 = vmatprep.mubr.f32.mxu0 0.0
        %2901 = vmatmul.mubr.f32.gmra.mrb[0].mxu0 %v2834
        %v2902 = vpop.f32.mrb[0].mxu0
        %v2903 = vadd.f32 0.0, %v2902
        %v2904 = vpop.f32.mrb[0].mxu0
        %2905 = vdwg.mxu0
        %v2907 = vsel %vm940, %v2830, 0
        %2909 = vmatprep.subr.mxu0 0.0
        %2910 = vmatpush1.msra.mxu0 %v2465
        %2911 = vmatprep.subr.mxu0 0.0
        %2912 = vmatpush1.msra.mxu0 0.0
        %2913 = vmatprep.subr.mxu0 0.0
        %2914 = vmatpush1.msra.mxu0 0.0
        %2915 = vmatprep.subr.mxu0 0.0
        %2916 = vmatpush1.msra.mxu0 0.0
        %2917 = vmatprep.subr.mxu0 0.0
        %2918 = vmatpush1.msra.mxu0 0.0
        %2919 = vmatprep.subr.mxu0 0.0
        %2920 = vmatpush1.msra.mxu0 0.0
        %2921 = vmatprep.subr.mxu0 0.0
        %2922 = vmatpush1.msra.mxu0 0.0
        %2923 = vmatprep.subr.mxu0 0.0
        %2924 = vmatpush1.msra.mxu0 0.0
        %2925 = vmatprep.subr.mxu0 0.0
        %2926 = vmatpush1.msra.mxu0 0.0
        %2927 = vmatprep.subr.mxu0 0.0
        %2928 = vmatpush1.msra.mxu0 0.0
        %2929 = vmatprep.subr.mxu0 0.0
        %2930 = vmatpush1.msra.mxu0 0.0
        %2931 = vmatprep.subr.mxu0 0.0
        %2932 = vmatpush1.msra.mxu0 0.0
        %2933 = vmatprep.subr.mxu0 0.0
        %2934 = vmatpush1.msra.mxu0 0.0
        %2935 = vmatprep.subr.mxu0 0.0
        %2936 = vmatpush1.msra.mxu0 0.0
        %2937 = vmatprep.subr.mxu0 0.0
        %2938 = vmatpush1.msra.mxu0 0.0
        %2939 = vmatprep.subr.mxu0 0.0
        %2940 = vmatpush1.msra.mxu0 0.0
        %2941 = vmatprep.subr.mxu0 0.0
        %2942 = vmatpush1.msra.mxu0 0.0
        %2943 = vmatprep.subr.mxu0 0.0
        %2944 = vmatpush1.msra.mxu0 0.0
        %2945 = vmatprep.subr.mxu0 0.0
        %2946 = vmatpush1.msra.mxu0 0.0
        %2947 = vmatprep.subr.mxu0 0.0
        %2948 = vmatpush1.msra.mxu0 0.0
        %2949 = vmatprep.subr.mxu0 0.0
        %2950 = vmatpush1.msra.mxu0 0.0
        %2951 = vmatprep.subr.mxu0 0.0
        %2952 = vmatpush1.msra.mxu0 0.0
        %2953 = vmatprep.subr.mxu0 0.0
        %2954 = vmatpush1.msra.mxu0 0.0
        %2955 = vmatprep.subr.mxu0 0.0
        %2956 = vmatpush1.msra.mxu0 0.0
        %2957 = vmatprep.subr.mxu0 0.0
        %2958 = vmatpush1.msra.mxu0 0.0
        %2959 = vmatprep.subr.mxu0 0.0
        %2960 = vmatpush1.msra.mxu0 0.0
        %2961 = vmatprep.subr.mxu0 0.0
        %2962 = vmatpush1.msra.mxu0 0.0
        %2963 = vmatprep.subr.mxu0 0.0
        %2964 = vmatpush1.msra.mxu0 0.0
        %2965 = vmatprep.subr.mxu0 0.0
        %2966 = vmatpush1.msra.mxu0 0.0
        %2967 = vmatprep.subr.mxu0 0.0
        %2968 = vmatpush1.msra.mxu0 0.0
        %2969 = vmatprep.subr.mxu0 0.0
        %2970 = vmatpush1.msra.mxu0 0.0
        %2971 = vmatprep.subr.mxu0 0.0
        %2972 = vmatpush1.msra.mxu0 0.0
        %2973 = vmatprep.mubr.f32.mxu0 0.0
        %2974 = vmatmul.mubr.f32.gmra.mrb[0].mxu0 %v2907
        %v2975 = vpop.f32.mrb[0].mxu0
        %v2976 = vadd.f32 0.0, %v2975
        %v2977 = vpop.f32.mrb[0].mxu0
        %2978 = vdwg.mxu0
        %v2980 = vsel %vm940, %v2831, 0
        %2982 = vmatprep.subr.mxu0 0.0
        %2983 = vmatpush1.msra.mxu0 %v2476
        %2984 = vmatprep.subr.mxu0 0.0
        %2985 = vmatpush1.msra.mxu0 0.0
        %2986 = vmatprep.subr.mxu0 0.0
        %2987 = vmatpush1.msra.mxu0 0.0
        %2988 = vmatprep.subr.mxu0 0.0
        %2989 = vmatpush1.msra.mxu0 0.0
        %2990 = vmatprep.subr.mxu0 0.0
        %2991 = vmatpush1.msra.mxu0 0.0
        %2992 = vmatprep.subr.mxu0 0.0
        %2993 = vmatpush1.msra.mxu0 0.0
        %2994 = vmatprep.subr.mxu0 0.0
        %2995 = vmatpush1.msra.mxu0 0.0
        %2996 = vmatprep.subr.mxu0 0.0
        %2997 = vmatpush1.msra.mxu0 0.0
        %2998 = vmatprep.subr.mxu0 0.0
        %2999 = vmatpush1.msra.mxu0 0.0
        %3000 = vmatprep.subr.mxu0 0.0
        %3001 = vmatpush1.msra.mxu0 0.0
        %3002 = vmatprep.subr.mxu0 0.0
        %3003 = vmatpush1.msra.mxu0 0.0
        %3004 = vmatprep.subr.mxu0 0.0
        %3005 = vmatpush1.msra.mxu0 0.0
        %3006 = vmatprep.subr.mxu0 0.0
        %3007 = vmatpush1.msra.mxu0 0.0
        %3008 = vmatprep.subr.mxu0 0.0
        %3009 = vmatpush1.msra.mxu0 0.0
        %3010 = vmatprep.subr.mxu0 0.0
        %3011 = vmatpush1.msra.mxu0 0.0
        %3012 = vmatprep.subr.mxu0 0.0
        %3013 = vmatpush1.msra.mxu0 0.0
        %3014 = vmatprep.subr.mxu0 0.0
        %3015 = vmatpush1.msra.mxu0 0.0
        %3016 = vmatprep.subr.mxu0 0.0
        %3017 = vmatpush1.msra.mxu0 0.0
        %3018 = vmatprep.subr.mxu0 0.0
        %3019 = vmatpush1.msra.mxu0 0.0
        %3020 = vmatprep.subr.mxu0 0.0
        %3021 = vmatpush1.msra.mxu0 0.0
        %3022 = vmatprep.subr.mxu0 0.0
        %3023 = vmatpush1.msra.mxu0 0.0
        %3024 = vmatprep.subr.mxu0 0.0
        %3025 = vmatpush1.msra.mxu0 0.0
        %3026 = vmatprep.subr.mxu0 0.0
        %3027 = vmatpush1.msra.mxu0 0.0
        %3028 = vmatprep.subr.mxu0 0.0
        %3029 = vmatpush1.msra.mxu0 0.0
        %3030 = vmatprep.subr.mxu0 0.0
        %3031 = vmatpush1.msra.mxu0 0.0
        %3032 = vmatprep.subr.mxu0 0.0
        %3033 = vmatpush1.msra.mxu0 0.0
        %3034 = vmatprep.subr.mxu0 0.0
        %3035 = vmatpush1.msra.mxu0 0.0
        %3036 = vmatprep.subr.mxu0 0.0
        %3037 = vmatpush1.msra.mxu0 0.0
        %3038 = vmatprep.subr.mxu0 0.0
        %3039 = vmatpush1.msra.mxu0 0.0
        %3040 = vmatprep.subr.mxu0 0.0
        %3041 = vmatpush1.msra.mxu0 0.0
        %3042 = vmatprep.subr.mxu0 0.0
        %3043 = vmatpush1.msra.mxu0 0.0
        %3044 = vmatprep.subr.mxu0 0.0
        %3045 = vmatpush1.msra.mxu0 0.0
        %3046 = vmatprep.mubr.f32.mxu0 0.0
        %3047 = vmatmul.mubr.f32.gmra.mrb[0].mxu0 %v2980
        %v3048 = vpop.f32.mrb[0].mxu0
        %v3049 = vadd.f32 0.0, %v3048
        %v3050 = vpop.f32.mrb[0].mxu0
        %3051 = vdwg.mxu0
        %v3053 = vsel %vm940, %v2832, 0
        %3055 = vmatprep.subr.mxu0 0.0
        %3056 = vmatpush1.msra.mxu0 %v2478
        %3057 = vmatprep.subr.mxu0 0.0
        %3058 = vmatpush1.msra.mxu0 0.0
        %3059 = vmatprep.subr.mxu0 0.0
        %3060 = vmatpush1.msra.mxu0 0.0
        %3061 = vmatprep.subr.mxu0 0.0
        %3062 = vmatpush1.msra.mxu0 0.0
        %3063 = vmatprep.subr.mxu0 0.0
        %3064 = vmatpush1.msra.mxu0 0.0
        %3065 = vmatprep.subr.mxu0 0.0
        %3066 = vmatpush1.msra.mxu0 0.0
        %3067 = vmatprep.subr.mxu0 0.0
        %3068 = vmatpush1.msra.mxu0 0.0
        %3069 = vmatprep.subr.mxu0 0.0
        %3070 = vmatpush1.msra.mxu0 0.0
        %3071 = vmatprep.subr.mxu0 0.0
        %3072 = vmatpush1.msra.mxu0 0.0
        %3073 = vmatprep.subr.mxu0 0.0
        %3074 = vmatpush1.msra.mxu0 0.0
        %3075 = vmatprep.subr.mxu0 0.0
        %3076 = vmatpush1.msra.mxu0 0.0
        %3077 = vmatprep.subr.mxu0 0.0
        %3078 = vmatpush1.msra.mxu0 0.0
        %3079 = vmatprep.subr.mxu0 0.0
        %3080 = vmatpush1.msra.mxu0 0.0
        %3081 = vmatprep.subr.mxu0 0.0
        %3082 = vmatpush1.msra.mxu0 0.0
        %3083 = vmatprep.subr.mxu0 0.0
        %3084 = vmatpush1.msra.mxu0 0.0
        %3085 = vmatprep.subr.mxu0 0.0
        %3086 = vmatpush1.msra.mxu0 0.0
        %3087 = vmatprep.subr.mxu0 0.0
        %3088 = vmatpush1.msra.mxu0 0.0
        %3089 = vmatprep.subr.mxu0 0.0
        %3090 = vmatpush1.msra.mxu0 0.0
        %3091 = vmatprep.subr.mxu0 0.0
        %3092 = vmatpush1.msra.mxu0 0.0
        %3093 = vmatprep.subr.mxu0 0.0
        %3094 = vmatpush1.msra.mxu0 0.0
        %3095 = vmatprep.subr.mxu0 0.0
        %3096 = vmatpush1.msra.mxu0 0.0
        %3097 = vmatprep.subr.mxu0 0.0
        %3098 = vmatpush1.msra.mxu0 0.0
        %3099 = vmatprep.subr.mxu0 0.0
        %3100 = vmatpush1.msra.mxu0 0.0
        %3101 = vmatprep.subr.mxu0 0.0
        %3102 = vmatpush1.msra.mxu0 0.0
        %3103 = vmatprep.subr.mxu0 0.0
        %3104 = vmatpush1.msra.mxu0 0.0
        %3105 = vmatprep.subr.mxu0 0.0
        %3106 = vmatpush1.msra.mxu0 0.0
        %3107 = vmatprep.subr.mxu0 0.0
        %3108 = vmatpush1.msra.mxu0 0.0
        %3109 = vmatprep.subr.mxu0 0.0
        %3110 = vmatpush1.msra.mxu0 0.0
        %3111 = vmatprep.subr.mxu0 0.0
        %3112 = vmatpush1.msra.mxu0 0.0
        %3113 = vmatprep.subr.mxu0 0.0
        %3114 = vmatpush1.msra.mxu0 0.0
        %3115 = vmatprep.subr.mxu0 0.0
        %3116 = vmatpush1.msra.mxu0 0.0
        %3117 = vmatprep.subr.mxu0 0.0
        %3118 = vmatpush1.msra.mxu0 0.0
        %3119 = vmatprep.mubr.f32.mxu0 0.0
        %3120 = vmatmul.mubr.f32.gmra.mrb[0].mxu0 %v3053
        %v3121 = vpop.f32.mrb[0].mxu0
        %v3122 = vadd.f32 0.0, %v3121
        %v3123 = vpop.f32.mrb[0].mxu0
        %3124 = vdwg.mxu0
        %3127 = vrot.lane.b32.xlu0 %v3049, 32
        %v3128 = vpop.permute.xlu0 %3127
        %3129 = vrot.lane.b32.xlu0 %v3122, 32
        %v3130 = vpop.permute.xlu0 %3129
        %v3133 = vsel %vm1241, %v2903, %v3128
        %v3134 = vsel %vm1241, %v2976, %v3130
        %s3135 = scalar_lea.vmem %s5, 64
        %v3136 = vld [vmem:[%s3135] sm:$0xff]
        %v3137 = vld [vmem:[%s3135 + $0x8] sm:$0xff]
        %v3138 = vld [vmem:[%s3135 + $0x10] sm:$0xff]
        %v3139 = vld [vmem:[%s3135 + $0x18] sm:$0xff]
        %v3140 = vld [vmem:[%s3135 + $0x20] sm:$0xff]
        %v3141 = vld [vmem:[%s3135 + $0x28] sm:$0xff]
        %v3142 = vld [vmem:[%s3135 + $0x30] sm:$0xff]
        %v3143 = vld [vmem:[%s3135 + $0x38] sm:$0xff]
        %s3144 = scalar_lea.vmem %s6, 1
        %v3145 = vld [vmem:[%s3144] sm:$0x1]
        %v3147 = vlaneseq
        %v3148 = vshrl.u32 %v3147, 7
        %v3149 = vsub.s32 0, %v3148
        %v3150 = vrot.slane %v3145, %v3149
        %v3153 = vsel %vm2008, %v3133, 0
        %v3156 = vsel %vm2008, %v3134, 0
        %3158 = vmatprep.subr.mxu0 0.0
        %3159 = vmatpush1.msra.mxu0 %v3136
        %3160 = vmatprep.subr.mxu0 0.0
        %3161 = vmatpush1.msra.mxu0 %v3137
        %3162 = vmatprep.subr.mxu0 0.0
        %3163 = vmatpush1.msra.mxu0 %v3138
        %3164 = vmatprep.subr.mxu0 0.0
        %3165 = vmatpush1.msra.mxu0 %v3139
        %3166 = vmatprep.subr.mxu0 0.0
        %3167 = vmatpush1.msra.mxu0 %v3140
        %3168 = vmatprep.subr.mxu0 0.0
        %3169 = vmatpush1.msra.mxu0 %v3141
        %3170 = vmatprep.subr.mxu0 0.0
        %3171 = vmatpush1.msra.mxu0 %v3142
        %3172 = vmatprep.subr.mxu0 0.0
        %3173 = vmatpush1.msra.mxu0 %v3143
        %3174 = vmatprep.subr.mxu0 0.0
        %3175 = vmatpush1.msra.mxu0 0.0
        %3176 = vmatprep.subr.mxu0 0.0
        %3177 = vmatpush1.msra.mxu0 0.0
        %3178 = vmatprep.subr.mxu0 0.0
        %3179 = vmatpush1.msra.mxu0 0.0
        %3180 = vmatprep.subr.mxu0 0.0
        %3181 = vmatpush1.msra.mxu0 0.0
        %3182 = vmatprep.subr.mxu0 0.0
        %3183 = vmatpush1.msra.mxu0 0.0
        %3184 = vmatprep.subr.mxu0 0.0
        %3185 = vmatpush1.msra.mxu0 0.0
        %3186 = vmatprep.subr.mxu0 0.0
        %3187 = vmatpush1.msra.mxu0 0.0
        %3188 = vmatprep.subr.mxu0 0.0
        %3189 = vmatpush1.msra.mxu0 0.0
        %3190 = vmatprep.subr.mxu0 0.0
        %3191 = vmatpush1.msra.mxu0 0.0
        %3192 = vmatprep.subr.mxu0 0.0
        %3193 = vmatpush1.msra.mxu0 0.0
        %3194 = vmatprep.subr.mxu0 0.0
        %3195 = vmatpush1.msra.mxu0 0.0
        %3196 = vmatprep.subr.mxu0 0.0
        %3197 = vmatpush1.msra.mxu0 0.0
        %3198 = vmatprep.subr.mxu0 0.0
        %3199 = vmatpush1.msra.mxu0 0.0
        %3200 = vmatprep.subr.mxu0 0.0
        %3201 = vmatpush1.msra.mxu0 0.0
        %3202 = vmatprep.subr.mxu0 0.0
        %3203 = vmatpush1.msra.mxu0 0.0
        %3204 = vmatprep.subr.mxu0 0.0
        %3205 = vmatpush1.msra.mxu0 0.0
        %3206 = vmatprep.subr.mxu0 0.0
        %3207 = vmatpush1.msra.mxu0 0.0
        %3208 = vmatprep.subr.mxu0 0.0
        %3209 = vmatpush1.msra.mxu0 0.0
        %3210 = vmatprep.subr.mxu0 0.0
        %3211 = vmatpush1.msra.mxu0 0.0
        %3212 = vmatprep.subr.mxu0 0.0
        %3213 = vmatpush1.msra.mxu0 0.0
        %3214 = vmatprep.subr.mxu0 0.0
        %3215 = vmatpush1.msra.mxu0 0.0
        %3216 = vmatprep.subr.mxu0 0.0
        %3217 = vmatpush1.msra.mxu0 0.0
        %3218 = vmatprep.subr.mxu0 0.0
        %3219 = vmatpush1.msra.mxu0 0.0
        %3220 = vmatprep.subr.mxu0 0.0
        %3221 = vmatpush1.msra.mxu0 0.0
        %3222 = vmatprep.mubr.f32.mxu0 0.0
        %3223 = vmatmul.mubr.f32.gmra.mrb[0].mxu0 %v3153
        %v3224 = vpop.f32.mrb[0].mxu0
        %v3225 = vadd.f32 %v3150, %v3224
        %v3226 = vpop.f32.mrb[0].mxu0
        %3227 = vmatprep.mubr.f32.mxu0 0.0
        %3228 = vmatmul.mubr.f32.gmra.mrb[0].mxu0 %v3156
        %v3229 = vpop.f32.mrb[0].mxu0
        %v3230 = vadd.f32 %v3150, %v3229
        %v3231 = vpop.f32.mrb[0].mxu0
        %3232 = vdwg.mxu0
        %v3233 = vadd.f32 %v3225, %v2373
        %v3234 = vadd.f32 %v3230, %v2374
        %s3235 = scalar_lea.vmem %s7, 1
        %v3236 = vld [vmem:[%s3235] sm:$0x1]
        %s3237 = scalar_lea.vmem %s8, 1
        %v3238 = vld [vmem:[%s3237] sm:$0x1]
        %v3239 = vsel %vm1241, %v3233, 0.0
        %3240 = vadd.xlane.f32.xlu0 %v3239
        %v3241 = vpop.xlane.xlu0 %3240
        %v3242 = vsel %vm1241, %v3234, 0.0
        %3243 = vadd.xlane.f32.xlu0 %v3242
        %v3244 = vpop.xlane.xlu0 %3243
        %v3245 = vmul.f32 %v3241, %v2100
        %v3246 = vmul.f32 %v3244, %v2100
        %v3247 = vsub.f32 %v3233, %v3245
        %v3248 = vsub.f32 %v3234, %v3246
        %v3249 = vmul.f32 %v3247, %v3247
        %v3250 = vmul.f32 %v3248, %v3248
        %v3251 = vsel %vm1241, %v3249, 0.0
        %3252 = vadd.xlane.f32.xlu0 %v3251
        %v3253 = vpop.xlane.xlu0 %3252
        %v3254 = vsel %vm1241, %v3250, 0.0
        %3255 = vadd.xlane.f32.xlu0 %v3254
        %v3256 = vpop.xlane.xlu0 %3255
        %v3257 = vmul.f32 %v3253, %v2100
        %v3258 = vmul.f32 %v3256, %v2100
        %v3259 = vadd.f32 %v3257, 1e-05
        %v3260 = vadd.f32 %v3258, 1e-05
        %v3261 = vrsqrt.pop %v3259
        %v3262 = vrsqrt.pop %v3260
        %v3263 = vmul.f32 %v3247, %v3261
        %v3264 = vmul.f32 %v3248, %v3262
        %v3266 = vlaneseq
        %v3267 = vshrl.u32 %v3266, 7
        %v3268 = vsub.s32 0, %v3267
        %v3269 = vrot.slane %v3236, %v3268
        %v3271 = vmul.f32 %v3263, %v3269
        %v3272 = vmul.f32 %v3264, %v3269
        %v3274 = vlaneseq
        %v3275 = vshrl.u32 %v3274, 7
        %v3276 = vsub.s32 0, %v3275
        %v3277 = vrot.slane %v3238, %v3276
        %v3279 = vadd.f32 %v3271, %v3277
        %v3280 = vadd.f32 %v3272, %v3277
        %s3281 = scalar_lea.vmem %s9, 32
        %v3282 = vld [vmem:[%s3281] sm:$0xff]
        %v3283 = vld [vmem:[%s3281 + $0x8] sm:$0xff]
        %v3284 = vld [vmem:[%s3281 + $0x10] sm:$0xff]
        %v3285 = vld [vmem:[%s3281 + $0x18] sm:$0xff]
        %s3286 = scalar_lea.vmem %s10, 1
        %v3287 = vld [vmem:[%s3286] sm:$0x1]
        %v3289 = vlaneseq
        %v3290 = vshrl.u32 %v3289, 7
        %v3291 = vsub.s32 0, %v3290
        %v3292 = vrot.slane %v3287, %v3291
        %v3295 = vsel %vm1241, %v3279, 0
        %v3298 = vsel %vm1241, %v3280, 0
        %3300 = vmatprep.subr.mxu0 0.0
        %3301 = vmatpush1.msra.mxu0 %v3282
        %3302 = vmatprep.subr.mxu0 0.0
        %3303 = vmatpush1.msra.mxu0 %v3283
        %3304 = vmatprep.subr.mxu0 0.0
        %3305 = vmatpush1.msra.mxu0 %v3284
        %3306 = vmatprep.subr.mxu0 0.0
        %3307 = vmatpush1.msra.mxu0 %v3285
        %3308 = vmatprep.subr.mxu0 0.0
        %3309 = vmatpush1.msra.mxu0 0.0
        %3310 = vmatprep.subr.mxu0 0.0
        %3311 = vmatpush1.msra.mxu0 0.0
        %3312 = vmatprep.subr.mxu0 0.0
        %3313 = vmatpush1.msra.mxu0 0.0
        %3314 = vmatprep.subr.mxu0 0.0
        %3315 = vmatpush1.msra.mxu0 0.0
        %3316 = vmatprep.subr.mxu0 0.0
        %3317 = vmatpush1.msra.mxu0 0.0
        %3318 = vmatprep.subr.mxu0 0.0
        %3319 = vmatpush1.msra.mxu0 0.0
        %3320 = vmatprep.subr.mxu0 0.0
        %3321 = vmatpush1.msra.mxu0 0.0
        %3322 = vmatprep.subr.mxu0 0.0
        %3323 = vmatpush1.msra.mxu0 0.0
        %3324 = vmatprep.subr.mxu0 0.0
        %3325 = vmatpush1.msra.mxu0 0.0
        %3326 = vmatprep.subr.mxu0 0.0
        %3327 = vmatpush1.msra.mxu0 0.0
        %3328 = vmatprep.subr.mxu0 0.0
        %3329 = vmatpush1.msra.mxu0 0.0
        %3330 = vmatprep.subr.mxu0 0.0
        %3331 = vmatpush1.msra.mxu0 0.0
        %3332 = vmatprep.subr.mxu0 0.0
        %3333 = vmatpush1.msra.mxu0 0.0
        %3334 = vmatprep.subr.mxu0 0.0
        %3335 = vmatpush1.msra.mxu0 0.0
        %3336 = vmatprep.subr.mxu0 0.0
        %3337 = vmatpush1.msra.mxu0 0.0
        %3338 = vmatprep.subr.mxu0 0.0
        %3339 = vmatpush1.msra.mxu0 0.0
        %3340 = vmatprep.subr.mxu0 0.0
        %3341 = vmatpush1.msra.mxu0 0.0
        %3342 = vmatprep.subr.mxu0 0.0
        %3343 = vmatpush1.msra.mxu0 0.0
        %3344 = vmatprep.subr.mxu0 0.0
        %3345 = vmatpush1.msra.mxu0 0.0
        %3346 = vmatprep.subr.mxu0 0.0
        %3347 = vmatpush1.msra.mxu0 0.0
        %3348 = vmatprep.subr.mxu0 0.0
        %3349 = vmatpush1.msra.mxu0 0.0
        %3350 = vmatprep.subr.mxu0 0.0
        %3351 = vmatpush1.msra.mxu0 0.0
        %3352 = vmatprep.subr.mxu0 0.0
        %3353 = vmatpush1.msra.mxu0 0.0
        %3354 = vmatprep.subr.mxu0 0.0
        %3355 = vmatpush1.msra.mxu0 0.0
        %3356 = vmatprep.subr.mxu0 0.0
        %3357 = vmatpush1.msra.mxu0 0.0
        %3358 = vmatprep.subr.mxu0 0.0
        %3359 = vmatpush1.msra.mxu0 0.0
        %3360 = vmatprep.subr.mxu0 0.0
        %3361 = vmatpush1.msra.mxu0 0.0
        %3362 = vmatprep.subr.mxu0 0.0
        %3363 = vmatpush1.msra.mxu0 0.0
        %3364 = vmatprep.mubr.f32.mxu0 0.0
        %3365 = vmatmul.mubr.f32.gmra.mrb[0].mxu0 %v3295
        %v3366 = vpop.f32.mrb[0].mxu0
        %v3367 = vadd.f32 %v3292, %v3366
        %v3368 = vpop.f32.mrb[0].mxu0
        %3369 = vmatprep.mubr.f32.mxu0 0.0
        %3370 = vmatmul.mubr.f32.gmra.mrb[0].mxu0 %v3298
        %v3371 = vpop.f32.mrb[0].mxu0
        %v3372 = vadd.f32 %v3292, %v3371
        %v3373 = vpop.f32.mrb[0].mxu0
        %3374 = vdwg.mxu0
        %v3375 = vmax.f32 %v3367, 0.0
        %v3376 = vmax.f32 %v3372, 0.0
        %s3377 = scalar_lea.vmem %s11, 128
        %v3378 = vld [vmem:[%s3377] sm:$0xff]
        %v3379 = vld [vmem:[%s3377 + $0x8] sm:$0xff]
        %v3380 = vld [vmem:[%s3377 + $0x10] sm:$0xff]
        %v3381 = vld [vmem:[%s3377 + $0x18] sm:$0xff]
        %v3382 = vld [vmem:[%s3377 + $0x20] sm:$0xff]
        %v3383 = vld [vmem:[%s3377 + $0x28] sm:$0xff]
        %v3384 = vld [vmem:[%s3377 + $0x30] sm:$0xff]
        %v3385 = vld [vmem:[%s3377 + $0x38] sm:$0xff]
        %v3386 = vld [vmem:[%s3377 + $0x40] sm:$0xff]
        %v3387 = vld [vmem:[%s3377 + $0x48] sm:$0xff]
        %v3388 = vld [vmem:[%s3377 + $0x50] sm:$0xff]
        %v3389 = vld [vmem:[%s3377 + $0x58] sm:$0xff]
        %v3390 = vld [vmem:[%s3377 + $0x60] sm:$0xff]
        %v3391 = vld [vmem:[%s3377 + $0x68] sm:$0xff]
        %v3392 = vld [vmem:[%s3377 + $0x70] sm:$0xff]
        %v3393 = vld [vmem:[%s3377 + $0x78] sm:$0xff]
        %s3394 = scalar_lea.vmem %s12, 1
        %v3395 = vld [vmem:[%s3394] sm:$0x1]
        %v3397 = vlaneseq
        %v3398 = vshrl.u32 %v3397, 7
        %v3399 = vsub.s32 0, %v3398
        %v3400 = vrot.slane %v3395, %v3399
        %3402 = vmatprep.subr.mxu0 0.0
        %3403 = vmatpush1.msra.mxu0 %v3378
        %3404 = vmatprep.subr.mxu0 0.0
        %3405 = vmatpush1.msra.mxu0 %v3379
        %3406 = vmatprep.subr.mxu0 0.0
        %3407 = vmatpush1.msra.mxu0 %v3380
        %3408 = vmatprep.subr.mxu0 0.0
        %3409 = vmatpush1.msra.mxu0 %v3381
        %3410 = vmatprep.subr.mxu0 0.0
        %3411 = vmatpush1.msra.mxu0 %v3382
        %3412 = vmatprep.subr.mxu0 0.0
        %3413 = vmatpush1.msra.mxu0 %v3383
        %3414 = vmatprep.subr.mxu0 0.0
        %3415 = vmatpush1.msra.mxu0 %v3384
        %3416 = vmatprep.subr.mxu0 0.0
        %3417 = vmatpush1.msra.mxu0 %v3385
        %3418 = vmatprep.subr.mxu0 0.0
        %3419 = vmatpush1.msra.mxu0 %v3386
        %3420 = vmatprep.subr.mxu0 0.0
        %3421 = vmatpush1.msra.mxu0 %v3387
        %3422 = vmatprep.subr.mxu0 0.0
        %3423 = vmatpush1.msra.mxu0 %v3388
        %3424 = vmatprep.subr.mxu0 0.0
        %3425 = vmatpush1.msra.mxu0 %v3389
        %3426 = vmatprep.subr.mxu0 0.0
        %3427 = vmatpush1.msra.mxu0 %v3390
        %3428 = vmatprep.subr.mxu0 0.0
        %3429 = vmatpush1.msra.mxu0 %v3391
        %3430 = vmatprep.subr.mxu0 0.0
        %3431 = vmatpush1.msra.mxu0 %v3392
        %3432 = vmatprep.subr.mxu0 0.0
        %3433 = vmatpush1.msra.mxu0 %v3393
        %3434 = vmatprep.subr.mxu0 0.0
        %3435 = vmatpush1.msra.mxu0 0.0
        %3436 = vmatprep.subr.mxu0 0.0
        %3437 = vmatpush1.msra.mxu0 0.0
        %3438 = vmatprep.subr.mxu0 0.0
        %3439 = vmatpush1.msra.mxu0 0.0
        %3440 = vmatprep.subr.mxu0 0.0
        %3441 = vmatpush1.msra.mxu0 0.0
        %3442 = vmatprep.subr.mxu0 0.0
        %3443 = vmatpush1.msra.mxu0 0.0
        %3444 = vmatprep.subr.mxu0 0.0
        %3445 = vmatpush1.msra.mxu0 0.0
        %3446 = vmatprep.subr.mxu0 0.0
        %3447 = vmatpush1.msra.mxu0 0.0
        %3448 = vmatprep.subr.mxu0 0.0
        %3449 = vmatpush1.msra.mxu0 0.0
        %3450 = vmatprep.subr.mxu0 0.0
        %3451 = vmatpush1.msra.mxu0 0.0
        %3452 = vmatprep.subr.mxu0 0.0
        %3453 = vmatpush1.msra.mxu0 0.0
        %3454 = vmatprep.subr.mxu0 0.0
        %3455 = vmatpush1.msra.mxu0 0.0
        %3456 = vmatprep.subr.mxu0 0.0
        %3457 = vmatpush1.msra.mxu0 0.0
        %3458 = vmatprep.subr.mxu0 0.0
        %3459 = vmatpush1.msra.mxu0 0.0
        %3460 = vmatprep.subr.mxu0 0.0
        %3461 = vmatpush1.msra.mxu0 0.0
        %3462 = vmatprep.subr.mxu0 0.0
        %3463 = vmatpush1.msra.mxu0 0.0
        %3464 = vmatprep.subr.mxu0 0.0
        %3465 = vmatpush1.msra.mxu0 0.0
        %3466 = vmatprep.mubr.f32.mxu0 0.0
        %3467 = vmatmul.mubr.f32.gmra.mrb[0].mxu0 %v3375
        %v3468 = vpop.f32.mrb[0].mxu0
        %v3469 = vadd.f32 %v3400, %v3468
        %v3470 = vpop.f32.mrb[0].mxu0
        %3471 = vmatprep.mubr.f32.mxu0 0.0
        %3472 = vmatmul.mubr.f32.gmra.mrb[0].mxu0 %v3376
        %v3473 = vpop.f32.mrb[0].mxu0
        %v3474 = vadd.f32 %v3400, %v3473
        %v3475 = vpop.f32.mrb[0].mxu0
        %3476 = vdwg.mxu0
        %v3477 = vadd.f32 %v3469, %v3279
        %v3478 = vadd.f32 %v3474, %v3280
        %s3479 = scalar_lea.vmem %s13, 1
        %v3480 = vld [vmem:[%s3479] sm:$0x1]
        %s3481 = scalar_lea.vmem %s14, 1
        %v3482 = vld [vmem:[%s3481] sm:$0x1]
        %v3483 = vsel %vm1241, %v3477, 0.0
        %3484 = vadd.xlane.f32.xlu0 %v3483
        %v3485 = vpop.xlane.xlu0 %3484
        %v3486 = vsel %vm1241, %v3478, 0.0
        %3487 = vadd.xlane.f32.xlu0 %v3486
        %v3488 = vpop.xlane.xlu0 %3487
        %v3489 = vmul.f32 %v3485, %v2100
        %v3490 = vmul.f32 %v3488, %v2100
        %v3491 = vsub.f32 %v3477, %v3489
        %v3492 = vsub.f32 %v3478, %v3490
        %v3493 = vmul.f32 %v3491, %v3491
        %v3494 = vmul.f32 %v3492, %v3492
        %v3495 = vsel %vm1241, %v3493, 0.0
        %3496 = vadd.xlane.f32.xlu0 %v3495
        %v3497 = vpop.xlane.xlu0 %3496
        %v3498 = vsel %vm1241, %v3494, 0.0
        %3499 = vadd.xlane.f32.xlu0 %v3498
        %v3500 = vpop.xlane.xlu0 %3499
        %v3501 = vmul.f32 %v3497, %v2100
        %v3502 = vmul.f32 %v3500, %v2100
        %v3503 = vadd.f32 %v3501, 1e-05
        %v3504 = vadd.f32 %v3502, 1e-05
        %v3505 = vrsqrt.pop %v3503
        %v3506 = vrsqrt.pop %v3504
        %v3507 = vmul.f32 %v3491, %v3505
        %v3508 = vmul.f32 %v3492, %v3506
        %v3510 = vlaneseq
        %v3511 = vshrl.u32 %v3510, 7
        %v3512 = vsub.s32 0, %v3511
        %v3513 = vrot.slane %v3480, %v3512
        %v3515 = vmul.f32 %v3507, %v3513
        %v3516 = vmul.f32 %v3508, %v3513
        %v3518 = vlaneseq
        %v3519 = vshrl.u32 %v3518, 7
        %v3520 = vsub.s32 0, %v3519
        %v3521 = vrot.slane %v3482, %v3520
        %v3523 = vadd.f32 %v3515, %v3521
        %v3524 = vadd.f32 %v3516, %v3521
        %v3525 = vld [vmem:[%s15] sm:$0xff]
        %v3526 = vld [vmem:[%s15 + $0x8] sm:$0xff]
        %v3527 = vld [vmem:[%s15 + $0x10] sm:$0xff]
        %v3528 = vld [vmem:[%s15 + $0x18] sm:$0xff]
        %v3529 = vld [vmem:[%s16] sm:$0x1]
        %v3531 = vlaneseq
        %v3532 = vshrl.u32 %v3531, 7
        %v3533 = vsub.s32 0, %v3532
        %v3534 = vrot.slane %v3529, %v3533
        %v3537 = vsel %vm1241, %v3523, 0
        %v3540 = vsel %vm1241, %v3524, 0
        %3542 = vmatprep.subr.mxu0 0.0
        %3543 = vmatpush1.msra.mxu0 %v3525
        %3544 = vmatprep.subr.mxu0 0.0
        %3545 = vmatpush1.msra.mxu0 %v3526
        %3546 = vmatprep.subr.mxu0 0.0
        %3547 = vmatpush1.msra.mxu0 %v3527
        %3548 = vmatprep.subr.mxu0 0.0
        %3549 = vmatpush1.msra.mxu0 %v3528
        %3550 = vmatprep.subr.mxu0 0.0
        %3551 = vmatpush1.msra.mxu0 0.0
        %3552 = vmatprep.subr.mxu0 0.0
        %3553 = vmatpush1.msra.mxu0 0.0
        %3554 = vmatprep.subr.mxu0 0.0
        %3555 = vmatpush1.msra.mxu0 0.0
        %3556 = vmatprep.subr.mxu0 0.0
        %3557 = vmatpush1.msra.mxu0 0.0
        %3558 = vmatprep.subr.mxu0 0.0
        %3559 = vmatpush1.msra.mxu0 0.0
        %3560 = vmatprep.subr.mxu0 0.0
        %3561 = vmatpush1.msra.mxu0 0.0
        %3562 = vmatprep.subr.mxu0 0.0
        %3563 = vmatpush1.msra.mxu0 0.0
        %3564 = vmatprep.subr.mxu0 0.0
        %3565 = vmatpush1.msra.mxu0 0.0
        %3566 = vmatprep.subr.mxu0 0.0
        %3567 = vmatpush1.msra.mxu0 0.0
        %3568 = vmatprep.subr.mxu0 0.0
        %3569 = vmatpush1.msra.mxu0 0.0
        %3570 = vmatprep.subr.mxu0 0.0
        %3571 = vmatpush1.msra.mxu0 0.0
        %3572 = vmatprep.subr.mxu0 0.0
        %3573 = vmatpush1.msra.mxu0 0.0
        %3574 = vmatprep.subr.mxu0 0.0
        %3575 = vmatpush1.msra.mxu0 0.0
        %3576 = vmatprep.subr.mxu0 0.0
        %3577 = vmatpush1.msra.mxu0 0.0
        %3578 = vmatprep.subr.mxu0 0.0
        %3579 = vmatpush1.msra.mxu0 0.0
        %3580 = vmatprep.subr.mxu0 0.0
        %3581 = vmatpush1.msra.mxu0 0.0
        %3582 = vmatprep.subr.mxu0 0.0
        %3583 = vmatpush1.msra.mxu0 0.0
        %3584 = vmatprep.subr.mxu0 0.0
        %3585 = vmatpush1.msra.mxu0 0.0
        %3586 = vmatprep.subr.mxu0 0.0
        %3587 = vmatpush1.msra.mxu0 0.0
        %3588 = vmatprep.subr.mxu0 0.0
        %3589 = vmatpush1.msra.mxu0 0.0
        %3590 = vmatprep.subr.mxu0 0.0
        %3591 = vmatpush1.msra.mxu0 0.0
        %3592 = vmatprep.subr.mxu0 0.0
        %3593 = vmatpush1.msra.mxu0 0.0
        %3594 = vmatprep.subr.mxu0 0.0
        %3595 = vmatpush1.msra.mxu0 0.0
        %3596 = vmatprep.subr.mxu0 0.0
        %3597 = vmatpush1.msra.mxu0 0.0
        %3598 = vmatprep.subr.mxu0 0.0
        %3599 = vmatpush1.msra.mxu0 0.0
        %3600 = vmatprep.subr.mxu0 0.0
        %3601 = vmatpush1.msra.mxu0 0.0
        %3602 = vmatprep.subr.mxu0 0.0
        %3603 = vmatpush1.msra.mxu0 0.0
        %3604 = vmatprep.subr.mxu0 0.0
        %3605 = vmatpush1.msra.mxu0 0.0
        %3606 = vmatprep.mubr.f32.mxu0 0.0
        %3607 = vmatmul.mubr.f32.gmra.mrb[0].mxu0 %v3537
        %v3608 = vpop.f32.mrb[0].mxu0
        %v3609 = vadd.f32 %v3534, %v3608
        %v3610 = vpop.f32.mrb[0].mxu0
        %3611 = vmatprep.mubr.f32.mxu0 0.0
        %3612 = vmatmul.mubr.f32.gmra.mrb[0].mxu0 %v3540
        %v3613 = vpop.f32.mrb[0].mxu0
        %v3614 = vadd.f32 %v3534, %v3613
        %v3615 = vpop.f32.mrb[0].mxu0
        %3616 = vdwg.mxu0
        %vm3617 = vcmask 261127
        %3618 = vst.msk [vmem:[%s729 - $0x7] sm:$0x80] %vm3617, %v3609
        %3619 = vst.msk [vmem:[%s729 - $0x6] sm:$0x80] %vm3617, %v3614
        %v3622 = vcombine.high %v3609, %v3609
        %v3624 = vunpack.c.l.s4 1966171168
        %v3625 = vunpack.c.0.s8 %v3624
        %v3626 = vlaneseq
        %v3627 = vshrl.u32 %v3626, 7
        %v3628 = vsub.s32 %v3625, %v3627
        %v3629 = vrot.slane %v3609, %v3628
        %v3631 = vunpack.c.l.s4 1966171168
        %v3632 = vunpack.c.0.s8 %v3631
        %v3633 = vlaneseq
        %v3634 = vshrl.u32 %v3633, 7
        %v3635 = vsub.s32 %v3632, %v3634
        %v3636 = vrot.slane %v3622, %v3635
        %v3637 = vcombine.high %v3629, %v3629
        %v3639 = vunpack.c.l.s4 1966171168
        %v3640 = vunpack.c.0.s8 %v3639
        %v3641 = vlaneseq
        %v3642 = vshrl.u32 %v3641, 7
        %v3643 = vsub.s32 %v3640, %v3642
        %v3644 = vrot.slane %v3629, %v3643
        %v3646 = vunpack.c.l.s4 1966171168
        %v3647 = vunpack.c.0.s8 %v3646
        %v3648 = vlaneseq
        %v3649 = vshrl.u32 %v3648, 7
        %v3650 = vsub.s32 %v3647, %v3649
        %v3651 = vrot.slane %v3636, %v3650
        %v3653 = vunpack.c.l.s4 1966171168
        %v3654 = vunpack.c.0.s8 %v3653
        %v3655 = vlaneseq
        %v3656 = vshrl.u32 %v3655, 7
        %v3657 = vsub.s32 %v3654, %v3656
        %v3658 = vrot.slane %v3637, %v3657
        %v3659 = vcombine.high %v3644, %v3644
        %v3660 = vcombine.high %v3658, %v3658
        %v3661 = vcombine.high %v3614, %v3614
        %v3663 = vunpack.c.l.s4 1966171168
        %v3664 = vunpack.c.0.s8 %v3663
        %v3665 = vlaneseq
        %v3666 = vshrl.u32 %v3665, 7
        %v3667 = vsub.s32 %v3664, %v3666
        %v3668 = vrot.slane %v3614, %v3667
        %v3670 = vunpack.c.l.s4 1966171168
        %v3671 = vunpack.c.0.s8 %v3670
        %v3672 = vlaneseq
        %v3673 = vshrl.u32 %v3672, 7
        %v3674 = vsub.s32 %v3671, %v3673
        %v3675 = vrot.slane %v3661, %v3674
        %v3676 = vcombine.high %v3668, %v3668
        %v3678 = vunpack.c.l.s4 1966171168
        %v3679 = vunpack.c.0.s8 %v3678
        %v3680 = vlaneseq
        %v3681 = vshrl.u32 %v3680, 7
        %v3682 = vsub.s32 %v3679, %v3681
        %v3683 = vrot.slane %v3668, %v3682
        %v3685 = vunpack.c.l.s4 1966171168
        %v3686 = vunpack.c.0.s8 %v3685
        %v3687 = vlaneseq
        %v3688 = vshrl.u32 %v3687, 7
        %v3689 = vsub.s32 %v3686, %v3688
        %v3690 = vrot.slane %v3675, %v3689
        %v3692 = vunpack.c.l.s4 1966171168
        %v3693 = vunpack.c.0.s8 %v3692
        %v3694 = vlaneseq
        %v3695 = vshrl.u32 %v3694, 7
        %v3696 = vsub.s32 %v3693, %v3695
        %v3697 = vrot.slane %v3676, %v3696
        %v3698 = vcombine.high %v3683, %v3683
        %v3699 = vcombine.high %v3697, %v3697
        %v3700 = vld [vmem:[%s17] sm:$0xff]
        %v3701 = vld [vmem:[%s17 + $0x8] sm:$0xff]
        %v3702 = vld [vmem:[%s17 + $0x10] sm:$0xff]
        %v3703 = vld [vmem:[%s17 + $0x18] sm:$0xff]
        %v3704 = vld [vmem:[%s18] sm:$0x1]
        %v3706 = vlaneseq
        %v3707 = vshrl.u32 %v3706, 7
        %v3708 = vsub.s32 0, %v3707
        %v3709 = vrot.slane %v3704, %v3708
        %v3711 = vcombine.low %v3644, %v3658
        %v3712 = vcombine.low %v3659, %v3660
        %v3713 = vcombine.low %v3651, %v3683
        %v3714 = vcombine.low %v3697, %v3698
        %v3716 = vunpack.c.l.s4 1966171168
        %v3717 = vunpack.c.0.s8 %v3716
        %v3718 = vlaneseq
        %v3719 = vshrl.u32 %v3718, 7
        %v3720 = vsub.s32 %v3717, %v3719
        %v3721 = vrot.slane %v3711, %v3720
        %v3723 = vunpack.c.l.s4 1966171168
        %v3724 = vunpack.c.0.s8 %v3723
        %v3725 = vlaneseq
        %v3726 = vshrl.u32 %v3725, 7
        %v3727 = vsub.s32 %v3724, %v3726
        %v3728 = vrot.slane %v3712, %v3727
        %v3730 = vunpack.c.l.s4 1966171168
        %v3731 = vunpack.c.0.s8 %v3730
        %v3732 = vlaneseq
        %v3733 = vshrl.u32 %v3732, 7
        %v3734 = vsub.s32 %v3731, %v3733
        %v3735 = vrot.slane %v3713, %v3734
        %v3737 = vunpack.c.l.s4 1966171168
        %v3738 = vunpack.c.0.s8 %v3737
        %v3739 = vlaneseq
        %v3740 = vshrl.u32 %v3739, 7
        %v3741 = vsub.s32 %v3738, %v3740
        %v3742 = vrot.slane %v3714, %v3741
        %v3743 = vcombine.low %v3721, %v3728
        %v3744 = vcombine.low %v3735, %v3742
        %v3746 = vunpack.c.l.s4 1966171168
        %v3747 = vunpack.c.0.s8 %v3746
        %v3748 = vlaneseq
        %v3749 = vshrl.u32 %v3748, 7
        %v3750 = vsub.s32 %v3747, %v3749
        %v3751 = vrot.slane %v3743, %v3750
        %v3753 = vunpack.c.l.s4 1966171168
        %v3754 = vunpack.c.0.s8 %v3753
        %v3755 = vlaneseq
        %v3756 = vshrl.u32 %v3755, 7
        %v3757 = vsub.s32 %v3754, %v3756
        %v3758 = vrot.slane %v3744, %v3757
        %v3759 = vcombine.low %v3751, %v3758
        %v3760 = vcombine.low %v3699, %v3690
        %v3762 = vunpack.c.l.s4 1966171168
        %v3763 = vunpack.c.0.s8 %v3762
        %v3764 = vlaneseq
        %v3765 = vshrl.u32 %v3764, 7
        %v3766 = vsub.s32 %v3763, %v3765
        %v3767 = vrot.slane %v3760, %v3766
        %v3769 = vunpack.c.l.s4 1966171168
        %v3770 = vunpack.c.0.s8 %v3769
        %v3771 = vlaneseq
        %v3772 = vshrl.u32 %v3771, 7
        %v3773 = vsub.s32 %v3770, %v3772
        %v3774 = vrot.slane %v3767, %v3773
        %v3775 = vsel %vm1241, %v3759, 0
        %v3777 = vsel %vm1241, %v3774, 0
        %3779 = vmatprep.subr.mxu0 0.0
        %3780 = vmatpush1.msra.mxu0 %v3700
        %3781 = vmatprep.subr.mxu0 0.0
        %3782 = vmatpush1.msra.mxu0 %v3701
        %3783 = vmatprep.subr.mxu0 0.0
        %3784 = vmatpush1.msra.mxu0 %v3702
        %3785 = vmatprep.subr.mxu0 0.0
        %3786 = vmatpush1.msra.mxu0 %v3703
        %3787 = vmatprep.subr.mxu0 0.0
        %3788 = vmatpush1.msra.mxu0 0.0
        %3789 = vmatprep.subr.mxu0 0.0
        %3790 = vmatpush1.msra.mxu0 0.0
        %3791 = vmatprep.subr.mxu0 0.0
        %3792 = vmatpush1.msra.mxu0 0.0
        %3793 = vmatprep.subr.mxu0 0.0
        %3794 = vmatpush1.msra.mxu0 0.0
        %3795 = vmatprep.subr.mxu0 0.0
        %3796 = vmatpush1.msra.mxu0 0.0
        %3797 = vmatprep.subr.mxu0 0.0
        %3798 = vmatpush1.msra.mxu0 0.0
        %3799 = vmatprep.subr.mxu0 0.0
        %3800 = vmatpush1.msra.mxu0 0.0
        %3801 = vmatprep.subr.mxu0 0.0
        %3802 = vmatpush1.msra.mxu0 0.0
        %3803 = vmatprep.subr.mxu0 0.0
        %3804 = vmatpush1.msra.mxu0 0.0
        %3805 = vmatprep.subr.mxu0 0.0
        %3806 = vmatpush1.msra.mxu0 0.0
        %3807 = vmatprep.subr.mxu0 0.0
        %3808 = vmatpush1.msra.mxu0 0.0
        %3809 = vmatprep.subr.mxu0 0.0
        %3810 = vmatpush1.msra.mxu0 0.0
        %3811 = vmatprep.subr.mxu0 0.0
        %3812 = vmatpush1.msra.mxu0 0.0
        %3813 = vmatprep.subr.mxu0 0.0
        %3814 = vmatpush1.msra.mxu0 0.0
        %3815 = vmatprep.subr.mxu0 0.0
        %3816 = vmatpush1.msra.mxu0 0.0
        %3817 = vmatprep.subr.mxu0 0.0
        %3818 = vmatpush1.msra.mxu0 0.0
        %3819 = vmatprep.subr.mxu0 0.0
        %3820 = vmatpush1.msra.mxu0 0.0
        %3821 = vmatprep.subr.mxu0 0.0
        %3822 = vmatpush1.msra.mxu0 0.0
        %3823 = vmatprep.subr.mxu0 0.0
        %3824 = vmatpush1.msra.mxu0 0.0
        %3825 = vmatprep.subr.mxu0 0.0
        %3826 = vmatpush1.msra.mxu0 0.0
        %3827 = vmatprep.subr.mxu0 0.0
        %3828 = vmatpush1.msra.mxu0 0.0
        %3829 = vmatprep.subr.mxu0 0.0
        %3830 = vmatpush1.msra.mxu0 0.0
        %3831 = vmatprep.subr.mxu0 0.0
        %3832 = vmatpush1.msra.mxu0 0.0
        %3833 = vmatprep.subr.mxu0 0.0
        %3834 = vmatpush1.msra.mxu0 0.0
        %3835 = vmatprep.subr.mxu0 0.0
        %3836 = vmatpush1.msra.mxu0 0.0
        %3837 = vmatprep.subr.mxu0 0.0
        %3838 = vmatpush1.msra.mxu0 0.0
        %3839 = vmatprep.subr.mxu0 0.0
        %3840 = vmatpush1.msra.mxu0 0.0
        %3841 = vmatprep.subr.mxu0 0.0
        %3842 = vmatpush1.msra.mxu0 0.0
        %3843 = vmatprep.mubr.f32.mxu0 0.0
        %3844 = vmatmul.mubr.f32.gmra.mrb[0].mxu0 %v3775
        %v3845 = vpop.f32.mrb[0].mxu0
        %v3846 = vadd.f32 %v3709, %v3845
        %v3847 = vpop.f32.mrb[0].mxu0
        %3848 = vmatprep.mubr.f32.mxu0 0.0
        %3849 = vmatmul.mubr.f32.gmra.mrb[0].mxu0 %v3777
        %v3850 = vpop.f32.mrb[0].mxu0
        %v3851 = vadd.f32 %v3709, %v3850
        %v3852 = vpop.f32.mrb[0].mxu0
        %3853 = vdwg.mxu0
        %v3856 = vcombine.high %v3846, %v3846
        %v3858 = vunpack.c.l.s4 1966171168
        %v3859 = vunpack.c.0.s8 %v3858
        %v3860 = vlaneseq
        %v3861 = vshrl.u32 %v3860, 7
        %v3862 = vsub.s32 %v3859, %v3861
        %v3863 = vrot.slane %v3846, %v3862
        %v3865 = vunpack.c.l.s4 1966171168
        %v3866 = vunpack.c.0.s8 %v3865
        %v3867 = vlaneseq
        %v3868 = vshrl.u32 %v3867, 7
        %v3869 = vsub.s32 %v3866, %v3868
        %v3870 = vrot.slane %v3856, %v3869
        %v3871 = vcombine.high %v3863, %v3863
        %v3872 = vcombine.high %v3870, %v3870
        %v3874 = vunpack.c.l.s4 1966171168
        %v3875 = vunpack.c.0.s8 %v3874
        %v3876 = vlaneseq
        %v3877 = vshrl.u32 %v3876, 7
        %v3878 = vsub.s32 %v3875, %v3877
        %v3879 = vrot.slane %v3863, %v3878
        %v3881 = vunpack.c.l.s4 1966171168
        %v3882 = vunpack.c.0.s8 %v3881
        %v3883 = vlaneseq
        %v3884 = vshrl.u32 %v3883, 7
        %v3885 = vsub.s32 %v3882, %v3884
        %v3886 = vrot.slane %v3870, %v3885
        %v3888 = vunpack.c.l.s4 1966171168
        %v3889 = vunpack.c.0.s8 %v3888
        %v3890 = vlaneseq
        %v3891 = vshrl.u32 %v3890, 7
        %v3892 = vsub.s32 %v3889, %v3891
        %v3893 = vrot.slane %v3871, %v3892
        %v3895 = vunpack.c.l.s4 1966171168
        %v3896 = vunpack.c.0.s8 %v3895
        %v3897 = vlaneseq
        %v3898 = vshrl.u32 %v3897, 7
        %v3899 = vsub.s32 %v3896, %v3898
        %v3900 = vrot.slane %v3872, %v3899
        %v3901 = vcombine.high %v3879, %v3879
        %v3902 = vcombine.high %v3886, %v3886
        %v3903 = vcombine.high %v3893, %v3893
        %v3904 = vcombine.high %v3900, %v3900
        %v3906 = vunpack.c.l.s4 1966171168
        %v3907 = vunpack.c.0.s8 %v3906
        %v3908 = vlaneseq
        %v3909 = vshrl.u32 %v3908, 7
        %v3910 = vsub.s32 %v3907, %v3909
        %v3911 = vrot.slane %v3851, %v3910
        %v3912 = vcombine.high %v3911, %v3911
        %v3914 = vunpack.c.l.s4 1966171168
        %v3915 = vunpack.c.0.s8 %v3914
        %v3916 = vlaneseq
        %v3917 = vshrl.u32 %v3916, 7
        %v3918 = vsub.s32 %v3915, %v3917
        %v3919 = vrot.slane %v3911, %v3918
        %v3921 = vunpack.c.l.s4 1966171168
        %v3922 = vunpack.c.0.s8 %v3921
        %v3923 = vlaneseq
        %v3924 = vshrl.u32 %v3923, 7
        %v3925 = vsub.s32 %v3922, %v3924
        %v3926 = vrot.slane %v3912, %v3925
        %v3927 = vcombine.low %v3893, %v3901
        %v3928 = vcombine.low %v3903, %v3886
        %v3930 = vunpack.c.l.s4 1966171168
        %v3931 = vunpack.c.0.s8 %v3930
        %v3932 = vlaneseq
        %v3933 = vshrl.u32 %v3932, 7
        %v3934 = vsub.s32 %v3931, %v3933
        %v3935 = vrot.slane %v3927, %v3934
        %v3937 = vunpack.c.l.s4 1966171168
        %v3938 = vunpack.c.0.s8 %v3937
        %v3939 = vlaneseq
        %v3940 = vshrl.u32 %v3939, 7
        %v3941 = vsub.s32 %v3938, %v3940
        %v3942 = vrot.slane %v3928, %v3941
        %v3943 = vcombine.low %v3935, %v3942
        %v3945 = vunpack.c.l.s4 1966171168
        %v3946 = vunpack.c.0.s8 %v3945
        %v3947 = vlaneseq
        %v3948 = vshrl.u32 %v3947, 7
        %v3949 = vsub.s32 %v3946, %v3948
        %v3950 = vrot.slane %v3943, %v3949
        %v3951 = vcombine.low %v3902, %v3904
        %v3952 = vcombine.low %v3919, %v3926
        %v3954 = vunpack.c.l.s4 1966171168
        %v3955 = vunpack.c.0.s8 %v3954
        %v3956 = vlaneseq
        %v3957 = vshrl.u32 %v3956, 7
        %v3958 = vsub.s32 %v3955, %v3957
        %v3959 = vrot.slane %v3951, %v3958
        %v3961 = vunpack.c.l.s4 1966171168
        %v3962 = vunpack.c.0.s8 %v3961
        %v3963 = vlaneseq
        %v3964 = vshrl.u32 %v3963, 7
        %v3965 = vsub.s32 %v3962, %v3964
        %v3966 = vrot.slane %v3952, %v3965
        %v3967 = vcombine.low %v3959, %v3966
        %v3969 = vunpack.c.l.s4 1966171168
        %v3970 = vunpack.c.0.s8 %v3969
        %v3971 = vlaneseq
        %v3972 = vshrl.u32 %v3971, 7
        %v3973 = vsub.s32 %v3970, %v3972
        %v3974 = vrot.slane %v3967, %v3973
        %vm3977 = vcmask 44032
        %v3978 = vsel %vm3977, %v3950, 0.0
        %3979 = vadd.xlane.f32.xlu0 %v3978
        %v3980 = vpop.xlane.xlu0 %3979
        %v3981 = vsel %vm3977, %v3974, 0.0
        %3982 = vadd.xlane.f32.xlu0 %v3981
        %v3983 = vpop.xlane.xlu0 %3982
        %v3984 = vrcp.pop 6.0
        %v3985 = vmul.f32 %v3980, %v3984
        %v3986 = vmul.f32 %v3983, %v3984
        %v3987 = vld [vmem:[%s19] sm:$0x3f]
        %v3988 = vld [vmem:[%s20] sm:$0xf]
        %v3991 = vlaneseq
        %v3992 = vand.u32 %v3991, 127
        %v3993 = vlaneseq
        %v3994 = vshrl.u32 %v3993, 7
        %v3995 = vsub.s32 %v3992, %v3994
        %v3996 = vrot.slane %v3985, %v3995
        %v3997 = vlaneseq
        %v3998 = vshrl.u32 %v3997, 7
        %v3999 = vsub.s32 %v3992, %v3998
        %v4000 = vrot.slane %v3986, %v3999
        %vm4001 = vcmask 1041409
        %v4002 = vsel %vm4001, %v4000, %v3996
        %vm4003 = vcmask 31744
        %v4004 = vsel %vm4003, %v4002, 0
        %vm4006 = vcmask 1043456
        %v4008 = vsel %vm4006, %v3988, 0
        %4010 = vmatprep.subr.mxu0 0.0
        %4011 = vmatpush1.msra.mxu0 %v4008
        %4012 = vmatprep.subr.mxu0 0.0
        %4013 = vmatpush1.msra.mxu0 0.0
        %4014 = vmatprep.subr.mxu0 0.0
        %4015 = vmatpush1.msra.mxu0 0.0
        %4016 = vmatprep.subr.mxu0 0.0
        %4017 = vmatpush1.msra.mxu0 0.0
        %4018 = vmatprep.subr.mxu0 0.0
        %4019 = vmatpush1.msra.mxu0 0.0
        %4020 = vmatprep.subr.mxu0 0.0
        %4021 = vmatpush1.msra.mxu0 0.0
        %4022 = vmatprep.subr.mxu0 0.0
        %4023 = vmatpush1.msra.mxu0 0.0
        %4024 = vmatprep.subr.mxu0 0.0
        %4025 = vmatpush1.msra.mxu0 0.0
        %4026 = vmatprep.subr.mxu0 0.0
        %4027 = vmatpush1.msra.mxu0 0.0
        %4028 = vmatprep.subr.mxu0 0.0
        %4029 = vmatpush1.msra.mxu0 0.0
        %4030 = vmatprep.subr.mxu0 0.0
        %4031 = vmatpush1.msra.mxu0 0.0
        %4032 = vmatprep.subr.mxu0 0.0
        %4033 = vmatpush1.msra.mxu0 0.0
        %4034 = vmatprep.subr.mxu0 0.0
        %4035 = vmatpush1.msra.mxu0 0.0
        %4036 = vmatprep.subr.mxu0 0.0
        %4037 = vmatpush1.msra.mxu0 0.0
        %4038 = vmatprep.subr.mxu0 0.0
        %4039 = vmatpush1.msra.mxu0 0.0
        %4040 = vmatprep.subr.mxu0 0.0
        %4041 = vmatpush1.msra.mxu0 0.0
        %4042 = vmatprep.subr.mxu0 0.0
        %4043 = vmatpush1.msra.mxu0 0.0
        %4044 = vmatprep.subr.mxu0 0.0
        %4045 = vmatpush1.msra.mxu0 0.0
        %4046 = vmatprep.subr.mxu0 0.0
        %4047 = vmatpush1.msra.mxu0 0.0
        %4048 = vmatprep.subr.mxu0 0.0
        %4049 = vmatpush1.msra.mxu0 0.0
        %4050 = vmatprep.subr.mxu0 0.0
        %4051 = vmatpush1.msra.mxu0 0.0
        %4052 = vmatprep.subr.mxu0 0.0
        %4053 = vmatpush1.msra.mxu0 0.0
        %4054 = vmatprep.subr.mxu0 0.0
        %4055 = vmatpush1.msra.mxu0 0.0
        %4056 = vmatprep.subr.mxu0 0.0
        %4057 = vmatpush1.msra.mxu0 0.0
        %4058 = vmatprep.subr.mxu0 0.0
        %4059 = vmatpush1.msra.mxu0 0.0
        %4060 = vmatprep.subr.mxu0 0.0
        %4061 = vmatpush1.msra.mxu0 0.0
        %4062 = vmatprep.subr.mxu0 0.0
        %4063 = vmatpush1.msra.mxu0 0.0
        %4064 = vmatprep.subr.mxu0 0.0
        %4065 = vmatpush1.msra.mxu0 0.0
        %4066 = vmatprep.subr.mxu0 0.0
        %4067 = vmatpush1.msra.mxu0 0.0
        %4068 = vmatprep.subr.mxu0 0.0
        %4069 = vmatpush1.msra.mxu0 0.0
        %4070 = vmatprep.subr.mxu0 0.0
        %4071 = vmatpush1.msra.mxu0 0.0
        %4072 = vmatprep.subr.mxu0 0.0
        %4073 = vmatpush1.msra.mxu0 0.0
        %4074 = vmatprep.mubr.f32.mxu0 0.0
        %4075 = vmatmul.mubr.f32.gmra.mrb[0].mxu0 %v4004
        %v4076 = vpop.f32.mrb[0].mxu0
        %v4077 = vadd.f32 0.0, %v4076
        %v4078 = vpop.f32.mrb[0].mxu0
        %4079 = vdwg.mxu0
        %v4080 = vcombine.low %v3879, %v3900
        %v4082 = vunpack.c.l.s4 1966171168
        %v4083 = vunpack.c.0.s8 %v4082
        %v4084 = vlaneseq
        %v4085 = vshrl.u32 %v4084, 7
        %v4086 = vsub.s32 %v4083, %v4085
        %v4087 = vrot.slane %v4080, %v4086
        %v4089 = vunpack.c.l.s4 1966171168
        %v4090 = vunpack.c.0.s8 %v4089
        %v4091 = vlaneseq
        %v4092 = vshrl.u32 %v4091, 7
        %v4093 = vsub.s32 %v4090, %v4092
        %v4094 = vrot.slane %v4087, %v4093
        %vm4095 = vcmask 48128
        %v4096 = vsel %vm4095, %v4094, 0
        %vm4098 = vcmask 1045504
        %v4100 = vsel %vm4098, %v3987, 0
        %4102 = vmatprep.subr.mxu0 0.0
        %4103 = vmatpush1.msra.mxu0 %v4100
        %4104 = vmatprep.subr.mxu0 0.0
        %4105 = vmatpush1.msra.mxu0 0.0
        %4106 = vmatprep.subr.mxu0 0.0
        %4107 = vmatpush1.msra.mxu0 0.0
        %4108 = vmatprep.subr.mxu0 0.0
        %4109 = vmatpush1.msra.mxu0 0.0
        %4110 = vmatprep.subr.mxu0 0.0
        %4111 = vmatpush1.msra.mxu0 0.0
        %4112 = vmatprep.subr.mxu0 0.0
        %4113 = vmatpush1.msra.mxu0 0.0
        %4114 = vmatprep.subr.mxu0 0.0
        %4115 = vmatpush1.msra.mxu0 0.0
        %4116 = vmatprep.subr.mxu0 0.0
        %4117 = vmatpush1.msra.mxu0 0.0
        %4118 = vmatprep.subr.mxu0 0.0
        %4119 = vmatpush1.msra.mxu0 0.0
        %4120 = vmatprep.subr.mxu0 0.0
        %4121 = vmatpush1.msra.mxu0 0.0
        %4122 = vmatprep.subr.mxu0 0.0
        %4123 = vmatpush1.msra.mxu0 0.0
        %4124 = vmatprep.subr.mxu0 0.0
        %4125 = vmatpush1.msra.mxu0 0.0
        %4126 = vmatprep.subr.mxu0 0.0
        %4127 = vmatpush1.msra.mxu0 0.0
        %4128 = vmatprep.subr.mxu0 0.0
        %4129 = vmatpush1.msra.mxu0 0.0
        %4130 = vmatprep.subr.mxu0 0.0
        %4131 = vmatpush1.msra.mxu0 0.0
        %4132 = vmatprep.subr.mxu0 0.0
        %4133 = vmatpush1.msra.mxu0 0.0
        %4134 = vmatprep.subr.mxu0 0.0
        %4135 = vmatpush1.msra.mxu0 0.0
        %4136 = vmatprep.subr.mxu0 0.0
        %4137 = vmatpush1.msra.mxu0 0.0
        %4138 = vmatprep.subr.mxu0 0.0
        %4139 = vmatpush1.msra.mxu0 0.0
        %4140 = vmatprep.subr.mxu0 0.0
        %4141 = vmatpush1.msra.mxu0 0.0
        %4142 = vmatprep.subr.mxu0 0.0
        %4143 = vmatpush1.msra.mxu0 0.0
        %4144 = vmatprep.subr.mxu0 0.0
        %4145 = vmatpush1.msra.mxu0 0.0
        %4146 = vmatprep.subr.mxu0 0.0
        %4147 = vmatpush1.msra.mxu0 0.0
        %4148 = vmatprep.subr.mxu0 0.0
        %4149 = vmatpush1.msra.mxu0 0.0
        %4150 = vmatprep.subr.mxu0 0.0
        %4151 = vmatpush1.msra.mxu0 0.0
        %4152 = vmatprep.subr.mxu0 0.0
        %4153 = vmatpush1.msra.mxu0 0.0
        %4154 = vmatprep.subr.mxu0 0.0
        %4155 = vmatpush1.msra.mxu0 0.0
        %4156 = vmatprep.subr.mxu0 0.0
        %4157 = vmatpush1.msra.mxu0 0.0
        %4158 = vmatprep.subr.mxu0 0.0
        %4159 = vmatpush1.msra.mxu0 0.0
        %4160 = vmatprep.subr.mxu0 0.0
        %4161 = vmatpush1.msra.mxu0 0.0
        %4162 = vmatprep.subr.mxu0 0.0
        %4163 = vmatpush1.msra.mxu0 0.0
        %4164 = vmatprep.subr.mxu0 0.0
        %4165 = vmatpush1.msra.mxu0 0.0
        %4166 = vmatprep.mubr.f32.mxu0 0.0
        %4167 = vmatmul.mubr.f32.gmra.mrb[0].mxu0 %v4096
        %v4168 = vpop.f32.mrb[0].mxu0
        %v4169 = vadd.f32 %v4077, %v4168
        %v4170 = vpop.f32.mrb[0].mxu0
        %4171 = vdwg.mxu0
        %v4172 = vld [vmem:[%s21] sm:$0x1]
        %v4174 = vlaneseq
        %v4175 = vshrl.u32 %v4174, 7
        %v4176 = vsub.s32 0, %v4175
        %v4177 = vrot.slane %v4172, %v4176
        %v4179 = vadd.f32 %v4169, %v4177
        %v4182 = vunpack.c.l.s4 1966171168
        %v4183 = vunpack.c.0.s8 %v4182
        %v4184 = vlaneseq
        %v4185 = vshrl.u32 %v4184, 7
        %v4186 = vsub.s32 %v4183, %v4185
        %v4187 = vrot.slane %v4179, %v4186
        %v4188 = vcombine.high %v4187, %v4187
        %v4190 = vunpack.c.l.s4 1966171168
        %v4191 = vunpack.c.0.s8 %v4190
        %v4192 = vlaneseq
        %v4193 = vshrl.u32 %v4192, 7
        %v4194 = vsub.s32 %v4191, %v4193
        %v4195 = vrot.slane %v4187, %v4194
        %v4197 = vunpack.c.l.s4 1966171168
        %v4198 = vunpack.c.0.s8 %v4197
        %v4199 = vlaneseq
        %v4200 = vshrl.u32 %v4199, 7
        %v4201 = vsub.s32 %v4198, %v4200
        %v4202 = vrot.slane %v4188, %v4201
        %4205 = vst [vmem:[%s722] sm:$0x1] %v4195
        %4206 = vst [vmem:[%s722 + $0x1] sm:$0x1] %v4202
        %s4207 = sand.u32 %s521, 1
        %s4208 = scalar_lea.sflag [#allocation3], %s4207
        %s4209 = sand.u32 %s521, 1
        %s4210 = smul.addr %s4209, 2
        %s4211 = scalar_lea.vmem [#allocation2], %s4210
        %s4212 = sand.u32 %s547, 1
        %s4213 = scalar_lea.sflag [#allocation5], %s4212
        %s4214 = sand.u32 %s547, 1
        %s4215 = smul.addr %s4214, 2
        %s4216 = scalar_lea.vmem [#allocation4], %s4215
        // Predicated region
        $region109: #{dqn_updet_forward.1} parent=107 // pred_check
          %p4217 = pneg %p531
        $region110: #{dqn_updet_forward.1} parent=107 // pred_check_branch
          %4219 = sbr.rel (%p4217) target = $region112
        $region111: #{dqn_updet_forward.1} parent=107 // pred_region
          %s4220 = smul.u32 2, %s41
          %s4222 = ssub.s32 32, 32
          %4223 = vsyncadd %s4208, %s4222
          %s4224 = smul.addr %s4220, 16
          %s4225 = scalar_lea.hbm %s22, %s4224
          %s4226 = sshll.u32 %s4211, 4
          %s4227 = int_to_ptr.vmem [resolvable:$true] %s4226
          %4232 = dma.vmem_to_hbm [thread:$0]  %s4227, 32, %s4225, %s4208, 16, 16, 1
        $region112: #{dqn_updet_forward.1} parent=107 // pred_fallthru
          _
        // Predicated region
        $region113: #{dqn_updet_forward.1} parent=107 // pred_check
          %p4233 = pneg %p557
        $region114: #{dqn_updet_forward.1} parent=107 // pred_check_branch
          %4235 = sbr.rel (%p4233) target = $region116
        $region115: #{dqn_updet_forward.1} parent=107 // pred_region
          %s4236 = smul.u32 2, %s41
          %s4238 = ssub.s32 32, 32
          %4239 = vsyncadd %s4213, %s4238
          %s4240 = smul.addr %s4236, 16
          %s4241 = scalar_lea.hbm %s23, %s4240
          %s4242 = sshll.u32 %s4216, 4
          %s4243 = int_to_ptr.vmem [resolvable:$true] %s4242
          %4248 = dma.vmem_to_hbm [thread:$0]  %s4243, 32, %s4241, %s4213, 16, 16, 1
        $region116: #{dqn_updet_forward.1} parent=107 // pred_fallthru
          _
      $region108: #{dqn_updet_forward.1} parent=5 // pred_fallthru
        _
      %p4249 = scmp.le.s32.totalorder 2, %s36
      // Predicated region
      $region117: #{dqn_updet_forward.1} parent=5 // pred_check
        %p4250 = pneg %p4249
      $region118: #{dqn_updet_forward.1} parent=5 // pred_check_branch
        %4252 = sbr.rel (%p4250) target = $region120
      $region119: #{dqn_updet_forward.1} parent=5 // pred_region
        %s4253 = ssub.s32 %s36, 2
        // Predicated region
        $region121: #{dqn_updet_forward.1} parent=119 // pred_check
          %p4254 = pneg %p537
        $region122: #{dqn_updet_forward.1} parent=119 // pred_check_branch
          %4256 = sbr.rel (%p4254) target = $region124
        $region123: #{dqn_updet_forward.1} parent=119 // pred_region
          %s4257 = sand.u32 %s522, 1
          %s4258 = scalar_lea.sflag [#allocation3], %s4257
          %s4259 = sand.u32 %s522, 1
          %s4260 = smul.addr %s4259, 2
          %s4261 = scalar_lea.vmem [#allocation2], %s4260
          %4262 = dma.done %s4258, 32
        $region124: #{dqn_updet_forward.1} parent=119 // pred_fallthru
          _
        // Predicated region
        $region125: #{dqn_updet_forward.1} parent=119 // pred_check
          %p4263 = pneg %p563
        $region126: #{dqn_updet_forward.1} parent=119 // pred_check_branch
          %4265 = sbr.rel (%p4263) target = $region128
        $region127: #{dqn_updet_forward.1} parent=119 // pred_region
          %s4266 = sand.u32 %s548, 1
          %s4267 = scalar_lea.sflag [#allocation5], %s4266
          %s4268 = sand.u32 %s548, 1
          %s4269 = smul.addr %s4268, 2
          %s4270 = scalar_lea.vmem [#allocation4], %s4269
          %4271 = dma.done %s4267, 32
        $region128: #{dqn_updet_forward.1} parent=119 // pred_fallthru
          _
      $region120: #{dqn_updet_forward.1} parent=5 // pred_fallthru
        _
    $region6: #{dqn_updet_forward.1} parent=1 // loop_footer
      %s40 = sadd.s32 1, %s36
    $region7: #{dqn_updet_forward.1} parent=1 // loop_footer_branch
      %35 = sbr.rel target = $region3
    $region8: #{dqn_updet_forward.1} parent=1 // loop_exit
      _
    %4272 = vsyncpa [#allocation3], 1
    %s4273 = scalar_lea.sflag [#allocation3], 1
    %4274 = vsyncpa %s4273, 1
    %4275 = vsyncpa [#allocation5], 1
    %s4276 = scalar_lea.sflag [#allocation5], 1
    %4277 = vsyncpa %s4276, 1

</llo_original>
